<compile_context>
chip_gen: v5e
topology: v5e:2x2
jax: 0.10.0
libtpu: 0.0.40
codegen_flags: <defaults>
</compile_context>

<pallas_src>
import numpy as np

import jax
import jax.numpy as jnp
from jax.experimental import pallas as pl
from jax.experimental.pallas import tpu as pltpu

IMG = 28            # image rows kept per image inside the kernel
C1_LANES = 144      # conv1 out lanes:  parity*72 + j'*6 + c   (width parity-major)
P1_LANES = 72       # pool1 out lanes:  j'*6 + c               (dense)
C2_LANES = 96       # conv2 out lanes:  parity*48 + jj2*12 + c2
P2_LANES = 48       # pool2 out lanes:  jj2*12 + c2            (dense)
NFLAT = 192         # fc1 fan-in  (12 * 4 * 4)
NF1, NF2, NOUT = 120, 60, 10
NOUT_PAD = 128      # lane-dense padded logits


# ---------------------------------------------------------------------------
# Fused forward kernel
# ---------------------------------------------------------------------------
def _shift_up(a, k, axis):
    """out[..., i, ...] = a[..., (i + k) % n, ...].

    Wrap-around safety: every consumer of a shifted slab only reads rows
    r = b*IMG + i with i + k <= IMG - 1 (conv1: i<=23, k<=4; pool1: i<=22,
    k=1; conv2: i<=14, k<=8; pool2: i<=12, k=2), so the wrapped rows (the
    last image's garbage rows landing in image 0's band) are never consumed.
    This argument relies on IMG == 28, 5x5 kernels and stride-2 pools —
    re-derive it if the layout or shifts change.
    """
    if k == 0:
        return a
    n = a.shape[axis]
    return pltpu.roll(a, shift=n - k, axis=axis)


def _lenet_kernel(x_ref, m1_ref, b1_ref, m2_ref, b2_ref, f1_ref, bf1_ref,
                  wf2_ref, bf2_ref, wo_ref, bo_ref, out_ref, g_scr):
    f32, bf16 = jnp.float32, jnp.bfloat16
    tb = out_ref.shape[0]
    x = x_ref[...]                          # (tb*28, 28) f32: rows = b*28+h, lanes = w
    rows = x.shape[0]

    # ---- conv1 (5x5, 1->6) as ONE K=140 matmul: lane-concat the 5 row taps --
    # (taps/concat kept in f32 so sublane rolls stay on 32-bit data; one cast.)
    taps = [x] + [_shift_up(x, ki, 0) for ki in range(1, 5)]
    xcat = jnp.concatenate(taps, axis=1).astype(bf16)      # (rows, 140) bf16
    h = jnp.dot(xcat, m1_ref[...], preferred_element_type=f32)   # (rows, 144)
    h = jnp.maximum(h + b1_ref[...], 0.0)

    # ---- 2x2 maxpool #1: row-pair max + width-parity max (lane slices) ------
    h = jnp.maximum(h, _shift_up(h, 1, 0))                 # height pairs
    h = jnp.maximum(h[:, :P1_LANES], h[:, P1_LANES:])      # width pairs -> (rows, 72)
    hb = h.astype(bf16)

    # ---- conv2 (5x5, 6->12): 5 row taps, dense K=72 -------------------------
    g = jnp.dot(hb, m2_ref[0], preferred_element_type=f32)
    for ki in range(1, 5):
        g = g + _shift_up(jnp.dot(hb, m2_ref[ki], preferred_element_type=f32),
                          2 * ki, 0)
    g = jnp.maximum(g + b2_ref[...], 0.0)                  # (rows, 96)

    # ---- 2x2 maxpool #2 ------------------------------------------------------
    g = jnp.maximum(g, _shift_up(g, 2, 0))
    g = jnp.maximum(g[:, :P2_LANES], g[:, P2_LANES:])      # (rows, 48)

    # ---- row compaction: valid rows are b*28 + 4*m (m=0..3).  Store to VMEM
    # scratch and pull them out with strided loads (replaces the old K=896
    # selection matmul, whose cost grew quadratically with the batch tile).
    g_scr[...] = g
    parts = [g_scr[pl.ds(4 * m, tb, stride=IMG), :] for m in range(4)]
    gc = jnp.concatenate(parts, axis=1).astype(bf16)       # (tb, 192) bf16
    # gc lane order = m2*48 + jj2*12 + c2, matched by f1 built on the host.

    # ---- MLP head (fc1 -> fc2 -> out), M = tb, lane-dense 128-wide logits ---
    a1 = jnp.maximum(
        jnp.dot(gc, f1_ref[...], preferred_element_type=f32) + bf1_ref[...], 0.0)
    a2 = jnp.maximum(
        jnp.dot(a1.astype(bf16), wf2_ref[...], preferred_element_type=f32)
        + bf2_ref[...], 0.0)
    logits = jnp.dot(a2.astype(bf16), wo_ref[...],
                     preferred_element_type=f32) + bo_ref[...]
    out_ref[...] = logits.astype(out_ref.dtype)            # (tb, 128)


# ---------------------------------------------------------------------------
# Host-side parameter preparation (done once, outside the hot path)
# ---------------------------------------------------------------------------
def _band(p_size, j_size, k_size):
    """band[p, j, q] = 1.0 iff p == j + q."""
    p = np.arange(p_size)[:, None, None]
    j = np.arange(j_size)[None, :, None]
    q = np.arange(k_size)[None, None, :]
    return jnp.asarray((p == j + q).astype(np.float32))


def init_params(key):
    """PyTorch-layout parameters with PyTorch's default uniform init."""
    def uni(k, shape, fan_in):
        bound = 1.0 / np.sqrt(float(fan_in))
        return jax.random.uniform(k, shape, jnp.float32, -bound, bound)

    ks = jax.random.split(key, 10)
    return {
        "conv1_w": uni(ks[0], (6, 1, 5, 5), 25),
        "conv1_b": uni(ks[1], (6,), 25),
        "conv2_w": uni(ks[2], (12, 6, 5, 5), 150),
        "conv2_b": uni(ks[3], (12,), 150),
        "fc1_w": uni(ks[4], (120, 192), 192),   # PyTorch (out, in)
        "fc1_b": uni(ks[5], (120,), 192),
        "fc2_w": uni(ks[6], (60, 120), 120),
        "fc2_b": uni(ks[7], (60,), 120),
        "out_w": uni(ks[8], (10, 60), 60),
        "out_b": uni(ks[9], (10,), 60),
    }


def prepare_params(params):
    """Fold im2col banding, pool lane compaction (parity-major) and the NCHW
    flatten permutation into bf16 lane-matmul operands (one-time, at init)."""
    f32, bf16 = jnp.float32, jnp.bfloat16

    # conv1 tap-concat matrix: m1[ki*28 + p, parity*72 + j'*6 + c]
    #   = w1[c, 0, ki, p - (2*j'+parity)]  for 0 <= p - j <= 4
    w1 = params["conv1_w"][:, 0]                               # (c=6, ki=5, q=5)
    m1 = jnp.einsum("pjq,ckq->kpjc", _band(28, 24, 5), w1)     # (5, 28, 24, 6)
    m1 = jnp.transpose(m1.reshape(5, 28, 12, 2, 6),
                       (0, 1, 3, 2, 4)).reshape(5 * IMG, C1_LANES)

    # conv2 banded matrices: m2[ki][jj*6+ci, parity*48 + jj2*12 + c2]
    #   = w2[c2, ci, ki, jj - (2*jj2+parity)]  (dense K=72, no zero padding)
    w2 = params["conv2_w"]                                     # (c2, ci, ki, kj)
    m2 = jnp.einsum("abq,dckq->kacbd", _band(12, 8, 5), w2)    # (5, 12, 6, 8, 12)
    m2 = jnp.transpose(m2.reshape(5, 12, 6, 4, 2, 12),
                       (0, 1, 2, 4, 3, 5)).reshape(5, P1_LANES, C2_LANES)

    # fc1: input lane m2*48 + jj2*12 + c2; PyTorch flat index c2*16 + m2*4 + jj2
    f1 = jnp.transpose(params["fc1_w"].reshape(NF1, 12, 4, 4),
                       (2, 3, 1, 0)).reshape(NFLAT, NF1)

    # lane-dense padded output projection
    wo = jnp.zeros((NF2, NOUT_PAD), f32).at[:, :NOUT].set(params["out_w"].T)
    bo = jnp.zeros((1, NOUT_PAD), f32).at[:, :NOUT].set(params["out_b"][None, :])

    return {
        "m1": m1.astype(bf16),
        "b1": jnp.tile(params["conv1_b"], 24).reshape(1, C1_LANES).astype(f32),
        "m2": m2.astype(bf16),
        "b2": jnp.tile(params["conv2_b"], 8).reshape(1, C2_LANES).astype(f32),
        "f1": f1.astype(bf16),
        "bf1": params["fc1_b"].reshape(1, NF1).astype(f32),
        "wf2": params["fc2_w"].T.astype(bf16),                 # (120, 60)
        "bf2": params["fc2_b"].reshape(1, NF2).astype(f32),
        "wo": wo.astype(bf16),                                 # (60, 128)
        "bo": bo,                                              # (1, 128) f32
    }


# ---------------------------------------------------------------------------
# Forward pass wrapper
# ---------------------------------------------------------------------------
def network_forward(x, kp, *, tile_b=128):
    """x: (B, 1, 28, 28) float32 (NCHW) -> logits (B, 10).

    tile_b=128 keeps the per-block VMEM footprint (~15 MiB of slabs + ~0.5 MiB
    of resident bf16 weights + double-buffered input) well inside 48 MiB, so it
    is safe on v5e/v6e (128 MiB) and on v7x (64 MiB/TC); batches >= 2*tile_b
    give >= 2 grid blocks for v7x's two TensorCores.
    """
    b = x.shape[0]
    tb = min(tile_b, ((b + 7) // 8) * 8)
    bp = ((b + tb - 1) // tb) * tb
    xr = x.reshape(b, IMG, IMG)
    if bp != b:
        xr = jnp.concatenate([xr, jnp.zeros((bp - b, IMG, IMG), xr.dtype)], 0)
    x2d = xr.reshape(bp * IMG, IMG)
    rows = tb * IMG
    n_blocks = bp // tb

    weights = (kp["m1"], kp["b1"], kp["m2"], kp["b2"], kp["f1"], kp["bf1"],
               kp["wf2"], kp["bf2"], kp["wo"], kp["bo"])

    mm_flops = (2 * rows * (5 * IMG) * C1_LANES            # conv1 (K=140)
                + 2 * rows * P1_LANES * C2_LANES * 5       # conv2 (5 taps, K=72)
                + 2 * tb * (NFLAT * NF1 + NF1 * NF2 + NF2 * NOUT_PAD))
    w_bytes = sum(int(np.prod(w.shape)) * w.dtype.itemsize for w in weights)
    cost = pl.CostEstimate(
        flops=n_blocks * mm_flops,
        transcendentals=0,
        bytes_accessed=x2d.size * 4 + w_bytes + bp * NOUT_PAD * 4,
    )

    out = pl.pallas_call(
        _lenet_kernel,
        out_shape=jax.ShapeDtypeStruct((bp, NOUT_PAD), jnp.float32),
        grid_spec=pltpu.PrefetchScalarGridSpec(
            num_scalar_prefetch=0,
            grid=(n_blocks,),
            in_specs=[
                pl.BlockSpec((rows, IMG), lambda i: (i, 0)),            # image rows
                pl.BlockSpec((5 * IMG, C1_LANES), lambda i: (0, 0)),    # conv1 (tap-concat)
                pl.BlockSpec((1, C1_LANES), lambda i: (0, 0)),
                pl.BlockSpec((5, P1_LANES, C2_LANES), lambda i: (0, 0, 0)),  # conv2
                pl.BlockSpec((1, C2_LANES), lambda i: (0, 0)),
                pl.BlockSpec((NFLAT, NF1), lambda i: (0, 0)),           # fc1 (flatten folded)
                pl.BlockSpec((1, NF1), lambda i: (0, 0)),
                pl.BlockSpec((NF1, NF2), lambda i: (0, 0)),             # fc2
                pl.BlockSpec((1, NF2), lambda i: (0, 0)),
                pl.BlockSpec((NF2, NOUT_PAD), lambda i: (0, 0)),        # out (lane-padded)
                pl.BlockSpec((1, NOUT_PAD), lambda i: (0, 0)),
            ],
            out_specs=pl.BlockSpec((tb, NOUT_PAD), lambda i: (i, 0)),
            scratch_shapes=[pltpu.VMEM((rows, P2_LANES), jnp.float32)],
        ),
        compiler_params=pltpu.CompilerParams(
            dimension_semantics=("parallel",),
            vmem_limit_bytes=48 * 1024 * 1024,
        ),
        cost_estimate=cost,
    )(x2d, *weights)
    # Padded batch rows hold garbage logits and are sliced off here; never feed
    # them into a later reduction without masking.
    return out[:b, :NOUT]


# ---------------------------------------------------------------------------
# Pure-JAX reference (for a loose-tolerance bf16 sanity check)
# ---------------------------------------------------------------------------
def reference_forward(x, params):
    dn = ("NCHW", "OIHW", "NCHW")
    t = jax.lax.conv_general_dilated(x, params["conv1_w"], (1, 1), "VALID",
                                     dimension_numbers=dn)
    t = jnp.maximum(t + params["conv1_b"].reshape(1, 6, 1, 1), 0.0)
    t = jax.lax.reduce_window(t, -jnp.inf, jax.lax.max,
                              (1, 1, 2, 2), (1, 1, 2, 2), "VALID")
    t = jax.lax.conv_general_dilated(t, params["conv2_w"], (1, 1), "VALID",
                                     dimension_numbers=dn)
    t = jnp.maximum(t + params["conv2_b"].reshape(1, 12, 1, 1), 0.0)
    t = jax.lax.reduce_window(t, -jnp.inf, jax.lax.max,
                              (1, 1, 2, 2), (1, 1, 2, 2), "VALID")
    t = t.reshape(t.shape[0], -1)                       # NCHW flatten
    t = jnp.maximum(t @ params["fc1_w"].T + params["fc1_b"], 0.0)
    t = jnp.maximum(t @ params["fc2_w"].T + params["fc2_b"], 0.0)
    return t @ params["out_w"].T + params["out_b"]


if __name__ == "__main__":
    key = jax.random.PRNGKey(0)
    kx, kp_key = jax.random.split(key)
    x = jax.random.normal(kx, (2, 1, 28, 28), dtype=jnp.float32)

    params = init_params(kp_key)
    kernel_params = prepare_params(params)     # one-time weight transformation

    fwd = jax.jit(network_forward)
    out = jax.block_until_ready(fwd(x, kernel_params))

    assert out.shape == (2, 10), out.shape
    assert bool(jnp.all(jnp.isfinite(out)))

    # bf16 MXU operands (f32 accumulation) => allow ~1e-2 relative drift.
    ref = reference_forward(x, params)
    max_err = float(jnp.max(jnp.abs(out - ref)))
    assert bool(jnp.allclose(out, ref, rtol=5e-2, atol=5e-2)), (
        f"mismatch vs reference, max abs err = {max_err}")
    print("KERNEL_OK")
</pallas_src>

<mosaic_0001>
module attributes {stable_mosaic.version = 11 : i64} {
  func.func @_lenet_kernel(%arg0: i32, %arg1: memref<224x28xf32, #tpu.memory_space<vmem>>, %arg2: memref<140x144xbf16, #tpu.memory_space<vmem>>, %arg3: memref<1x144xf32, #tpu.memory_space<vmem>>, %arg4: memref<5x72x96xbf16, #tpu.memory_space<vmem>>, %arg5: memref<1x96xf32, #tpu.memory_space<vmem>>, %arg6: memref<192x120xbf16, #tpu.memory_space<vmem>>, %arg7: memref<1x120xf32, #tpu.memory_space<vmem>>, %arg8: memref<120x60xbf16, #tpu.memory_space<vmem>>, %arg9: memref<1x60xf32, #tpu.memory_space<vmem>>, %arg10: memref<60x128xbf16, #tpu.memory_space<vmem>>, %arg11: memref<1x128xf32, #tpu.memory_space<vmem>>, %arg12: memref<8x128xf32, #tpu.memory_space<vmem>>, %arg13: memref<224x48xf32, #tpu.memory_space<vmem>>) attributes {dimension_semantics = [#tpu.dimension_semantics<parallel>], iteration_bounds = array<i64: 1>, scalar_prefetch = 0 : i64, scratch_operands = 1 : i64, tpu.core_type = #tpu.core_type<tc>, window_params = [{transform_indices = @transform_0, window_bounds = array<i64: 224, 28>}, {pipeline_mode = #tpu.pipeline_mode<synchronous>, transform_indices = @transform_1, window_bounds = array<i64: 140, 144>}, {pipeline_mode = #tpu.pipeline_mode<synchronous>, transform_indices = @transform_2, window_bounds = array<i64: 1, 144>}, {pipeline_mode = #tpu.pipeline_mode<synchronous>, transform_indices = @transform_3, window_bounds = array<i64: 5, 72, 96>}, {pipeline_mode = #tpu.pipeline_mode<synchronous>, transform_indices = @transform_4, window_bounds = array<i64: 1, 96>}, {pipeline_mode = #tpu.pipeline_mode<synchronous>, transform_indices = @transform_5, window_bounds = array<i64: 192, 120>}, {pipeline_mode = #tpu.pipeline_mode<synchronous>, transform_indices = @transform_6, window_bounds = array<i64: 1, 120>}, {pipeline_mode = #tpu.pipeline_mode<synchronous>, transform_indices = @transform_7, window_bounds = array<i64: 120, 60>}, {pipeline_mode = #tpu.pipeline_mode<synchronous>, transform_indices = @transform_8, window_bounds = array<i64: 1, 60>}, {pipeline_mode = #tpu.pipeline_mode<synchronous>, transform_indices = @transform_9, window_bounds = array<i64: 60, 128>}, {pipeline_mode = #tpu.pipeline_mode<synchronous>, transform_indices = @transform_10, window_bounds = array<i64: 1, 128>}, {transform_indices = @transform_11, window_bounds = array<i64: 8, 128>}]} {
    %c0 = arith.constant 0 : index
    %c0_0 = arith.constant 0 : index
    %0 = vector.load %arg1[%c0, %c0_0] : memref<224x28xf32, #tpu.memory_space<vmem>>, vector<224x28xf32>
    %c223_i32 = arith.constant 223 : i32
    %1 = tpu.dynamic_rotate %0 by %c223_i32 dim 0 : vector<224x28xf32>, i32 -> vector<224x28xf32>
    %c222_i32 = arith.constant 222 : i32
    %2 = tpu.dynamic_rotate %0 by %c222_i32 dim 0 : vector<224x28xf32>, i32 -> vector<224x28xf32>
    %c221_i32 = arith.constant 221 : i32
    %3 = tpu.dynamic_rotate %0 by %c221_i32 dim 0 : vector<224x28xf32>, i32 -> vector<224x28xf32>
    %c220_i32 = arith.constant 220 : i32
    %4 = tpu.dynamic_rotate %0 by %c220_i32 dim 0 : vector<224x28xf32>, i32 -> vector<224x28xf32>
    %5 = tpu.concatenate %0, %1, %2, %3, %4 in 1 : vector<224x28xf32>, vector<224x28xf32>, vector<224x28xf32>, vector<224x28xf32>, vector<224x28xf32> -> vector<224x140xf32>
    %6 = arith.truncf %5 : vector<224x140xf32> to vector<224x140xbf16>
    %c0_1 = arith.constant 0 : index
    %c0_2 = arith.constant 0 : index
    %7 = vector.load %arg2[%c0_1, %c0_2] : memref<140x144xbf16, #tpu.memory_space<vmem>>, vector<140x144xbf16>
    %cst = arith.constant dense<0.000000e+00> : vector<224x144xf32>
    %8 = tpu.matmul %6, %7, %cst {dimension_numbers = #tpu.dot_dimension_numbers<[1], [0], [0], [1], [0, 0, 1, 1], [], []>} : vector<224x140xbf16>, vector<140x144xbf16>, vector<224x144xf32> -> vector<224x144xf32>
    %c0_3 = arith.constant 0 : index
    %c0_4 = arith.constant 0 : index
    %9 = vector.load %arg3[%c0_3, %c0_4] : memref<1x144xf32, #tpu.memory_space<vmem>>, vector<1x144xf32>
    %10 = vector.broadcast %9 : vector<1x144xf32> to vector<224x144xf32>
    %11 = arith.addf %8, %10 : vector<224x144xf32>
    %cst_5 = arith.constant 0.000000e+00 : f32
    %12 = vector.broadcast %cst_5 : f32 to vector<224x144xf32>
    %13 = arith.maximumf %11, %12 : vector<224x144xf32>
    %c223_i32_6 = arith.constant 223 : i32
    %14 = tpu.dynamic_rotate %13 by %c223_i32_6 dim 0 : vector<224x144xf32>, i32 -> vector<224x144xf32>
    %15 = arith.maximumf %13, %14 : vector<224x144xf32>
    %16 = vector.extract_strided_slice %15 {offsets = [0, 0], sizes = [224, 72], strides = [1, 1]} : vector<224x144xf32> to vector<224x72xf32>
    %17 = vector.extract_strided_slice %15 {offsets = [0, 72], sizes = [224, 72], strides = [1, 1]} : vector<224x144xf32> to vector<224x72xf32>
    %18 = arith.maximumf %16, %17 : vector<224x72xf32>
    %19 = arith.truncf %18 : vector<224x72xf32> to vector<224x72xbf16>
    %c0_7 = arith.constant 0 : index
    %c0_8 = arith.constant 0 : index
    %c0_9 = arith.constant 0 : index
    %20 = vector.load %arg4[%c0_7, %c0_8, %c0_9] : memref<5x72x96xbf16, #tpu.memory_space<vmem>>, vector<1x72x96xbf16>
    %21 = vector.shape_cast %20 : vector<1x72x96xbf16> to vector<72x96xbf16>
    %cst_10 = arith.constant dense<0.000000e+00> : vector<224x96xf32>
    %22 = tpu.matmul %19, %21, %cst_10 {dimension_numbers = #tpu.dot_dimension_numbers<[1], [0], [0], [1], [0, 0, 1, 1], [], []>} : vector<224x72xbf16>, vector<72x96xbf16>, vector<224x96xf32> -> vector<224x96xf32>
    %c1 = arith.constant 1 : index
    %c0_11 = arith.constant 0 : index
    %c0_12 = arith.constant 0 : index
    %23 = vector.load %arg4[%c1, %c0_11, %c0_12] : memref<5x72x96xbf16, #tpu.memory_space<vmem>>, vector<1x72x96xbf16>
    %24 = vector.shape_cast %23 : vector<1x72x96xbf16> to vector<72x96xbf16>
    %cst_13 = arith.constant dense<0.000000e+00> : vector<224x96xf32>
    %25 = tpu.matmul %19, %24, %cst_13 {dimension_numbers = #tpu.dot_dimension_numbers<[1], [0], [0], [1], [0, 0, 1, 1], [], []>} : vector<224x72xbf16>, vector<72x96xbf16>, vector<224x96xf32> -> vector<224x96xf32>
    %c222_i32_14 = arith.constant 222 : i32
    %26 = tpu.dynamic_rotate %25 by %c222_i32_14 dim 0 : vector<224x96xf32>, i32 -> vector<224x96xf32>
    %27 = arith.addf %22, %26 : vector<224x96xf32>
    %c2 = arith.constant 2 : index
    %c0_15 = arith.constant 0 : index
    %c0_16 = arith.constant 0 : index
    %28 = vector.load %arg4[%c2, %c0_15, %c0_16] : memref<5x72x96xbf16, #tpu.memory_space<vmem>>, vector<1x72x96xbf16>
    %29 = vector.shape_cast %28 : vector<1x72x96xbf16> to vector<72x96xbf16>
    %cst_17 = arith.constant dense<0.000000e+00> : vector<224x96xf32>
    %30 = tpu.matmul %19, %29, %cst_17 {dimension_numbers = #tpu.dot_dimension_numbers<[1], [0], [0], [1], [0, 0, 1, 1], [], []>} : vector<224x72xbf16>, vector<72x96xbf16>, vector<224x96xf32> -> vector<224x96xf32>
    %c220_i32_18 = arith.constant 220 : i32
    %31 = tpu.dynamic_rotate %30 by %c220_i32_18 dim 0 : vector<224x96xf32>, i32 -> vector<224x96xf32>
    %32 = arith.addf %27, %31 : vector<224x96xf32>
    %c3 = arith.constant 3 : index
    %c0_19 = arith.constant 0 : index
    %c0_20 = arith.constant 0 : index
    %33 = vector.load %arg4[%c3, %c0_19, %c0_20] : memref<5x72x96xbf16, #tpu.memory_space<vmem>>, vector<1x72x96xbf16>
    %34 = vector.shape_cast %33 : vector<1x72x96xbf16> to vector<72x96xbf16>
    %cst_21 = arith.constant dense<0.000000e+00> : vector<224x96xf32>
    %35 = tpu.matmul %19, %34, %cst_21 {dimension_numbers = #tpu.dot_dimension_numbers<[1], [0], [0], [1], [0, 0, 1, 1], [], []>} : vector<224x72xbf16>, vector<72x96xbf16>, vector<224x96xf32> -> vector<224x96xf32>
    %c218_i32 = arith.constant 218 : i32
    %36 = tpu.dynamic_rotate %35 by %c218_i32 dim 0 : vector<224x96xf32>, i32 -> vector<224x96xf32>
    %37 = arith.addf %32, %36 : vector<224x96xf32>
    %c4 = arith.constant 4 : index
    %c0_22 = arith.constant 0 : index
    %c0_23 = arith.constant 0 : index
    %38 = vector.load %arg4[%c4, %c0_22, %c0_23] : memref<5x72x96xbf16, #tpu.memory_space<vmem>>, vector<1x72x96xbf16>
    %39 = vector.shape_cast %38 : vector<1x72x96xbf16> to vector<72x96xbf16>
    %cst_24 = arith.constant dense<0.000000e+00> : vector<224x96xf32>
    %40 = tpu.matmul %19, %39, %cst_24 {dimension_numbers = #tpu.dot_dimension_numbers<[1], [0], [0], [1], [0, 0, 1, 1], [], []>} : vector<224x72xbf16>, vector<72x96xbf16>, vector<224x96xf32> -> vector<224x96xf32>
    %c216_i32 = arith.constant 216 : i32
    %41 = tpu.dynamic_rotate %40 by %c216_i32 dim 0 : vector<224x96xf32>, i32 -> vector<224x96xf32>
    %42 = arith.addf %37, %41 : vector<224x96xf32>
    %c0_25 = arith.constant 0 : index
    %c0_26 = arith.constant 0 : index
    %43 = vector.load %arg5[%c0_25, %c0_26] : memref<1x96xf32, #tpu.memory_space<vmem>>, vector<1x96xf32>
    %44 = vector.broadcast %43 : vector<1x96xf32> to vector<224x96xf32>
    %45 = arith.addf %42, %44 : vector<224x96xf32>
    %cst_27 = arith.constant 0.000000e+00 : f32
    %46 = vector.broadcast %cst_27 : f32 to vector<224x96xf32>
    %47 = arith.maximumf %45, %46 : vector<224x96xf32>
    %c222_i32_28 = arith.constant 222 : i32
    %48 = tpu.dynamic_rotate %47 by %c222_i32_28 dim 0 : vector<224x96xf32>, i32 -> vector<224x96xf32>
    %49 = arith.maximumf %47, %48 : vector<224x96xf32>
    %50 = vector.extract_strided_slice %49 {offsets = [0, 0], sizes = [224, 48], strides = [1, 1]} : vector<224x96xf32> to vector<224x48xf32>
    %51 = vector.extract_strided_slice %49 {offsets = [0, 48], sizes = [224, 48], strides = [1, 1]} : vector<224x96xf32> to vector<224x48xf32>
    %52 = arith.maximumf %50, %51 : vector<224x48xf32>
    %c0_29 = arith.constant 0 : index
    %c0_30 = arith.constant 0 : index
    %53 = vector.load %arg13[%c0_29, %c0_30] : memref<224x48xf32, #tpu.memory_space<vmem>>, vector<224x48xf32>
    tpu.vector_store %arg13[%c0_29, %c0_30], %52 {strides = array<i32>} : memref<224x48xf32, #tpu.memory_space<vmem>>, vector<224x48xf32>,
    %c0_31 = arith.constant 0 : index
    %c0_32 = arith.constant 0 : index
    %54 = tpu.strided_load %arg13[%c0_31, %c0_32] {strides = array<i32: 28, 1>} : memref<224x48xf32, #tpu.memory_space<vmem>>, vector<8x48xf32>
    %c4_33 = arith.constant 4 : index
    %c0_34 = arith.constant 0 : index
    %55 = tpu.strided_load %arg13[%c4_33, %c0_34] {strides = array<i32: 28, 1>} : memref<224x48xf32, #tpu.memory_space<vmem>>, vector<8x48xf32>
    %c8 = arith.constant 8 : index
    %c0_35 = arith.constant 0 : index
    %56 = tpu.strided_load %arg13[%c8, %c0_35] {strides = array<i32: 28, 1>} : memref<224x48xf32, #tpu.memory_space<vmem>>, vector<8x48xf32>
    %c12 = arith.constant 12 : index
    %c0_36 = arith.constant 0 : index
    %57 = tpu.strided_load %arg13[%c12, %c0_36] {strides = array<i32: 28, 1>} : memref<224x48xf32, #tpu.memory_space<vmem>>, vector<8x48xf32>
    %58 = tpu.concatenate %54, %55, %56, %57 in 1 : vector<8x48xf32>, vector<8x48xf32>, vector<8x48xf32>, vector<8x48xf32> -> vector<8x192xf32>
    %59 = arith.truncf %58 : vector<8x192xf32> to vector<8x192xbf16>
    %c0_37 = arith.constant 0 : index
    %c0_38 = arith.constant 0 : index
    %60 = vector.load %arg6[%c0_37, %c0_38] : memref<192x120xbf16, #tpu.memory_space<vmem>>, vector<192x120xbf16>
    %cst_39 = arith.constant dense<0.000000e+00> : vector<8x120xf32>
    %61 = tpu.matmul %59, %60, %cst_39 {dimension_numbers = #tpu.dot_dimension_numbers<[1], [0], [0], [1], [0, 0, 1, 1], [], []>} : vector<8x192xbf16>, vector<192x120xbf16>, vector<8x120xf32> -> vector<8x120xf32>
    %c0_40 = arith.constant 0 : index
    %c0_41 = arith.constant 0 : index
    %62 = vector.load %arg7[%c0_40, %c0_41] : memref<1x120xf32, #tpu.memory_space<vmem>>, vector<1x120xf32>
    %63 = vector.broadcast %62 : vector<1x120xf32> to vector<8x120xf32>
    %64 = arith.addf %61, %63 : vector<8x120xf32>
    %cst_42 = arith.constant 0.000000e+00 : f32
    %65 = vector.broadcast %cst_42 : f32 to vector<8x120xf32>
    %66 = arith.maximumf %64, %65 : vector<8x120xf32>
    %67 = arith.truncf %66 : vector<8x120xf32> to vector<8x120xbf16>
    %c0_43 = arith.constant 0 : index
    %c0_44 = arith.constant 0 : index
    %68 = vector.load %arg8[%c0_43, %c0_44] : memref<120x60xbf16, #tpu.memory_space<vmem>>, vector<120x60xbf16>
    %cst_45 = arith.constant dense<0.000000e+00> : vector<8x60xf32>
    %69 = tpu.matmul %67, %68, %cst_45 {dimension_numbers = #tpu.dot_dimension_numbers<[1], [0], [0], [1], [0, 0, 1, 1], [], []>} : vector<8x120xbf16>, vector<120x60xbf16>, vector<8x60xf32> -> vector<8x60xf32>
    %c0_46 = arith.constant 0 : index
    %c0_47 = arith.constant 0 : index
    %70 = vector.load %arg9[%c0_46, %c0_47] : memref<1x60xf32, #tpu.memory_space<vmem>>, vector<1x60xf32>
    %71 = vector.broadcast %70 : vector<1x60xf32> to vector<8x60xf32>
    %72 = arith.addf %69, %71 : vector<8x60xf32>
    %cst_48 = arith.constant 0.000000e+00 : f32
    %73 = vector.broadcast %cst_48 : f32 to vector<8x60xf32>
    %74 = arith.maximumf %72, %73 : vector<8x60xf32>
    %75 = arith.truncf %74 : vector<8x60xf32> to vector<8x60xbf16>
    %c0_49 = arith.constant 0 : index
    %c0_50 = arith.constant 0 : index
    %76 = vector.load %arg10[%c0_49, %c0_50] : memref<60x128xbf16, #tpu.memory_space<vmem>>, vector<60x128xbf16>
    %cst_51 = arith.constant dense<0.000000e+00> : vector<8x128xf32>
    %77 = tpu.matmul %75, %76, %cst_51 {dimension_numbers = #tpu.dot_dimension_numbers<[1], [0], [0], [1], [0, 0, 1, 1], [], []>} : vector<8x60xbf16>, vector<60x128xbf16>, vector<8x128xf32> -> vector<8x128xf32>
    %c0_52 = arith.constant 0 : index
    %c0_53 = arith.constant 0 : index
    %78 = vector.load %arg11[%c0_52, %c0_53] : memref<1x128xf32, #tpu.memory_space<vmem>>, vector<1x128xf32>
    %79 = vector.broadcast %78 : vector<1x128xf32> to vector<8x128xf32>
    %80 = arith.addf %77, %79 : vector<8x128xf32>
    %c0_54 = arith.constant 0 : index
    %c0_55 = arith.constant 0 : index
    %81 = vector.load %arg12[%c0_54, %c0_55] : memref<8x128xf32, #tpu.memory_space<vmem>>, vector<8x128xf32>
    tpu.vector_store %arg12[%c0_54, %c0_55], %80 {strides = array<i32>} : memref<8x128xf32, #tpu.memory_space<vmem>>, vector<8x128xf32>,
    return
  }
  func.func @transform_0(%arg0: i32) -> (i32, i32) {
    %c0_i32 = arith.constant 0 : i32
    %c0_i32_0 = arith.constant 0 : i32
    return %arg0, %c0_i32 : i32, i32
  }
  func.func @transform_1(%arg0: i32) -> (i32, i32) {
    %c0_i32 = arith.constant 0 : i32
    %c0_i32_0 = arith.constant 0 : i32
    %c0_i32_1 = arith.constant 0 : i32
    return %c0_i32, %c0_i32_0 : i32, i32
  }
  func.func @transform_2(%arg0: i32) -> (i32, i32) {
    %c0_i32 = arith.constant 0 : i32
    %c0_i32_0 = arith.constant 0 : i32
    %c0_i32_1 = arith.constant 0 : i32
    return %c0_i32, %c0_i32_0 : i32, i32
  }
  func.func @transform_3(%arg0: i32) -> (i32, i32, i32) {
    %c0_i32 = arith.constant 0 : i32
    %c0_i32_0 = arith.constant 0 : i32
    %c0_i32_1 = arith.constant 0 : i32
    %c0_i32_2 = arith.constant 0 : i32
    return %c0_i32, %c0_i32_0, %c0_i32_1 : i32, i32, i32
  }
  func.func @transform_4(%arg0: i32) -> (i32, i32) {
    %c0_i32 = arith.constant 0 : i32
    %c0_i32_0 = arith.constant 0 : i32
    %c0_i32_1 = arith.constant 0 : i32
    return %c0_i32, %c0_i32_0 : i32, i32
  }
  func.func @transform_5(%arg0: i32) -> (i32, i32) {
    %c0_i32 = arith.constant 0 : i32
    %c0_i32_0 = arith.constant 0 : i32
    %c0_i32_1 = arith.constant 0 : i32
    return %c0_i32, %c0_i32_0 : i32, i32
  }
  func.func @transform_6(%arg0: i32) -> (i32, i32) {
    %c0_i32 = arith.constant 0 : i32
    %c0_i32_0 = arith.constant 0 : i32
    %c0_i32_1 = arith.constant 0 : i32
    return %c0_i32, %c0_i32_0 : i32, i32
  }
  func.func @transform_7(%arg0: i32) -> (i32, i32) {
    %c0_i32 = arith.constant 0 : i32
    %c0_i32_0 = arith.constant 0 : i32
    %c0_i32_1 = arith.constant 0 : i32
    return %c0_i32, %c0_i32_0 : i32, i32
  }
  func.func @transform_8(%arg0: i32) -> (i32, i32) {
    %c0_i32 = arith.constant 0 : i32
    %c0_i32_0 = arith.constant 0 : i32
    %c0_i32_1 = arith.constant 0 : i32
    return %c0_i32, %c0_i32_0 : i32, i32
  }
  func.func @transform_9(%arg0: i32) -> (i32, i32) {
    %c0_i32 = arith.constant 0 : i32
    %c0_i32_0 = arith.constant 0 : i32
    %c0_i32_1 = arith.constant 0 : i32
    return %c0_i32, %c0_i32_0 : i32, i32
  }
  func.func @transform_10(%arg0: i32) -> (i32, i32) {
    %c0_i32 = arith.constant 0 : i32
    %c0_i32_0 = arith.constant 0 : i32
    %c0_i32_1 = arith.constant 0 : i32
    return %c0_i32, %c0_i32_0 : i32, i32
  }
  func.func @transform_11(%arg0: i32) -> (i32, i32) {
    %c0_i32 = arith.constant 0 : i32
    %c0_i32_0 = arith.constant 0 : i32
    return %arg0, %c0_i32 : i32, i32
  }
}

</mosaic_0001>

<llo_original>
// kernel: network_forward.1
$region0: #{network_forward.1}
  #allocation0 [shape = 'u32[]', space=smem, size = 0x4, offset = 0x4, fixed_abs, tag = 'smem constant byte address 0x4 - core index']
  #allocation1 [shape = 'u32[72,128]{1,0:T(1,128)}', space=vmem, size = 0x9000, scoped, tag = 'internal scratch']
  #allocation2 [shape = 'f32[224,48]{1,0:T(8,128)}', space=vmem, size = 0x1c000, scoped, tag = 'scratch operand']
  %s0 = inlined_call_operand.vmem [shape: f32[224,28], index: 0, kind: input, shape index: {}]
  %s1 = inlined_call_operand.vmem [shape: bf16[140,144], index: 1, kind: input, shape index: {}]
  %s2 = inlined_call_operand.vmem [shape: f32[1,144], index: 2, kind: input, shape index: {}]
  %s3 = inlined_call_operand.vmem [shape: bf16[5,72,96], index: 3, kind: input, shape index: {}]
  %s4 = inlined_call_operand.vmem [shape: f32[1,96], index: 4, kind: input, shape index: {}]
  %s5 = inlined_call_operand.vmem [shape: bf16[192,120], index: 5, kind: input, shape index: {}]
  %s6 = inlined_call_operand.vmem [shape: f32[1,120], index: 6, kind: input, shape index: {}]
  %s7 = inlined_call_operand.vmem [shape: bf16[120,60], index: 7, kind: input, shape index: {}]
  %s8 = inlined_call_operand.vmem [shape: f32[1,60], index: 8, kind: input, shape index: {}]
  %s9 = inlined_call_operand.vmem [shape: bf16[60,128], index: 9, kind: input, shape index: {}]
  %s10 = inlined_call_operand.vmem [shape: f32[1,128], index: 10, kind: input, shape index: {}]
  %s11 = inlined_call_operand.vmem [shape: f32[8,128], index: 11, kind: output, shape index: {}]
  %s12 = sld [smem:[#allocation0]]
  $region54: #{network_forward.1} parent=0
    _
  %s14 = ssub.s32 1, %s12
  %s15 = scalar_select 0, %s14, %s12
  // Predicated region
  $region2: #{network_forward.1} parent=0 // pred_check
    _
  $region3: #{network_forward.1} parent=0 // pred_check_branch
    %17 = sbr.rel (0) target = $region5
  $region4: #{network_forward.1} parent=0 // pred_region
    _
  $region5: #{network_forward.1} parent=0 // pred_fallthru
    _
  // Predicated region
  $region6: #{network_forward.1} parent=0 // pred_check
    _
  $region7: #{network_forward.1} parent=0 // pred_check_branch
    %19 = sbr.rel (0) target = $region9
  $region8: #{network_forward.1} parent=0 // pred_region
    _
  $region9: #{network_forward.1} parent=0 // pred_fallthru
    _
  // Predicated region
  $region10: #{network_forward.1} parent=0 // pred_check
    _
  $region11: #{network_forward.1} parent=0 // pred_check_branch
    %21 = sbr.rel (0) target = $region13
  $region12: #{network_forward.1} parent=0 // pred_region
    _
  $region13: #{network_forward.1} parent=0 // pred_fallthru
    _
  // Predicated region
  $region14: #{network_forward.1} parent=0 // pred_check
    _
  $region15: #{network_forward.1} parent=0 // pred_check_branch
    %23 = sbr.rel (0) target = $region17
  $region16: #{network_forward.1} parent=0 // pred_region
    _
  $region17: #{network_forward.1} parent=0 // pred_fallthru
    _
  // Predicated region
  $region18: #{network_forward.1} parent=0 // pred_check
    _
  $region19: #{network_forward.1} parent=0 // pred_check_branch
    %25 = sbr.rel (0) target = $region21
  $region20: #{network_forward.1} parent=0 // pred_region
    _
  $region21: #{network_forward.1} parent=0 // pred_fallthru
    _
  // Predicated region
  $region22: #{network_forward.1} parent=0 // pred_check
    _
  $region23: #{network_forward.1} parent=0 // pred_check_branch
    %27 = sbr.rel (0) target = $region25
  $region24: #{network_forward.1} parent=0 // pred_region
    _
  $region25: #{network_forward.1} parent=0 // pred_fallthru
    _
  // Predicated region
  $region26: #{network_forward.1} parent=0 // pred_check
    _
  $region27: #{network_forward.1} parent=0 // pred_check_branch
    %29 = sbr.rel (0) target = $region29
  $region28: #{network_forward.1} parent=0 // pred_region
    _
  $region29: #{network_forward.1} parent=0 // pred_fallthru
    _
  // Predicated region
  $region30: #{network_forward.1} parent=0 // pred_check
    _
  $region31: #{network_forward.1} parent=0 // pred_check_branch
    %31 = sbr.rel (0) target = $region33
  $region32: #{network_forward.1} parent=0 // pred_region
    _
  $region33: #{network_forward.1} parent=0 // pred_fallthru
    _
  // Predicated region
  $region34: #{network_forward.1} parent=0 // pred_check
    _
  $region35: #{network_forward.1} parent=0 // pred_check_branch
    %33 = sbr.rel (0) target = $region37
  $region36: #{network_forward.1} parent=0 // pred_region
    _
  $region37: #{network_forward.1} parent=0 // pred_fallthru
    _
  // Predicated region
  $region38: #{network_forward.1} parent=0 // pred_check
    _
  $region39: #{network_forward.1} parent=0 // pred_check_branch
    %35 = sbr.rel (0) target = $region41
  $region40: #{network_forward.1} parent=0 // pred_region
    _
  $region41: #{network_forward.1} parent=0 // pred_fallthru
    _
  // Predicated region
  $region42: #{network_forward.1} parent=0 // pred_check
    _
  $region43: #{network_forward.1} parent=0 // pred_check_branch
    %37 = sbr.rel (0) target = $region45
  $region44: #{network_forward.1} parent=0 // pred_region
    _
  $region45: #{network_forward.1} parent=0 // pred_fallthru
    _
  %v39 = vld [vmem:[%s0] sm:$0xff]
  %v40 = vld [vmem:[%s0 + $0x8] sm:$0xff]
  %v41 = vld [vmem:[%s0 + $0x10] sm:$0xff]
  %v42 = vld [vmem:[%s0 + $0x18] sm:$0xff]
  %v43 = vld [vmem:[%s0 + $0x20] sm:$0xff]
  %v44 = vld [vmem:[%s0 + $0x28] sm:$0xff]
  %v45 = vld [vmem:[%s0 + $0x30] sm:$0xff]
  %v46 = vld [vmem:[%s0 + $0x38] sm:$0xff]
  %v47 = vld [vmem:[%s0 + $0x40] sm:$0xff]
  %v48 = vld [vmem:[%s0 + $0x48] sm:$0xff]
  %v49 = vld [vmem:[%s0 + $0x50] sm:$0xff]
  %v50 = vld [vmem:[%s0 + $0x58] sm:$0xff]
  %v51 = vld [vmem:[%s0 + $0x60] sm:$0xff]
  %v52 = vld [vmem:[%s0 + $0x68] sm:$0xff]
  %v53 = vld [vmem:[%s0 + $0x70] sm:$0xff]
  %v54 = vld [vmem:[%s0 + $0x78] sm:$0xff]
  %v55 = vld [vmem:[%s0 + $0x80] sm:$0xff]
  %v56 = vld [vmem:[%s0 + $0x88] sm:$0xff]
  %v57 = vld [vmem:[%s0 + $0x90] sm:$0xff]
  %v58 = vld [vmem:[%s0 + $0x98] sm:$0xff]
  %v59 = vld [vmem:[%s0 + $0xa0] sm:$0xff]
  %v60 = vld [vmem:[%s0 + $0xa8] sm:$0xff]
  %v61 = vld [vmem:[%s0 + $0xb0] sm:$0xff]
  %v62 = vld [vmem:[%s0 + $0xb8] sm:$0xff]
  %v63 = vld [vmem:[%s0 + $0xc0] sm:$0xff]
  %v64 = vld [vmem:[%s0 + $0xc8] sm:$0xff]
  %v65 = vld [vmem:[%s0 + $0xd0] sm:$0xff]
  %v66 = vld [vmem:[%s0 + $0xd8] sm:$0xff]
  %v67 = vrot.slane %v39, 1
  %v68 = vrot.slane %v40, 1
  %v69 = vrot.slane %v41, 1
  %v70 = vrot.slane %v42, 1
  %v71 = vrot.slane %v43, 1
  %v72 = vrot.slane %v44, 1
  %v73 = vrot.slane %v45, 1
  %v74 = vrot.slane %v46, 1
  %v75 = vrot.slane %v47, 1
  %v76 = vrot.slane %v48, 1
  %v77 = vrot.slane %v49, 1
  %v78 = vrot.slane %v50, 1
  %v79 = vrot.slane %v51, 1
  %v80 = vrot.slane %v52, 1
  %v81 = vrot.slane %v53, 1
  %v82 = vrot.slane %v54, 1
  %v83 = vrot.slane %v55, 1
  %v84 = vrot.slane %v56, 1
  %v85 = vrot.slane %v57, 1
  %v86 = vrot.slane %v58, 1
  %v87 = vrot.slane %v59, 1
  %v88 = vrot.slane %v60, 1
  %v89 = vrot.slane %v61, 1
  %v90 = vrot.slane %v62, 1
  %v91 = vrot.slane %v63, 1
  %v92 = vrot.slane %v64, 1
  %v93 = vrot.slane %v65, 1
  %v94 = vrot.slane %v66, 1
  %v95 = vlaneseq
  %v96 = vshrl.u32 %v95, 7
  %vm97 = vcmp.lt.s32.totalorder %v96, 7
  %v98 = vsel %vm97, %v93, %v94
  %v99 = vsel %vm97, %v92, %v93
  %v100 = vsel %vm97, %v91, %v92
  %v101 = vsel %vm97, %v90, %v91
  %v102 = vsel %vm97, %v89, %v90
  %v103 = vsel %vm97, %v88, %v89
  %v104 = vsel %vm97, %v87, %v88
  %v105 = vsel %vm97, %v86, %v87
  %v106 = vsel %vm97, %v85, %v86
  %v107 = vsel %vm97, %v84, %v85
  %v108 = vsel %vm97, %v83, %v84
  %v109 = vsel %vm97, %v82, %v83
  %v110 = vsel %vm97, %v81, %v82
  %v111 = vsel %vm97, %v80, %v81
  %v112 = vsel %vm97, %v79, %v80
  %v113 = vsel %vm97, %v78, %v79
  %v114 = vsel %vm97, %v77, %v78
  %v115 = vsel %vm97, %v76, %v77
  %v116 = vsel %vm97, %v75, %v76
  %v117 = vsel %vm97, %v74, %v75
  %v118 = vsel %vm97, %v73, %v74
  %v119 = vsel %vm97, %v72, %v73
  %v120 = vsel %vm97, %v71, %v72
  %v121 = vsel %vm97, %v70, %v71
  %v122 = vsel %vm97, %v69, %v70
  %v123 = vsel %vm97, %v68, %v69
  %v124 = vsel %vm97, %v67, %v68
  %v125 = vsel %vm97, %v94, %v67
  %v126 = vrot.slane %v39, 2
  %v127 = vrot.slane %v40, 2
  %v128 = vrot.slane %v41, 2
  %v129 = vrot.slane %v42, 2
  %v130 = vrot.slane %v43, 2
  %v131 = vrot.slane %v44, 2
  %v132 = vrot.slane %v45, 2
  %v133 = vrot.slane %v46, 2
  %v134 = vrot.slane %v47, 2
  %v135 = vrot.slane %v48, 2
  %v136 = vrot.slane %v49, 2
  %v137 = vrot.slane %v50, 2
  %v138 = vrot.slane %v51, 2
  %v139 = vrot.slane %v52, 2
  %v140 = vrot.slane %v53, 2
  %v141 = vrot.slane %v54, 2
  %v142 = vrot.slane %v55, 2
  %v143 = vrot.slane %v56, 2
  %v144 = vrot.slane %v57, 2
  %v145 = vrot.slane %v58, 2
  %v146 = vrot.slane %v59, 2
  %v147 = vrot.slane %v60, 2
  %v148 = vrot.slane %v61, 2
  %v149 = vrot.slane %v62, 2
  %v150 = vrot.slane %v63, 2
  %v151 = vrot.slane %v64, 2
  %v152 = vrot.slane %v65, 2
  %v153 = vrot.slane %v66, 2
  %vm154 = vcmp.lt.s32.totalorder %v96, 6
  %v155 = vsel %vm154, %v152, %v153
  %v156 = vsel %vm154, %v151, %v152
  %v157 = vsel %vm154, %v150, %v151
  %v158 = vsel %vm154, %v149, %v150
  %v159 = vsel %vm154, %v148, %v149
  %v160 = vsel %vm154, %v147, %v148
  %v161 = vsel %vm154, %v146, %v147
  %v162 = vsel %vm154, %v145, %v146
  %v163 = vsel %vm154, %v144, %v145
  %v164 = vsel %vm154, %v143, %v144
  %v165 = vsel %vm154, %v142, %v143
  %v166 = vsel %vm154, %v141, %v142
  %v167 = vsel %vm154, %v140, %v141
  %v168 = vsel %vm154, %v139, %v140
  %v169 = vsel %vm154, %v138, %v139
  %v170 = vsel %vm154, %v137, %v138
  %v171 = vsel %vm154, %v136, %v137
  %v172 = vsel %vm154, %v135, %v136
  %v173 = vsel %vm154, %v134, %v135
  %v174 = vsel %vm154, %v133, %v134
  %v175 = vsel %vm154, %v132, %v133
  %v176 = vsel %vm154, %v131, %v132
  %v177 = vsel %vm154, %v130, %v131
  %v178 = vsel %vm154, %v129, %v130
  %v179 = vsel %vm154, %v128, %v129
  %v180 = vsel %vm154, %v127, %v128
  %v181 = vsel %vm154, %v126, %v127
  %v182 = vsel %vm154, %v153, %v126
  %v183 = vrot.slane %v39, 3
  %v184 = vrot.slane %v40, 3
  %v185 = vrot.slane %v41, 3
  %v186 = vrot.slane %v42, 3
  %v187 = vrot.slane %v43, 3
  %v188 = vrot.slane %v44, 3
  %v189 = vrot.slane %v45, 3
  %v190 = vrot.slane %v46, 3
  %v191 = vrot.slane %v47, 3
  %v192 = vrot.slane %v48, 3
  %v193 = vrot.slane %v49, 3
  %v194 = vrot.slane %v50, 3
  %v195 = vrot.slane %v51, 3
  %v196 = vrot.slane %v52, 3
  %v197 = vrot.slane %v53, 3
  %v198 = vrot.slane %v54, 3
  %v199 = vrot.slane %v55, 3
  %v200 = vrot.slane %v56, 3
  %v201 = vrot.slane %v57, 3
  %v202 = vrot.slane %v58, 3
  %v203 = vrot.slane %v59, 3
  %v204 = vrot.slane %v60, 3
  %v205 = vrot.slane %v61, 3
  %v206 = vrot.slane %v62, 3
  %v207 = vrot.slane %v63, 3
  %v208 = vrot.slane %v64, 3
  %v209 = vrot.slane %v65, 3
  %v210 = vrot.slane %v66, 3
  %vm211 = vcmp.lt.s32.totalorder %v96, 5
  %v212 = vsel %vm211, %v209, %v210
  %v213 = vsel %vm211, %v208, %v209
  %v214 = vsel %vm211, %v207, %v208
  %v215 = vsel %vm211, %v206, %v207
  %v216 = vsel %vm211, %v205, %v206
  %v217 = vsel %vm211, %v204, %v205
  %v218 = vsel %vm211, %v203, %v204
  %v219 = vsel %vm211, %v202, %v203
  %v220 = vsel %vm211, %v201, %v202
  %v221 = vsel %vm211, %v200, %v201
  %v222 = vsel %vm211, %v199, %v200
  %v223 = vsel %vm211, %v198, %v199
  %v224 = vsel %vm211, %v197, %v198
  %v225 = vsel %vm211, %v196, %v197
  %v226 = vsel %vm211, %v195, %v196
  %v227 = vsel %vm211, %v194, %v195
  %v228 = vsel %vm211, %v193, %v194
  %v229 = vsel %vm211, %v192, %v193
  %v230 = vsel %vm211, %v191, %v192
  %v231 = vsel %vm211, %v190, %v191
  %v232 = vsel %vm211, %v189, %v190
  %v233 = vsel %vm211, %v188, %v189
  %v234 = vsel %vm211, %v187, %v188
  %v235 = vsel %vm211, %v186, %v187
  %v236 = vsel %vm211, %v185, %v186
  %v237 = vsel %vm211, %v184, %v185
  %v238 = vsel %vm211, %v183, %v184
  %v239 = vsel %vm211, %v210, %v183
  %v240 = vrot.slane %v39, 4
  %v241 = vrot.slane %v40, 4
  %v242 = vrot.slane %v41, 4
  %v243 = vrot.slane %v42, 4
  %v244 = vrot.slane %v43, 4
  %v245 = vrot.slane %v44, 4
  %v246 = vrot.slane %v45, 4
  %v247 = vrot.slane %v46, 4
  %v248 = vrot.slane %v47, 4
  %v249 = vrot.slane %v48, 4
  %v250 = vrot.slane %v49, 4
  %v251 = vrot.slane %v50, 4
  %v252 = vrot.slane %v51, 4
  %v253 = vrot.slane %v52, 4
  %v254 = vrot.slane %v53, 4
  %v255 = vrot.slane %v54, 4
  %v256 = vrot.slane %v55, 4
  %v257 = vrot.slane %v56, 4
  %v258 = vrot.slane %v57, 4
  %v259 = vrot.slane %v58, 4
  %v260 = vrot.slane %v59, 4
  %v261 = vrot.slane %v60, 4
  %v262 = vrot.slane %v61, 4
  %v263 = vrot.slane %v62, 4
  %v264 = vrot.slane %v63, 4
  %v265 = vrot.slane %v64, 4
  %v266 = vrot.slane %v65, 4
  %v267 = vrot.slane %v66, 4
  %vm268 = vcmp.lt.s32.totalorder %v96, 4
  %v269 = vsel %vm268, %v266, %v267
  %v270 = vsel %vm268, %v265, %v266
  %v271 = vsel %vm268, %v264, %v265
  %v272 = vsel %vm268, %v263, %v264
  %v273 = vsel %vm268, %v262, %v263
  %v274 = vsel %vm268, %v261, %v262
  %v275 = vsel %vm268, %v260, %v261
  %v276 = vsel %vm268, %v259, %v260
  %v277 = vsel %vm268, %v258, %v259
  %v278 = vsel %vm268, %v257, %v258
  %v279 = vsel %vm268, %v256, %v257
  %v280 = vsel %vm268, %v255, %v256
  %v281 = vsel %vm268, %v254, %v255
  %v282 = vsel %vm268, %v253, %v254
  %v283 = vsel %vm268, %v252, %v253
  %v284 = vsel %vm268, %v251, %v252
  %v285 = vsel %vm268, %v250, %v251
  %v286 = vsel %vm268, %v249, %v250
  %v287 = vsel %vm268, %v248, %v249
  %v288 = vsel %vm268, %v247, %v248
  %v289 = vsel %vm268, %v246, %v247
  %v290 = vsel %vm268, %v245, %v246
  %v291 = vsel %vm268, %v244, %v245
  %v292 = vsel %vm268, %v243, %v244
  %v293 = vsel %vm268, %v242, %v243
  %v294 = vsel %vm268, %v241, %v242
  %v295 = vsel %vm268, %v240, %v241
  %v296 = vsel %vm268, %v267, %v240
  %325 = vrot.lane.b32.xlu0 %v124, 28
  %v326 = vpop.permute.xlu0 %325
  %327 = vrot.lane.b32.xlu0 %v123, 28
  %v328 = vpop.permute.xlu0 %327
  %329 = vrot.lane.b32.xlu0 %v122, 28
  %v330 = vpop.permute.xlu0 %329
  %331 = vrot.lane.b32.xlu0 %v121, 28
  %v332 = vpop.permute.xlu0 %331
  %333 = vrot.lane.b32.xlu0 %v120, 28
  %v334 = vpop.permute.xlu0 %333
  %335 = vrot.lane.b32.xlu0 %v119, 28
  %v336 = vpop.permute.xlu0 %335
  %337 = vrot.lane.b32.xlu0 %v118, 28
  %v338 = vpop.permute.xlu0 %337
  %339 = vrot.lane.b32.xlu0 %v117, 28
  %v340 = vpop.permute.xlu0 %339
  %341 = vrot.lane.b32.xlu0 %v116, 28
  %v342 = vpop.permute.xlu0 %341
  %343 = vrot.lane.b32.xlu0 %v115, 28
  %v344 = vpop.permute.xlu0 %343
  %345 = vrot.lane.b32.xlu0 %v114, 28
  %v346 = vpop.permute.xlu0 %345
  %347 = vrot.lane.b32.xlu0 %v113, 28
  %v348 = vpop.permute.xlu0 %347
  %349 = vrot.lane.b32.xlu0 %v112, 28
  %v350 = vpop.permute.xlu0 %349
  %351 = vrot.lane.b32.xlu0 %v111, 28
  %v352 = vpop.permute.xlu0 %351
  %353 = vrot.lane.b32.xlu0 %v110, 28
  %v354 = vpop.permute.xlu0 %353
  %355 = vrot.lane.b32.xlu0 %v109, 28
  %v356 = vpop.permute.xlu0 %355
  %357 = vrot.lane.b32.xlu0 %v108, 28
  %v358 = vpop.permute.xlu0 %357
  %359 = vrot.lane.b32.xlu0 %v107, 28
  %v360 = vpop.permute.xlu0 %359
  %361 = vrot.lane.b32.xlu0 %v106, 28
  %v362 = vpop.permute.xlu0 %361
  %363 = vrot.lane.b32.xlu0 %v105, 28
  %v364 = vpop.permute.xlu0 %363
  %365 = vrot.lane.b32.xlu0 %v104, 28
  %v366 = vpop.permute.xlu0 %365
  %367 = vrot.lane.b32.xlu0 %v103, 28
  %v368 = vpop.permute.xlu0 %367
  %369 = vrot.lane.b32.xlu0 %v102, 28
  %v370 = vpop.permute.xlu0 %369
  %371 = vrot.lane.b32.xlu0 %v101, 28
  %v372 = vpop.permute.xlu0 %371
  %373 = vrot.lane.b32.xlu0 %v100, 28
  %v374 = vpop.permute.xlu0 %373
  %375 = vrot.lane.b32.xlu0 %v99, 28
  %v376 = vpop.permute.xlu0 %375
  %377 = vrot.lane.b32.xlu0 %v98, 28
  %v378 = vpop.permute.xlu0 %377
  %379 = vrot.lane.b32.xlu0 %v125, 28
  %v380 = vpop.permute.xlu0 %379
  %437 = vrot.lane.b32.xlu0 %v181, 56
  %v438 = vpop.permute.xlu0 %437
  %439 = vrot.lane.b32.xlu0 %v180, 56
  %v440 = vpop.permute.xlu0 %439
  %441 = vrot.lane.b32.xlu0 %v179, 56
  %v442 = vpop.permute.xlu0 %441
  %443 = vrot.lane.b32.xlu0 %v178, 56
  %v444 = vpop.permute.xlu0 %443
  %445 = vrot.lane.b32.xlu0 %v177, 56
  %v446 = vpop.permute.xlu0 %445
  %447 = vrot.lane.b32.xlu0 %v176, 56
  %v448 = vpop.permute.xlu0 %447
  %449 = vrot.lane.b32.xlu0 %v175, 56
  %v450 = vpop.permute.xlu0 %449
  %451 = vrot.lane.b32.xlu0 %v174, 56
  %v452 = vpop.permute.xlu0 %451
  %453 = vrot.lane.b32.xlu0 %v173, 56
  %v454 = vpop.permute.xlu0 %453
  %455 = vrot.lane.b32.xlu0 %v172, 56
  %v456 = vpop.permute.xlu0 %455
  %457 = vrot.lane.b32.xlu0 %v171, 56
  %v458 = vpop.permute.xlu0 %457
  %459 = vrot.lane.b32.xlu0 %v170, 56
  %v460 = vpop.permute.xlu0 %459
  %461 = vrot.lane.b32.xlu0 %v169, 56
  %v462 = vpop.permute.xlu0 %461
  %463 = vrot.lane.b32.xlu0 %v168, 56
  %v464 = vpop.permute.xlu0 %463
  %465 = vrot.lane.b32.xlu0 %v167, 56
  %v466 = vpop.permute.xlu0 %465
  %467 = vrot.lane.b32.xlu0 %v166, 56
  %v468 = vpop.permute.xlu0 %467
  %469 = vrot.lane.b32.xlu0 %v165, 56
  %v470 = vpop.permute.xlu0 %469
  %471 = vrot.lane.b32.xlu0 %v164, 56
  %v472 = vpop.permute.xlu0 %471
  %473 = vrot.lane.b32.xlu0 %v163, 56
  %v474 = vpop.permute.xlu0 %473
  %475 = vrot.lane.b32.xlu0 %v162, 56
  %v476 = vpop.permute.xlu0 %475
  %477 = vrot.lane.b32.xlu0 %v161, 56
  %v478 = vpop.permute.xlu0 %477
  %479 = vrot.lane.b32.xlu0 %v160, 56
  %v480 = vpop.permute.xlu0 %479
  %481 = vrot.lane.b32.xlu0 %v159, 56
  %v482 = vpop.permute.xlu0 %481
  %483 = vrot.lane.b32.xlu0 %v158, 56
  %v484 = vpop.permute.xlu0 %483
  %485 = vrot.lane.b32.xlu0 %v157, 56
  %v486 = vpop.permute.xlu0 %485
  %487 = vrot.lane.b32.xlu0 %v156, 56
  %v488 = vpop.permute.xlu0 %487
  %489 = vrot.lane.b32.xlu0 %v155, 56
  %v490 = vpop.permute.xlu0 %489
  %491 = vrot.lane.b32.xlu0 %v182, 56
  %v492 = vpop.permute.xlu0 %491
  %549 = vrot.lane.b32.xlu0 %v238, 84
  %v550 = vpop.permute.xlu0 %549
  %551 = vrot.lane.b32.xlu0 %v237, 84
  %v552 = vpop.permute.xlu0 %551
  %553 = vrot.lane.b32.xlu0 %v236, 84
  %v554 = vpop.permute.xlu0 %553
  %555 = vrot.lane.b32.xlu0 %v235, 84
  %v556 = vpop.permute.xlu0 %555
  %557 = vrot.lane.b32.xlu0 %v234, 84
  %v558 = vpop.permute.xlu0 %557
  %559 = vrot.lane.b32.xlu0 %v233, 84
  %v560 = vpop.permute.xlu0 %559
  %561 = vrot.lane.b32.xlu0 %v232, 84
  %v562 = vpop.permute.xlu0 %561
  %563 = vrot.lane.b32.xlu0 %v231, 84
  %v564 = vpop.permute.xlu0 %563
  %565 = vrot.lane.b32.xlu0 %v230, 84
  %v566 = vpop.permute.xlu0 %565
  %567 = vrot.lane.b32.xlu0 %v229, 84
  %v568 = vpop.permute.xlu0 %567
  %569 = vrot.lane.b32.xlu0 %v228, 84
  %v570 = vpop.permute.xlu0 %569
  %571 = vrot.lane.b32.xlu0 %v227, 84
  %v572 = vpop.permute.xlu0 %571
  %573 = vrot.lane.b32.xlu0 %v226, 84
  %v574 = vpop.permute.xlu0 %573
  %575 = vrot.lane.b32.xlu0 %v225, 84
  %v576 = vpop.permute.xlu0 %575
  %577 = vrot.lane.b32.xlu0 %v224, 84
  %v578 = vpop.permute.xlu0 %577
  %579 = vrot.lane.b32.xlu0 %v223, 84
  %v580 = vpop.permute.xlu0 %579
  %581 = vrot.lane.b32.xlu0 %v222, 84
  %v582 = vpop.permute.xlu0 %581
  %583 = vrot.lane.b32.xlu0 %v221, 84
  %v584 = vpop.permute.xlu0 %583
  %585 = vrot.lane.b32.xlu0 %v220, 84
  %v586 = vpop.permute.xlu0 %585
  %587 = vrot.lane.b32.xlu0 %v219, 84
  %v588 = vpop.permute.xlu0 %587
  %589 = vrot.lane.b32.xlu0 %v218, 84
  %v590 = vpop.permute.xlu0 %589
  %591 = vrot.lane.b32.xlu0 %v217, 84
  %v592 = vpop.permute.xlu0 %591
  %593 = vrot.lane.b32.xlu0 %v216, 84
  %v594 = vpop.permute.xlu0 %593
  %595 = vrot.lane.b32.xlu0 %v215, 84
  %v596 = vpop.permute.xlu0 %595
  %597 = vrot.lane.b32.xlu0 %v214, 84
  %v598 = vpop.permute.xlu0 %597
  %599 = vrot.lane.b32.xlu0 %v213, 84
  %v600 = vpop.permute.xlu0 %599
  %601 = vrot.lane.b32.xlu0 %v212, 84
  %v602 = vpop.permute.xlu0 %601
  %603 = vrot.lane.b32.xlu0 %v239, 84
  %v604 = vpop.permute.xlu0 %603
  %661 = vrot.lane.b32.xlu0 %v295, 112
  %v662 = vpop.permute.xlu0 %661
  %663 = vrot.lane.b32.xlu0 %v294, 112
  %v664 = vpop.permute.xlu0 %663
  %665 = vrot.lane.b32.xlu0 %v293, 112
  %v666 = vpop.permute.xlu0 %665
  %667 = vrot.lane.b32.xlu0 %v292, 112
  %v668 = vpop.permute.xlu0 %667
  %669 = vrot.lane.b32.xlu0 %v291, 112
  %v670 = vpop.permute.xlu0 %669
  %671 = vrot.lane.b32.xlu0 %v290, 112
  %v672 = vpop.permute.xlu0 %671
  %673 = vrot.lane.b32.xlu0 %v289, 112
  %v674 = vpop.permute.xlu0 %673
  %675 = vrot.lane.b32.xlu0 %v288, 112
  %v676 = vpop.permute.xlu0 %675
  %677 = vrot.lane.b32.xlu0 %v287, 112
  %v678 = vpop.permute.xlu0 %677
  %679 = vrot.lane.b32.xlu0 %v286, 112
  %v680 = vpop.permute.xlu0 %679
  %681 = vrot.lane.b32.xlu0 %v285, 112
  %v682 = vpop.permute.xlu0 %681
  %683 = vrot.lane.b32.xlu0 %v284, 112
  %v684 = vpop.permute.xlu0 %683
  %685 = vrot.lane.b32.xlu0 %v283, 112
  %v686 = vpop.permute.xlu0 %685
  %687 = vrot.lane.b32.xlu0 %v282, 112
  %v688 = vpop.permute.xlu0 %687
  %689 = vrot.lane.b32.xlu0 %v281, 112
  %v690 = vpop.permute.xlu0 %689
  %691 = vrot.lane.b32.xlu0 %v280, 112
  %v692 = vpop.permute.xlu0 %691
  %693 = vrot.lane.b32.xlu0 %v279, 112
  %v694 = vpop.permute.xlu0 %693
  %695 = vrot.lane.b32.xlu0 %v278, 112
  %v696 = vpop.permute.xlu0 %695
  %697 = vrot.lane.b32.xlu0 %v277, 112
  %v698 = vpop.permute.xlu0 %697
  %699 = vrot.lane.b32.xlu0 %v276, 112
  %v700 = vpop.permute.xlu0 %699
  %701 = vrot.lane.b32.xlu0 %v275, 112
  %v702 = vpop.permute.xlu0 %701
  %703 = vrot.lane.b32.xlu0 %v274, 112
  %v704 = vpop.permute.xlu0 %703
  %705 = vrot.lane.b32.xlu0 %v273, 112
  %v706 = vpop.permute.xlu0 %705
  %707 = vrot.lane.b32.xlu0 %v272, 112
  %v708 = vpop.permute.xlu0 %707
  %709 = vrot.lane.b32.xlu0 %v271, 112
  %v710 = vpop.permute.xlu0 %709
  %711 = vrot.lane.b32.xlu0 %v270, 112
  %v712 = vpop.permute.xlu0 %711
  %713 = vrot.lane.b32.xlu0 %v269, 112
  %v714 = vpop.permute.xlu0 %713
  %715 = vrot.lane.b32.xlu0 %v296, 112
  %v716 = vpop.permute.xlu0 %715
  %vm745 = vcmask 228352
  %v746 = vsel %vm745, %v39, %v326
  %v747 = vsel %vm745, %v40, %v328
  %v748 = vsel %vm745, %v41, %v330
  %v749 = vsel %vm745, %v42, %v332
  %v750 = vsel %vm745, %v43, %v334
  %v751 = vsel %vm745, %v44, %v336
  %v752 = vsel %vm745, %v45, %v338
  %v753 = vsel %vm745, %v46, %v340
  %v754 = vsel %vm745, %v47, %v342
  %v755 = vsel %vm745, %v48, %v344
  %v756 = vsel %vm745, %v49, %v346
  %v757 = vsel %vm745, %v50, %v348
  %v758 = vsel %vm745, %v51, %v350
  %v759 = vsel %vm745, %v52, %v352
  %v760 = vsel %vm745, %v53, %v354
  %v761 = vsel %vm745, %v54, %v356
  %v762 = vsel %vm745, %v55, %v358
  %v763 = vsel %vm745, %v56, %v360
  %v764 = vsel %vm745, %v57, %v362
  %v765 = vsel %vm745, %v58, %v364
  %v766 = vsel %vm745, %v59, %v366
  %v767 = vsel %vm745, %v60, %v368
  %v768 = vsel %vm745, %v61, %v370
  %v769 = vsel %vm745, %v62, %v372
  %v770 = vsel %vm745, %v63, %v374
  %v771 = vsel %vm745, %v64, %v376
  %v772 = vsel %vm745, %v65, %v378
  %v773 = vsel %vm745, %v66, %v380
  %vm774 = vcmask 457728
  %v775 = vsel %vm774, %v746, %v438
  %v776 = vsel %vm774, %v747, %v440
  %v777 = vsel %vm774, %v748, %v442
  %v778 = vsel %vm774, %v749, %v444
  %v779 = vsel %vm774, %v750, %v446
  %v780 = vsel %vm774, %v751, %v448
  %v781 = vsel %vm774, %v752, %v450
  %v782 = vsel %vm774, %v753, %v452
  %v783 = vsel %vm774, %v754, %v454
  %v784 = vsel %vm774, %v755, %v456
  %v785 = vsel %vm774, %v756, %v458
  %v786 = vsel %vm774, %v757, %v460
  %v787 = vsel %vm774, %v758, %v462
  %v788 = vsel %vm774, %v759, %v464
  %v789 = vsel %vm774, %v760, %v466
  %v790 = vsel %vm774, %v761, %v468
  %v791 = vsel %vm774, %v762, %v470
  %v792 = vsel %vm774, %v763, %v472
  %v793 = vsel %vm774, %v764, %v474
  %v794 = vsel %vm774, %v765, %v476
  %v795 = vsel %vm774, %v766, %v478
  %v796 = vsel %vm774, %v767, %v480
  %v797 = vsel %vm774, %v768, %v482
  %v798 = vsel %vm774, %v769, %v484
  %v799 = vsel %vm774, %v770, %v486
  %v800 = vsel %vm774, %v771, %v488
  %v801 = vsel %vm774, %v772, %v490
  %v802 = vsel %vm774, %v773, %v492
  %vm803 = vcmask 687104
  %v804 = vsel %vm803, %v775, %v550
  %v805 = vsel %vm803, %v776, %v552
  %v806 = vsel %vm803, %v777, %v554
  %v807 = vsel %vm803, %v778, %v556
  %v808 = vsel %vm803, %v779, %v558
  %v809 = vsel %vm803, %v780, %v560
  %v810 = vsel %vm803, %v781, %v562
  %v811 = vsel %vm803, %v782, %v564
  %v812 = vsel %vm803, %v783, %v566
  %v813 = vsel %vm803, %v784, %v568
  %v814 = vsel %vm803, %v785, %v570
  %v815 = vsel %vm803, %v786, %v572
  %v816 = vsel %vm803, %v787, %v574
  %v817 = vsel %vm803, %v788, %v576
  %v818 = vsel %vm803, %v789, %v578
  %v819 = vsel %vm803, %v790, %v580
  %v820 = vsel %vm803, %v791, %v582
  %v821 = vsel %vm803, %v792, %v584
  %v822 = vsel %vm803, %v793, %v586
  %v823 = vsel %vm803, %v794, %v588
  %v824 = vsel %vm803, %v795, %v590
  %v825 = vsel %vm803, %v796, %v592
  %v826 = vsel %vm803, %v797, %v594
  %v827 = vsel %vm803, %v798, %v596
  %v828 = vsel %vm803, %v799, %v598
  %v829 = vsel %vm803, %v800, %v600
  %v830 = vsel %vm803, %v801, %v602
  %v831 = vsel %vm803, %v802, %v604
  %vm832 = vcmask 916480
  %v833 = vsel %vm832, %v804, %v662
  %v834 = vsel %vm832, %v805, %v664
  %v835 = vsel %vm832, %v806, %v666
  %v836 = vsel %vm832, %v807, %v668
  %v837 = vsel %vm832, %v808, %v670
  %v838 = vsel %vm832, %v809, %v672
  %v839 = vsel %vm832, %v810, %v674
  %v840 = vsel %vm832, %v811, %v676
  %v841 = vsel %vm832, %v812, %v678
  %v842 = vsel %vm832, %v813, %v680
  %v843 = vsel %vm832, %v814, %v682
  %v844 = vsel %vm832, %v815, %v684
  %v845 = vsel %vm832, %v816, %v686
  %v846 = vsel %vm832, %v817, %v688
  %v847 = vsel %vm832, %v818, %v690
  %v848 = vsel %vm832, %v819, %v692
  %v849 = vsel %vm832, %v820, %v694
  %v850 = vsel %vm832, %v821, %v696
  %v851 = vsel %vm832, %v822, %v698
  %v852 = vsel %vm832, %v823, %v700
  %v853 = vsel %vm832, %v824, %v702
  %v854 = vsel %vm832, %v825, %v704
  %v855 = vsel %vm832, %v826, %v706
  %v856 = vsel %vm832, %v827, %v708
  %v857 = vsel %vm832, %v828, %v710
  %v858 = vsel %vm832, %v829, %v712
  %v859 = vsel %vm832, %v830, %v714
  %v860 = vsel %vm832, %v831, %v716
  %v861 = vpack.c.bf16 %v834, %v833
  %v862 = vpack.c.bf16 %v664, %v662
  %v863 = vpack.c.bf16 %v836, %v835
  %v864 = vpack.c.bf16 %v668, %v666
  %v865 = vpack.c.bf16 %v838, %v837
  %v866 = vpack.c.bf16 %v672, %v670
  %v867 = vpack.c.bf16 %v840, %v839
  %v868 = vpack.c.bf16 %v676, %v674
  %v869 = vpack.c.bf16 %v842, %v841
  %v870 = vpack.c.bf16 %v680, %v678
  %v871 = vpack.c.bf16 %v844, %v843
  %v872 = vpack.c.bf16 %v684, %v682
  %v873 = vpack.c.bf16 %v846, %v845
  %v874 = vpack.c.bf16 %v688, %v686
  %v875 = vpack.c.bf16 %v848, %v847
  %v876 = vpack.c.bf16 %v692, %v690
  %v877 = vpack.c.bf16 %v850, %v849
  %v878 = vpack.c.bf16 %v696, %v694
  %v879 = vpack.c.bf16 %v852, %v851
  %v880 = vpack.c.bf16 %v700, %v698
  %v881 = vpack.c.bf16 %v854, %v853
  %v882 = vpack.c.bf16 %v704, %v702
  %v883 = vpack.c.bf16 %v856, %v855
  %v884 = vpack.c.bf16 %v708, %v706
  %v885 = vpack.c.bf16 %v858, %v857
  %v886 = vpack.c.bf16 %v712, %v710
  %v887 = vpack.c.bf16 %v860, %v859
  %v888 = vpack.c.bf16 %v716, %v714
  %v889 = vld [vmem:[%s1] sm:$0xff]
  %v890 = vld [vmem:[%s1 + $0x8] sm:$0xff]
  %v891 = vld [vmem:[%s1 + $0x10] sm:$0xff]
  %v892 = vld [vmem:[%s1 + $0x18] sm:$0xff]
  %v893 = vld [vmem:[%s1 + $0x20] sm:$0xff]
  %v894 = vld [vmem:[%s1 + $0x28] sm:$0xff]
  %v895 = vld [vmem:[%s1 + $0x30] sm:$0xff]
  %v896 = vld [vmem:[%s1 + $0x38] sm:$0xff]
  %v897 = vld [vmem:[%s1 + $0x40] sm:$0xff]
  %v898 = vld [vmem:[%s1 + $0x48] sm:$0xff]
  %v899 = vld [vmem:[%s1 + $0x50] sm:$0xff]
  %v900 = vld [vmem:[%s1 + $0x58] sm:$0xff]
  %v901 = vld [vmem:[%s1 + $0x60] sm:$0xff]
  %v902 = vld [vmem:[%s1 + $0x68] sm:$0xff]
  %v903 = vld [vmem:[%s1 + $0x70] sm:$0xff]
  %v904 = vld [vmem:[%s1 + $0x78] sm:$0xff]
  %v905 = vld [vmem:[%s1 + $0x80] sm:$0xff]
  %v906 = vld [vmem:[%s1 + $0x88] sm:$0x33]
  %v907 = vld [vmem:[%s2] sm:$0x3]
  %v909 = vperm.slane %v907, 0
  %v910 = vperm.slane %v907, 1
  %v931 = vunpack.c.l.b16 %v889
  %v932 = vunpack.c.h.b16 %v889
  %v933 = vunpack.c.l.b16 %v890
  %v934 = vunpack.c.h.b16 %v890
  %v935 = vunpack.c.l.b16 %v891
  %v936 = vunpack.c.h.b16 %v891
  %v937 = vunpack.c.l.b16 %v892
  %v938 = vunpack.c.h.b16 %v892
  %v939 = vunpack.c.l.b16 %v893
  %v940 = vunpack.c.h.b16 %v893
  %v941 = vunpack.c.l.b16 %v894
  %v942 = vunpack.c.h.b16 %v894
  %v943 = vunpack.c.l.b16 %v895
  %v944 = vunpack.c.h.b16 %v895
  %v945 = vunpack.c.l.b16 %v896
  %v946 = vunpack.c.h.b16 %v896
  %v947 = vunpack.c.l.b16 %v897
  %v948 = vunpack.c.h.b16 %v897
  %v949 = vunpack.c.l.b16 %v898
  %v950 = vunpack.c.h.b16 %v898
  %v951 = vunpack.c.l.b16 %v899
  %v952 = vunpack.c.h.b16 %v899
  %v953 = vunpack.c.l.b16 %v900
  %v954 = vunpack.c.h.b16 %v900
  %v955 = vunpack.c.l.b16 %v901
  %v956 = vunpack.c.h.b16 %v901
  %v957 = vunpack.c.l.b16 %v902
  %v958 = vunpack.c.h.b16 %v902
  %v959 = vunpack.c.l.b16 %v903
  %v960 = vunpack.c.h.b16 %v903
  %v961 = vunpack.c.l.b16 %v904
  %v962 = vunpack.c.h.b16 %v904
  %v963 = vunpack.c.l.b16 %v905
  %v964 = vunpack.c.h.b16 %v905
  %v965 = vunpack.c.l.b16 %v906
  %v966 = vunpack.c.h.b16 %v906
  %v967 = vpack.c.b16 %v933, %v931
  %v968 = vpack.c.b16 %v934, %v932
  %v969 = vpack.c.b16 %v937, %v935
  %v970 = vpack.c.b16 %v938, %v936
  %v971 = vpack.c.b16 %v941, %v939
  %v972 = vpack.c.b16 %v942, %v940
  %v973 = vpack.c.b16 %v945, %v943
  %v974 = vpack.c.b16 %v946, %v944
  %v975 = vpack.c.b16 %v949, %v947
  %v976 = vpack.c.b16 %v950, %v948
  %v977 = vpack.c.b16 %v953, %v951
  %v978 = vpack.c.b16 %v954, %v952
  %v979 = vpack.c.b16 %v957, %v955
  %v980 = vpack.c.b16 %v958, %v956
  %v981 = vpack.c.b16 %v961, %v959
  %v982 = vpack.c.b16 %v962, %v960
  %v983 = vpack.c.b16 %v965, %v963
  %v984 = vpack.c.b16 %v966, %v964
  %vm1001 = vcmask 97280
  %v1003 = vsel %vm1001, %v862, 0
  %v1006 = vsel %vm1001, %v864, 0
  %v1009 = vsel %vm1001, %v866, 0
  %v1012 = vsel %vm1001, %v868, 0
  %v1015 = vsel %vm1001, %v870, 0
  %v1018 = vsel %vm1001, %v872, 0
  %v1021 = vsel %vm1001, %v874, 0
  %v1024 = vsel %vm1001, %v876, 0
  %v1027 = vsel %vm1001, %v878, 0
  %v1030 = vsel %vm1001, %v880, 0
  %v1033 = vsel %vm1001, %v882, 0
  %v1036 = vsel %vm1001, %v884, 0
  %v1039 = vsel %vm1001, %v886, 0
  %v1042 = vsel %vm1001, %v888, 0
  %vm1044 = vcmask 1045504
  %v1046 = vsel %vm1044, %v983, 0
  %v1049 = vsel %vm1044, %v984, 0
  %1051 = vmatpush.bf16.msra.mxu0 %v981
  %1052 = vmatpush.bf16.msra.mxu0 %v979
  %1053 = vmatpush.bf16.msra.mxu0 %v977
  %1054 = vmatpush.bf16.msra.mxu0 %v975
  %1055 = vmatpush.bf16.msra.mxu0 %v973
  %1056 = vmatpush.bf16.msra.mxu0 %v971
  %1057 = vmatpush.bf16.msra.mxu0 %v969
  %1058 = vmatpush.bf16.msra.mxu0 %v967
  %1059 = vmatmul.bf16.gmra.mxu0 %v861
  %v1060 = vpop.f32.mrf.mxu0
  %v1061 = vadd.f32 %v909, %v1060
  %v1062 = vpop.f32.mrf.mxu0
  %v1063 = vadd.f32 %v909, %v1062
  %1064 = vmatmul.bf16.gmra.mxu0 %v863
  %v1065 = vpop.f32.mrf.mxu0
  %v1066 = vadd.f32 %v909, %v1065
  %v1067 = vpop.f32.mrf.mxu0
  %v1068 = vadd.f32 %v909, %v1067
  %1069 = vmatmul.bf16.gmra.mxu0 %v865
  %v1070 = vpop.f32.mrf.mxu0
  %v1071 = vadd.f32 %v909, %v1070
  %v1072 = vpop.f32.mrf.mxu0
  %v1073 = vadd.f32 %v909, %v1072
  %1074 = vmatmul.bf16.gmra.mxu0 %v867
  %v1075 = vpop.f32.mrf.mxu0
  %v1076 = vadd.f32 %v909, %v1075
  %v1077 = vpop.f32.mrf.mxu0
  %v1078 = vadd.f32 %v909, %v1077
  %1079 = vmatmul.bf16.gmra.mxu0 %v869
  %v1080 = vpop.f32.mrf.mxu0
  %v1081 = vadd.f32 %v909, %v1080
  %v1082 = vpop.f32.mrf.mxu0
  %v1083 = vadd.f32 %v909, %v1082
  %1084 = vmatmul.bf16.gmra.mxu0 %v871
  %v1085 = vpop.f32.mrf.mxu0
  %v1086 = vadd.f32 %v909, %v1085
  %v1087 = vpop.f32.mrf.mxu0
  %v1088 = vadd.f32 %v909, %v1087
  %1089 = vmatmul.bf16.gmra.mxu0 %v873
  %v1090 = vpop.f32.mrf.mxu0
  %v1091 = vadd.f32 %v909, %v1090
  %v1092 = vpop.f32.mrf.mxu0
  %v1093 = vadd.f32 %v909, %v1092
  %1094 = vmatmul.bf16.gmra.mxu0 %v875
  %v1095 = vpop.f32.mrf.mxu0
  %v1096 = vadd.f32 %v909, %v1095
  %v1097 = vpop.f32.mrf.mxu0
  %v1098 = vadd.f32 %v909, %v1097
  %1099 = vmatmul.bf16.gmra.mxu0 %v877
  %v1100 = vpop.f32.mrf.mxu0
  %v1101 = vadd.f32 %v909, %v1100
  %v1102 = vpop.f32.mrf.mxu0
  %v1103 = vadd.f32 %v909, %v1102
  %1104 = vmatmul.bf16.gmra.mxu0 %v879
  %v1105 = vpop.f32.mrf.mxu0
  %v1106 = vadd.f32 %v909, %v1105
  %v1107 = vpop.f32.mrf.mxu0
  %v1108 = vadd.f32 %v909, %v1107
  %1109 = vmatmul.bf16.gmra.mxu0 %v881
  %v1110 = vpop.f32.mrf.mxu0
  %v1111 = vadd.f32 %v909, %v1110
  %v1112 = vpop.f32.mrf.mxu0
  %v1113 = vadd.f32 %v909, %v1112
  %1114 = vmatmul.bf16.gmra.mxu0 %v883
  %v1115 = vpop.f32.mrf.mxu0
  %v1116 = vadd.f32 %v909, %v1115
  %v1117 = vpop.f32.mrf.mxu0
  %v1118 = vadd.f32 %v909, %v1117
  %1119 = vmatmul.bf16.gmra.mxu0 %v885
  %v1120 = vpop.f32.mrf.mxu0
  %v1121 = vadd.f32 %v909, %v1120
  %v1122 = vpop.f32.mrf.mxu0
  %v1123 = vadd.f32 %v909, %v1122
  %1124 = vmatmul.bf16.gmra.mxu0 %v887
  %v1125 = vpop.f32.mrf.mxu0
  %v1126 = vadd.f32 %v909, %v1125
  %v1127 = vpop.f32.mrf.mxu0
  %v1128 = vadd.f32 %v909, %v1127
  %1129 = vdwg.mxu0
  %1130 = vmatpush.bf16.msra.mxu0 0
  %1131 = vmatpush.bf16.msra.mxu0 0
  %1132 = vmatpush.bf16.msra.mxu0 0
  %1133 = vmatpush.bf16.msra.mxu0 0
  %1134 = vmatpush.bf16.msra.mxu0 0
  %1135 = vmatpush.bf16.msra.mxu0 0
  %1136 = vmatpush.bf16.msra.mxu0 0
  %1137 = vmatpush.bf16.msra.mxu0 %v1046
  %1138 = vmatmul.bf16.gmra.mxu0 %v1003
  %v1139 = vpop.f32.mrf.mxu0
  %v1140 = vadd.f32 %v1061, %v1139
  %v1141 = vpop.f32.mrf.mxu0
  %v1142 = vadd.f32 %v1063, %v1141
  %1143 = vmatmul.bf16.gmra.mxu0 %v1006
  %v1144 = vpop.f32.mrf.mxu0
  %v1145 = vadd.f32 %v1066, %v1144
  %v1146 = vpop.f32.mrf.mxu0
  %v1147 = vadd.f32 %v1068, %v1146
  %1148 = vmatmul.bf16.gmra.mxu0 %v1009
  %v1149 = vpop.f32.mrf.mxu0
  %v1150 = vadd.f32 %v1071, %v1149
  %v1151 = vpop.f32.mrf.mxu0
  %v1152 = vadd.f32 %v1073, %v1151
  %1153 = vmatmul.bf16.gmra.mxu0 %v1012
  %v1154 = vpop.f32.mrf.mxu0
  %v1155 = vadd.f32 %v1076, %v1154
  %v1156 = vpop.f32.mrf.mxu0
  %v1157 = vadd.f32 %v1078, %v1156
  %1158 = vmatmul.bf16.gmra.mxu0 %v1015
  %v1159 = vpop.f32.mrf.mxu0
  %v1160 = vadd.f32 %v1081, %v1159
  %v1161 = vpop.f32.mrf.mxu0
  %v1162 = vadd.f32 %v1083, %v1161
  %1163 = vmatmul.bf16.gmra.mxu0 %v1018
  %v1164 = vpop.f32.mrf.mxu0
  %v1165 = vadd.f32 %v1086, %v1164
  %v1166 = vpop.f32.mrf.mxu0
  %v1167 = vadd.f32 %v1088, %v1166
  %1168 = vmatmul.bf16.gmra.mxu0 %v1021
  %v1169 = vpop.f32.mrf.mxu0
  %v1170 = vadd.f32 %v1091, %v1169
  %v1171 = vpop.f32.mrf.mxu0
  %v1172 = vadd.f32 %v1093, %v1171
  %1173 = vmatmul.bf16.gmra.mxu0 %v1024
  %v1174 = vpop.f32.mrf.mxu0
  %v1175 = vadd.f32 %v1096, %v1174
  %v1176 = vpop.f32.mrf.mxu0
  %v1177 = vadd.f32 %v1098, %v1176
  %1178 = vmatmul.bf16.gmra.mxu0 %v1027
  %v1179 = vpop.f32.mrf.mxu0
  %v1180 = vadd.f32 %v1101, %v1179
  %v1181 = vpop.f32.mrf.mxu0
  %v1182 = vadd.f32 %v1103, %v1181
  %1183 = vmatmul.bf16.gmra.mxu0 %v1030
  %v1184 = vpop.f32.mrf.mxu0
  %v1185 = vadd.f32 %v1106, %v1184
  %v1186 = vpop.f32.mrf.mxu0
  %v1187 = vadd.f32 %v1108, %v1186
  %1188 = vmatmul.bf16.gmra.mxu0 %v1033
  %v1189 = vpop.f32.mrf.mxu0
  %v1190 = vadd.f32 %v1111, %v1189
  %v1191 = vpop.f32.mrf.mxu0
  %v1192 = vadd.f32 %v1113, %v1191
  %1193 = vmatmul.bf16.gmra.mxu0 %v1036
  %v1194 = vpop.f32.mrf.mxu0
  %v1195 = vadd.f32 %v1116, %v1194
  %v1196 = vpop.f32.mrf.mxu0
  %v1197 = vadd.f32 %v1118, %v1196
  %1198 = vmatmul.bf16.gmra.mxu0 %v1039
  %v1199 = vpop.f32.mrf.mxu0
  %v1200 = vadd.f32 %v1121, %v1199
  %v1201 = vpop.f32.mrf.mxu0
  %v1202 = vadd.f32 %v1123, %v1201
  %1203 = vmatmul.bf16.gmra.mxu0 %v1042
  %v1204 = vpop.f32.mrf.mxu0
  %v1205 = vadd.f32 %v1126, %v1204
  %v1206 = vpop.f32.mrf.mxu0
  %v1207 = vadd.f32 %v1128, %v1206
  %1208 = vdwg.mxu0
  %1209 = vmatpush.bf16.msra.mxu0 %v982
  %1210 = vmatpush.bf16.msra.mxu0 %v980
  %1211 = vmatpush.bf16.msra.mxu0 %v978
  %1212 = vmatpush.bf16.msra.mxu0 %v976
  %1213 = vmatpush.bf16.msra.mxu0 %v974
  %1214 = vmatpush.bf16.msra.mxu0 %v972
  %1215 = vmatpush.bf16.msra.mxu0 %v970
  %1216 = vmatpush.bf16.msra.mxu0 %v968
  %1217 = vmatmul.bf16.gmra.mxu0 %v861
  %v1218 = vpop.f32.mrf.mxu0
  %v1219 = vadd.f32 %v910, %v1218
  %v1220 = vpop.f32.mrf.mxu0
  %v1221 = vadd.f32 %v910, %v1220
  %1222 = vmatmul.bf16.gmra.mxu0 %v863
  %v1223 = vpop.f32.mrf.mxu0
  %v1224 = vadd.f32 %v910, %v1223
  %v1225 = vpop.f32.mrf.mxu0
  %v1226 = vadd.f32 %v910, %v1225
  %1227 = vmatmul.bf16.gmra.mxu0 %v865
  %v1228 = vpop.f32.mrf.mxu0
  %v1229 = vadd.f32 %v910, %v1228
  %v1230 = vpop.f32.mrf.mxu0
  %v1231 = vadd.f32 %v910, %v1230
  %1232 = vmatmul.bf16.gmra.mxu0 %v867
  %v1233 = vpop.f32.mrf.mxu0
  %v1234 = vadd.f32 %v910, %v1233
  %v1235 = vpop.f32.mrf.mxu0
  %v1236 = vadd.f32 %v910, %v1235
  %1237 = vmatmul.bf16.gmra.mxu0 %v869
  %v1238 = vpop.f32.mrf.mxu0
  %v1239 = vadd.f32 %v910, %v1238
  %v1240 = vpop.f32.mrf.mxu0
  %v1241 = vadd.f32 %v910, %v1240
  %1242 = vmatmul.bf16.gmra.mxu0 %v871
  %v1243 = vpop.f32.mrf.mxu0
  %v1244 = vadd.f32 %v910, %v1243
  %v1245 = vpop.f32.mrf.mxu0
  %v1246 = vadd.f32 %v910, %v1245
  %1247 = vmatmul.bf16.gmra.mxu0 %v873
  %v1248 = vpop.f32.mrf.mxu0
  %v1249 = vadd.f32 %v910, %v1248
  %v1250 = vpop.f32.mrf.mxu0
  %v1251 = vadd.f32 %v910, %v1250
  %1252 = vmatmul.bf16.gmra.mxu0 %v875
  %v1253 = vpop.f32.mrf.mxu0
  %v1254 = vadd.f32 %v910, %v1253
  %v1255 = vpop.f32.mrf.mxu0
  %v1256 = vadd.f32 %v910, %v1255
  %1257 = vmatmul.bf16.gmra.mxu0 %v877
  %v1258 = vpop.f32.mrf.mxu0
  %v1259 = vadd.f32 %v910, %v1258
  %v1260 = vpop.f32.mrf.mxu0
  %v1261 = vadd.f32 %v910, %v1260
  %1262 = vmatmul.bf16.gmra.mxu0 %v879
  %v1263 = vpop.f32.mrf.mxu0
  %v1264 = vadd.f32 %v910, %v1263
  %v1265 = vpop.f32.mrf.mxu0
  %v1266 = vadd.f32 %v910, %v1265
  %1267 = vmatmul.bf16.gmra.mxu0 %v881
  %v1268 = vpop.f32.mrf.mxu0
  %v1269 = vadd.f32 %v910, %v1268
  %v1270 = vpop.f32.mrf.mxu0
  %v1271 = vadd.f32 %v910, %v1270
  %1272 = vmatmul.bf16.gmra.mxu0 %v883
  %v1273 = vpop.f32.mrf.mxu0
  %v1274 = vadd.f32 %v910, %v1273
  %v1275 = vpop.f32.mrf.mxu0
  %v1276 = vadd.f32 %v910, %v1275
  %1277 = vmatmul.bf16.gmra.mxu0 %v885
  %v1278 = vpop.f32.mrf.mxu0
  %v1279 = vadd.f32 %v910, %v1278
  %v1280 = vpop.f32.mrf.mxu0
  %v1281 = vadd.f32 %v910, %v1280
  %1282 = vmatmul.bf16.gmra.mxu0 %v887
  %v1283 = vpop.f32.mrf.mxu0
  %v1284 = vadd.f32 %v910, %v1283
  %v1285 = vpop.f32.mrf.mxu0
  %v1286 = vadd.f32 %v910, %v1285
  %1287 = vdwg.mxu0
  %1288 = vmatpush.bf16.msra.mxu0 0
  %1289 = vmatpush.bf16.msra.mxu0 0
  %1290 = vmatpush.bf16.msra.mxu0 0
  %1291 = vmatpush.bf16.msra.mxu0 0
  %1292 = vmatpush.bf16.msra.mxu0 0
  %1293 = vmatpush.bf16.msra.mxu0 0
  %1294 = vmatpush.bf16.msra.mxu0 0
  %1295 = vmatpush.bf16.msra.mxu0 %v1049
  %1296 = vmatmul.bf16.gmra.mxu0 %v1003
  %v1297 = vpop.f32.mrf.mxu0
  %v1298 = vadd.f32 %v1219, %v1297
  %v1299 = vpop.f32.mrf.mxu0
  %v1300 = vadd.f32 %v1221, %v1299
  %1301 = vmatmul.bf16.gmra.mxu0 %v1006
  %v1302 = vpop.f32.mrf.mxu0
  %v1303 = vadd.f32 %v1224, %v1302
  %v1304 = vpop.f32.mrf.mxu0
  %v1305 = vadd.f32 %v1226, %v1304
  %1306 = vmatmul.bf16.gmra.mxu0 %v1009
  %v1307 = vpop.f32.mrf.mxu0
  %v1308 = vadd.f32 %v1229, %v1307
  %v1309 = vpop.f32.mrf.mxu0
  %v1310 = vadd.f32 %v1231, %v1309
  %1311 = vmatmul.bf16.gmra.mxu0 %v1012
  %v1312 = vpop.f32.mrf.mxu0
  %v1313 = vadd.f32 %v1234, %v1312
  %v1314 = vpop.f32.mrf.mxu0
  %v1315 = vadd.f32 %v1236, %v1314
  %1316 = vmatmul.bf16.gmra.mxu0 %v1015
  %v1317 = vpop.f32.mrf.mxu0
  %v1318 = vadd.f32 %v1239, %v1317
  %v1319 = vpop.f32.mrf.mxu0
  %v1320 = vadd.f32 %v1241, %v1319
  %1321 = vmatmul.bf16.gmra.mxu0 %v1018
  %v1322 = vpop.f32.mrf.mxu0
  %v1323 = vadd.f32 %v1244, %v1322
  %v1324 = vpop.f32.mrf.mxu0
  %v1325 = vadd.f32 %v1246, %v1324
  %1326 = vmatmul.bf16.gmra.mxu0 %v1021
  %v1327 = vpop.f32.mrf.mxu0
  %v1328 = vadd.f32 %v1249, %v1327
  %v1329 = vpop.f32.mrf.mxu0
  %v1330 = vadd.f32 %v1251, %v1329
  %1331 = vmatmul.bf16.gmra.mxu0 %v1024
  %v1332 = vpop.f32.mrf.mxu0
  %v1333 = vadd.f32 %v1254, %v1332
  %v1334 = vpop.f32.mrf.mxu0
  %v1335 = vadd.f32 %v1256, %v1334
  %1336 = vmatmul.bf16.gmra.mxu0 %v1027
  %v1337 = vpop.f32.mrf.mxu0
  %v1338 = vadd.f32 %v1259, %v1337
  %v1339 = vpop.f32.mrf.mxu0
  %v1340 = vadd.f32 %v1261, %v1339
  %1341 = vmatmul.bf16.gmra.mxu0 %v1030
  %v1342 = vpop.f32.mrf.mxu0
  %v1343 = vadd.f32 %v1264, %v1342
  %v1344 = vpop.f32.mrf.mxu0
  %v1345 = vadd.f32 %v1266, %v1344
  %1346 = vmatmul.bf16.gmra.mxu0 %v1033
  %v1347 = vpop.f32.mrf.mxu0
  %v1348 = vadd.f32 %v1269, %v1347
  %v1349 = vpop.f32.mrf.mxu0
  %v1350 = vadd.f32 %v1271, %v1349
  %1351 = vmatmul.bf16.gmra.mxu0 %v1036
  %v1352 = vpop.f32.mrf.mxu0
  %v1353 = vadd.f32 %v1274, %v1352
  %v1354 = vpop.f32.mrf.mxu0
  %v1355 = vadd.f32 %v1276, %v1354
  %1356 = vmatmul.bf16.gmra.mxu0 %v1039
  %v1357 = vpop.f32.mrf.mxu0
  %v1358 = vadd.f32 %v1279, %v1357
  %v1359 = vpop.f32.mrf.mxu0
  %v1360 = vadd.f32 %v1281, %v1359
  %1361 = vmatmul.bf16.gmra.mxu0 %v1042
  %v1362 = vpop.f32.mrf.mxu0
  %v1363 = vadd.f32 %v1284, %v1362
  %v1364 = vpop.f32.mrf.mxu0
  %v1365 = vadd.f32 %v1286, %v1364
  %1366 = vdwg.mxu0
  %v1367 = vmax.f32 %v1140, 0.0
  %v1368 = vmax.f32 %v1298, 0.0
  %v1369 = vmax.f32 %v1142, 0.0
  %v1370 = vmax.f32 %v1300, 0.0
  %v1371 = vmax.f32 %v1145, 0.0
  %v1372 = vmax.f32 %v1303, 0.0
  %v1373 = vmax.f32 %v1147, 0.0
  %v1374 = vmax.f32 %v1305, 0.0
  %v1375 = vmax.f32 %v1150, 0.0
  %v1376 = vmax.f32 %v1308, 0.0
  %v1377 = vmax.f32 %v1152, 0.0
  %v1378 = vmax.f32 %v1310, 0.0
  %v1379 = vmax.f32 %v1155, 0.0
  %v1380 = vmax.f32 %v1313, 0.0
  %v1381 = vmax.f32 %v1157, 0.0
  %v1382 = vmax.f32 %v1315, 0.0
  %v1383 = vmax.f32 %v1160, 0.0
  %v1384 = vmax.f32 %v1318, 0.0
  %v1385 = vmax.f32 %v1162, 0.0
  %v1386 = vmax.f32 %v1320, 0.0
  %v1387 = vmax.f32 %v1165, 0.0
  %v1388 = vmax.f32 %v1323, 0.0
  %v1389 = vmax.f32 %v1167, 0.0
  %v1390 = vmax.f32 %v1325, 0.0
  %v1391 = vmax.f32 %v1170, 0.0
  %v1392 = vmax.f32 %v1328, 0.0
  %v1393 = vmax.f32 %v1172, 0.0
  %v1394 = vmax.f32 %v1330, 0.0
  %v1395 = vmax.f32 %v1175, 0.0
  %v1396 = vmax.f32 %v1333, 0.0
  %v1397 = vmax.f32 %v1177, 0.0
  %v1398 = vmax.f32 %v1335, 0.0
  %v1399 = vmax.f32 %v1180, 0.0
  %v1400 = vmax.f32 %v1338, 0.0
  %v1401 = vmax.f32 %v1182, 0.0
  %v1402 = vmax.f32 %v1340, 0.0
  %v1403 = vmax.f32 %v1185, 0.0
  %v1404 = vmax.f32 %v1343, 0.0
  %v1405 = vmax.f32 %v1187, 0.0
  %v1406 = vmax.f32 %v1345, 0.0
  %v1407 = vmax.f32 %v1190, 0.0
  %v1408 = vmax.f32 %v1348, 0.0
  %v1409 = vmax.f32 %v1192, 0.0
  %v1410 = vmax.f32 %v1350, 0.0
  %v1411 = vmax.f32 %v1195, 0.0
  %v1412 = vmax.f32 %v1353, 0.0
  %v1413 = vmax.f32 %v1197, 0.0
  %v1414 = vmax.f32 %v1355, 0.0
  %v1415 = vmax.f32 %v1200, 0.0
  %v1416 = vmax.f32 %v1358, 0.0
  %v1417 = vmax.f32 %v1202, 0.0
  %v1418 = vmax.f32 %v1360, 0.0
  %v1419 = vmax.f32 %v1205, 0.0
  %v1420 = vmax.f32 %v1363, 0.0
  %v1421 = vmax.f32 %v1207, 0.0
  %v1422 = vmax.f32 %v1365, 0.0
  %v1423 = vrot.slane %v1367, 1
  %v1424 = vrot.slane %v1368, 1
  %v1425 = vrot.slane %v1369, 1
  %v1426 = vrot.slane %v1370, 1
  %v1427 = vrot.slane %v1371, 1
  %v1428 = vrot.slane %v1372, 1
  %v1429 = vrot.slane %v1373, 1
  %v1430 = vrot.slane %v1374, 1
  %v1431 = vrot.slane %v1375, 1
  %v1432 = vrot.slane %v1376, 1
  %v1433 = vrot.slane %v1377, 1
  %v1434 = vrot.slane %v1378, 1
  %v1435 = vrot.slane %v1379, 1
  %v1436 = vrot.slane %v1380, 1
  %v1437 = vrot.slane %v1381, 1
  %v1438 = vrot.slane %v1382, 1
  %v1439 = vrot.slane %v1383, 1
  %v1440 = vrot.slane %v1384, 1
  %v1441 = vrot.slane %v1385, 1
  %v1442 = vrot.slane %v1386, 1
  %v1443 = vrot.slane %v1387, 1
  %v1444 = vrot.slane %v1388, 1
  %v1445 = vrot.slane %v1389, 1
  %v1446 = vrot.slane %v1390, 1
  %v1447 = vrot.slane %v1391, 1
  %v1448 = vrot.slane %v1392, 1
  %v1449 = vrot.slane %v1393, 1
  %v1450 = vrot.slane %v1394, 1
  %v1451 = vrot.slane %v1395, 1
  %v1452 = vrot.slane %v1396, 1
  %v1453 = vrot.slane %v1397, 1
  %v1454 = vrot.slane %v1398, 1
  %v1455 = vrot.slane %v1399, 1
  %v1456 = vrot.slane %v1400, 1
  %v1457 = vrot.slane %v1401, 1
  %v1458 = vrot.slane %v1402, 1
  %v1459 = vrot.slane %v1403, 1
  %v1460 = vrot.slane %v1404, 1
  %v1461 = vrot.slane %v1405, 1
  %v1462 = vrot.slane %v1406, 1
  %v1463 = vrot.slane %v1407, 1
  %v1464 = vrot.slane %v1408, 1
  %v1465 = vrot.slane %v1409, 1
  %v1466 = vrot.slane %v1410, 1
  %v1467 = vrot.slane %v1411, 1
  %v1468 = vrot.slane %v1412, 1
  %v1469 = vrot.slane %v1413, 1
  %v1470 = vrot.slane %v1414, 1
  %v1471 = vrot.slane %v1415, 1
  %v1472 = vrot.slane %v1416, 1
  %v1473 = vrot.slane %v1417, 1
  %v1474 = vrot.slane %v1418, 1
  %v1475 = vrot.slane %v1419, 1
  %v1476 = vrot.slane %v1420, 1
  %v1477 = vrot.slane %v1421, 1
  %v1478 = vrot.slane %v1422, 1
  %v1479 = vsel %vm97, %v1475, %v1477
  %v1480 = vsel %vm97, %v1476, %v1478
  %v1481 = vsel %vm97, %v1473, %v1475
  %v1482 = vsel %vm97, %v1474, %v1476
  %v1483 = vsel %vm97, %v1471, %v1473
  %v1484 = vsel %vm97, %v1472, %v1474
  %v1485 = vsel %vm97, %v1469, %v1471
  %v1486 = vsel %vm97, %v1470, %v1472
  %v1487 = vsel %vm97, %v1467, %v1469
  %v1488 = vsel %vm97, %v1468, %v1470
  %v1489 = vsel %vm97, %v1465, %v1467
  %v1490 = vsel %vm97, %v1466, %v1468
  %v1491 = vsel %vm97, %v1463, %v1465
  %v1492 = vsel %vm97, %v1464, %v1466
  %v1493 = vsel %vm97, %v1461, %v1463
  %v1494 = vsel %vm97, %v1462, %v1464
  %v1495 = vsel %vm97, %v1459, %v1461
  %v1496 = vsel %vm97, %v1460, %v1462
  %v1497 = vsel %vm97, %v1457, %v1459
  %v1498 = vsel %vm97, %v1458, %v1460
  %v1499 = vsel %vm97, %v1455, %v1457
  %v1500 = vsel %vm97, %v1456, %v1458
  %v1501 = vsel %vm97, %v1453, %v1455
  %v1502 = vsel %vm97, %v1454, %v1456
  %v1503 = vsel %vm97, %v1451, %v1453
  %v1504 = vsel %vm97, %v1452, %v1454
  %v1505 = vsel %vm97, %v1449, %v1451
  %v1506 = vsel %vm97, %v1450, %v1452
  %v1507 = vsel %vm97, %v1447, %v1449
  %v1508 = vsel %vm97, %v1448, %v1450
  %v1509 = vsel %vm97, %v1445, %v1447
  %v1510 = vsel %vm97, %v1446, %v1448
  %v1511 = vsel %vm97, %v1443, %v1445
  %v1512 = vsel %vm97, %v1444, %v1446
  %v1513 = vsel %vm97, %v1441, %v1443
  %v1514 = vsel %vm97, %v1442, %v1444
  %v1515 = vsel %vm97, %v1439, %v1441
  %v1516 = vsel %vm97, %v1440, %v1442
  %v1517 = vsel %vm97, %v1437, %v1439
  %v1518 = vsel %vm97, %v1438, %v1440
  %v1519 = vsel %vm97, %v1435, %v1437
  %v1520 = vsel %vm97, %v1436, %v1438
  %v1521 = vsel %vm97, %v1433, %v1435
  %v1522 = vsel %vm97, %v1434, %v1436
  %v1523 = vsel %vm97, %v1431, %v1433
  %v1524 = vsel %vm97, %v1432, %v1434
  %v1525 = vsel %vm97, %v1429, %v1431
  %v1526 = vsel %vm97, %v1430, %v1432
  %v1527 = vsel %vm97, %v1427, %v1429
  %v1528 = vsel %vm97, %v1428, %v1430
  %v1529 = vsel %vm97, %v1425, %v1427
  %v1530 = vsel %vm97, %v1426, %v1428
  %v1531 = vsel %vm97, %v1423, %v1425
  %v1532 = vsel %vm97, %v1424, %v1426
  %v1533 = vsel %vm97, %v1477, %v1423
  %v1534 = vsel %vm97, %v1478, %v1424
  %v1535 = vmax.f32 %v1367, %v1531
  %v1536 = vmax.f32 %v1368, %v1532
  %v1537 = vmax.f32 %v1369, %v1529
  %v1538 = vmax.f32 %v1370, %v1530
  %v1539 = vmax.f32 %v1371, %v1527
  %v1540 = vmax.f32 %v1372, %v1528
  %v1541 = vmax.f32 %v1373, %v1525
  %v1542 = vmax.f32 %v1374, %v1526
  %v1543 = vmax.f32 %v1375, %v1523
  %v1544 = vmax.f32 %v1376, %v1524
  %v1545 = vmax.f32 %v1377, %v1521
  %v1546 = vmax.f32 %v1378, %v1522
  %v1547 = vmax.f32 %v1379, %v1519
  %v1548 = vmax.f32 %v1380, %v1520
  %v1549 = vmax.f32 %v1381, %v1517
  %v1550 = vmax.f32 %v1382, %v1518
  %v1551 = vmax.f32 %v1383, %v1515
  %v1552 = vmax.f32 %v1384, %v1516
  %v1553 = vmax.f32 %v1385, %v1513
  %v1554 = vmax.f32 %v1386, %v1514
  %v1555 = vmax.f32 %v1387, %v1511
  %v1556 = vmax.f32 %v1388, %v1512
  %v1557 = vmax.f32 %v1389, %v1509
  %v1558 = vmax.f32 %v1390, %v1510
  %v1559 = vmax.f32 %v1391, %v1507
  %v1560 = vmax.f32 %v1392, %v1508
  %v1561 = vmax.f32 %v1393, %v1505
  %v1562 = vmax.f32 %v1394, %v1506
  %v1563 = vmax.f32 %v1395, %v1503
  %v1564 = vmax.f32 %v1396, %v1504
  %v1565 = vmax.f32 %v1397, %v1501
  %v1566 = vmax.f32 %v1398, %v1502
  %v1567 = vmax.f32 %v1399, %v1499
  %v1568 = vmax.f32 %v1400, %v1500
  %v1569 = vmax.f32 %v1401, %v1497
  %v1570 = vmax.f32 %v1402, %v1498
  %v1571 = vmax.f32 %v1403, %v1495
  %v1572 = vmax.f32 %v1404, %v1496
  %v1573 = vmax.f32 %v1405, %v1493
  %v1574 = vmax.f32 %v1406, %v1494
  %v1575 = vmax.f32 %v1407, %v1491
  %v1576 = vmax.f32 %v1408, %v1492
  %v1577 = vmax.f32 %v1409, %v1489
  %v1578 = vmax.f32 %v1410, %v1490
  %v1579 = vmax.f32 %v1411, %v1487
  %v1580 = vmax.f32 %v1412, %v1488
  %v1581 = vmax.f32 %v1413, %v1485
  %v1582 = vmax.f32 %v1414, %v1486
  %v1583 = vmax.f32 %v1415, %v1483
  %v1584 = vmax.f32 %v1416, %v1484
  %v1585 = vmax.f32 %v1417, %v1481
  %v1586 = vmax.f32 %v1418, %v1482
  %v1587 = vmax.f32 %v1419, %v1479
  %v1588 = vmax.f32 %v1420, %v1480
  %v1589 = vmax.f32 %v1421, %v1533
  %v1590 = vmax.f32 %v1422, %v1534
  %1647 = vrot.lane.b32.xlu0 %v1535, 56
  %v1648 = vpop.permute.xlu0 %1647
  %1649 = vrot.lane.b32.xlu0 %v1536, 56
  %v1650 = vpop.permute.xlu0 %1649
  %1651 = vrot.lane.b32.xlu0 %v1537, 56
  %v1652 = vpop.permute.xlu0 %1651
  %1653 = vrot.lane.b32.xlu0 %v1538, 56
  %v1654 = vpop.permute.xlu0 %1653
  %1655 = vrot.lane.b32.xlu0 %v1539, 56
  %v1656 = vpop.permute.xlu0 %1655
  %1657 = vrot.lane.b32.xlu0 %v1540, 56
  %v1658 = vpop.permute.xlu0 %1657
  %1659 = vrot.lane.b32.xlu0 %v1541, 56
  %v1660 = vpop.permute.xlu0 %1659
  %1661 = vrot.lane.b32.xlu0 %v1542, 56
  %v1662 = vpop.permute.xlu0 %1661
  %1663 = vrot.lane.b32.xlu0 %v1543, 56
  %v1664 = vpop.permute.xlu0 %1663
  %1665 = vrot.lane.b32.xlu0 %v1544, 56
  %v1666 = vpop.permute.xlu0 %1665
  %1667 = vrot.lane.b32.xlu0 %v1545, 56
  %v1668 = vpop.permute.xlu0 %1667
  %1669 = vrot.lane.b32.xlu0 %v1546, 56
  %v1670 = vpop.permute.xlu0 %1669
  %1671 = vrot.lane.b32.xlu0 %v1547, 56
  %v1672 = vpop.permute.xlu0 %1671
  %1673 = vrot.lane.b32.xlu0 %v1548, 56
  %v1674 = vpop.permute.xlu0 %1673
  %1675 = vrot.lane.b32.xlu0 %v1549, 56
  %v1676 = vpop.permute.xlu0 %1675
  %1677 = vrot.lane.b32.xlu0 %v1550, 56
  %v1678 = vpop.permute.xlu0 %1677
  %1679 = vrot.lane.b32.xlu0 %v1551, 56
  %v1680 = vpop.permute.xlu0 %1679
  %1681 = vrot.lane.b32.xlu0 %v1552, 56
  %v1682 = vpop.permute.xlu0 %1681
  %1683 = vrot.lane.b32.xlu0 %v1553, 56
  %v1684 = vpop.permute.xlu0 %1683
  %1685 = vrot.lane.b32.xlu0 %v1554, 56
  %v1686 = vpop.permute.xlu0 %1685
  %1687 = vrot.lane.b32.xlu0 %v1555, 56
  %v1688 = vpop.permute.xlu0 %1687
  %1689 = vrot.lane.b32.xlu0 %v1556, 56
  %v1690 = vpop.permute.xlu0 %1689
  %1691 = vrot.lane.b32.xlu0 %v1557, 56
  %v1692 = vpop.permute.xlu0 %1691
  %1693 = vrot.lane.b32.xlu0 %v1558, 56
  %v1694 = vpop.permute.xlu0 %1693
  %1695 = vrot.lane.b32.xlu0 %v1559, 56
  %v1696 = vpop.permute.xlu0 %1695
  %1697 = vrot.lane.b32.xlu0 %v1560, 56
  %v1698 = vpop.permute.xlu0 %1697
  %1699 = vrot.lane.b32.xlu0 %v1561, 56
  %v1700 = vpop.permute.xlu0 %1699
  %1701 = vrot.lane.b32.xlu0 %v1562, 56
  %v1702 = vpop.permute.xlu0 %1701
  %1703 = vrot.lane.b32.xlu0 %v1563, 56
  %v1704 = vpop.permute.xlu0 %1703
  %1705 = vrot.lane.b32.xlu0 %v1564, 56
  %v1706 = vpop.permute.xlu0 %1705
  %1707 = vrot.lane.b32.xlu0 %v1565, 56
  %v1708 = vpop.permute.xlu0 %1707
  %1709 = vrot.lane.b32.xlu0 %v1566, 56
  %v1710 = vpop.permute.xlu0 %1709
  %1711 = vrot.lane.b32.xlu0 %v1567, 56
  %v1712 = vpop.permute.xlu0 %1711
  %1713 = vrot.lane.b32.xlu0 %v1568, 56
  %v1714 = vpop.permute.xlu0 %1713
  %1715 = vrot.lane.b32.xlu0 %v1569, 56
  %v1716 = vpop.permute.xlu0 %1715
  %1717 = vrot.lane.b32.xlu0 %v1570, 56
  %v1718 = vpop.permute.xlu0 %1717
  %1719 = vrot.lane.b32.xlu0 %v1571, 56
  %v1720 = vpop.permute.xlu0 %1719
  %1721 = vrot.lane.b32.xlu0 %v1572, 56
  %v1722 = vpop.permute.xlu0 %1721
  %1723 = vrot.lane.b32.xlu0 %v1573, 56
  %v1724 = vpop.permute.xlu0 %1723
  %1725 = vrot.lane.b32.xlu0 %v1574, 56
  %v1726 = vpop.permute.xlu0 %1725
  %1727 = vrot.lane.b32.xlu0 %v1575, 56
  %v1728 = vpop.permute.xlu0 %1727
  %1729 = vrot.lane.b32.xlu0 %v1576, 56
  %v1730 = vpop.permute.xlu0 %1729
  %1731 = vrot.lane.b32.xlu0 %v1577, 56
  %v1732 = vpop.permute.xlu0 %1731
  %1733 = vrot.lane.b32.xlu0 %v1578, 56
  %v1734 = vpop.permute.xlu0 %1733
  %1735 = vrot.lane.b32.xlu0 %v1579, 56
  %v1736 = vpop.permute.xlu0 %1735
  %1737 = vrot.lane.b32.xlu0 %v1580, 56
  %v1738 = vpop.permute.xlu0 %1737
  %1739 = vrot.lane.b32.xlu0 %v1581, 56
  %v1740 = vpop.permute.xlu0 %1739
  %1741 = vrot.lane.b32.xlu0 %v1582, 56
  %v1742 = vpop.permute.xlu0 %1741
  %1743 = vrot.lane.b32.xlu0 %v1583, 56
  %v1744 = vpop.permute.xlu0 %1743
  %1745 = vrot.lane.b32.xlu0 %v1584, 56
  %v1746 = vpop.permute.xlu0 %1745
  %1747 = vrot.lane.b32.xlu0 %v1585, 56
  %v1748 = vpop.permute.xlu0 %1747
  %1749 = vrot.lane.b32.xlu0 %v1586, 56
  %v1750 = vpop.permute.xlu0 %1749
  %1751 = vrot.lane.b32.xlu0 %v1587, 56
  %v1752 = vpop.permute.xlu0 %1751
  %1753 = vrot.lane.b32.xlu0 %v1588, 56
  %v1754 = vpop.permute.xlu0 %1753
  %1755 = vrot.lane.b32.xlu0 %v1589, 56
  %v1756 = vpop.permute.xlu0 %1755
  %1757 = vrot.lane.b32.xlu0 %v1590, 56
  %v1758 = vpop.permute.xlu0 %1757
  %v1759 = vsel %vm774, %v1648, %v1650
  %v1760 = vsel %vm774, %v1652, %v1654
  %v1761 = vsel %vm774, %v1656, %v1658
  %v1762 = vsel %vm774, %v1660, %v1662
  %v1763 = vsel %vm774, %v1664, %v1666
  %v1764 = vsel %vm774, %v1668, %v1670
  %v1765 = vsel %vm774, %v1672, %v1674
  %v1766 = vsel %vm774, %v1676, %v1678
  %v1767 = vsel %vm774, %v1680, %v1682
  %v1768 = vsel %vm774, %v1684, %v1686
  %v1769 = vsel %vm774, %v1688, %v1690
  %v1770 = vsel %vm774, %v1692, %v1694
  %v1771 = vsel %vm774, %v1696, %v1698
  %v1772 = vsel %vm774, %v1700, %v1702
  %v1773 = vsel %vm774, %v1704, %v1706
  %v1774 = vsel %vm774, %v1708, %v1710
  %v1775 = vsel %vm774, %v1712, %v1714
  %v1776 = vsel %vm774, %v1716, %v1718
  %v1777 = vsel %vm774, %v1720, %v1722
  %v1778 = vsel %vm774, %v1724, %v1726
  %v1779 = vsel %vm774, %v1728, %v1730
  %v1780 = vsel %vm774, %v1732, %v1734
  %v1781 = vsel %vm774, %v1736, %v1738
  %v1782 = vsel %vm774, %v1740, %v1742
  %v1783 = vsel %vm774, %v1744, %v1746
  %v1784 = vsel %vm774, %v1748, %v1750
  %v1785 = vsel %vm774, %v1752, %v1754
  %v1786 = vsel %vm774, %v1756, %v1758
  %v1815 = vmax.f32 %v1535, %v1759
  %v1816 = vmax.f32 %v1537, %v1760
  %v1817 = vmax.f32 %v1539, %v1761
  %v1818 = vmax.f32 %v1541, %v1762
  %v1819 = vmax.f32 %v1543, %v1763
  %v1820 = vmax.f32 %v1545, %v1764
  %v1821 = vmax.f32 %v1547, %v1765
  %v1822 = vmax.f32 %v1549, %v1766
  %v1823 = vmax.f32 %v1551, %v1767
  %v1824 = vmax.f32 %v1553, %v1768
  %v1825 = vmax.f32 %v1555, %v1769
  %v1826 = vmax.f32 %v1557, %v1770
  %v1827 = vmax.f32 %v1559, %v1771
  %v1828 = vmax.f32 %v1561, %v1772
  %v1829 = vmax.f32 %v1563, %v1773
  %v1830 = vmax.f32 %v1565, %v1774
  %v1831 = vmax.f32 %v1567, %v1775
  %v1832 = vmax.f32 %v1569, %v1776
  %v1833 = vmax.f32 %v1571, %v1777
  %v1834 = vmax.f32 %v1573, %v1778
  %v1835 = vmax.f32 %v1575, %v1779
  %v1836 = vmax.f32 %v1577, %v1780
  %v1837 = vmax.f32 %v1579, %v1781
  %v1838 = vmax.f32 %v1581, %v1782
  %v1839 = vmax.f32 %v1583, %v1783
  %v1840 = vmax.f32 %v1585, %v1784
  %v1841 = vmax.f32 %v1587, %v1785
  %v1842 = vmax.f32 %v1589, %v1786
  %v1843 = vpack.c.bf16 %v1816, %v1815
  %v1844 = vpack.c.bf16 %v1818, %v1817
  %v1845 = vpack.c.bf16 %v1820, %v1819
  %v1846 = vpack.c.bf16 %v1822, %v1821
  %v1847 = vpack.c.bf16 %v1824, %v1823
  %v1848 = vpack.c.bf16 %v1826, %v1825
  %v1849 = vpack.c.bf16 %v1828, %v1827
  %v1850 = vpack.c.bf16 %v1830, %v1829
  %v1851 = vpack.c.bf16 %v1832, %v1831
  %v1852 = vpack.c.bf16 %v1834, %v1833
  %v1853 = vpack.c.bf16 %v1836, %v1835
  %v1854 = vpack.c.bf16 %v1838, %v1837
  %v1855 = vpack.c.bf16 %v1840, %v1839
  %v1856 = vpack.c.bf16 %v1842, %v1841
  %v1857 = vld [vmem:[%s3] sm:$0xf]
  %v1858 = vld [vmem:[%s3 + $0x4] sm:$0xf]
  %v1859 = vld [vmem:[%s3 + $0x8] sm:$0xf]
  %v1860 = vld [vmem:[%s3 + $0xc] sm:$0xf]
  %v1861 = vld [vmem:[%s3 + $0x10] sm:$0xf]
  %v1862 = vld [vmem:[%s3 + $0x14] sm:$0xf]
  %v1863 = vld [vmem:[%s3 + $0x18] sm:$0xf]
  %v1864 = vld [vmem:[%s3 + $0x1c] sm:$0xf]
  %v1865 = vld [vmem:[%s3 + $0x20] sm:$0xf]
  %s1866 = scalar_lea.vmem %s3, 36
  %v1867 = vld [vmem:[%s1866] sm:$0xf]
  %v1868 = vld [vmem:[%s1866 + $0x4] sm:$0xf]
  %v1869 = vld [vmem:[%s1866 + $0x8] sm:$0xf]
  %v1870 = vld [vmem:[%s1866 + $0xc] sm:$0xf]
  %v1871 = vld [vmem:[%s1866 + $0x10] sm:$0xf]
  %v1872 = vld [vmem:[%s1866 + $0x14] sm:$0xf]
  %v1873 = vld [vmem:[%s1866 + $0x18] sm:$0xf]
  %v1874 = vld [vmem:[%s1866 + $0x1c] sm:$0xf]
  %v1875 = vld [vmem:[%s1866 + $0x20] sm:$0xf]
  %v1885 = vunpack.c.l.b16 %v1867
  %v1886 = vunpack.c.l.b16 %v1868
  %v1887 = vunpack.c.l.b16 %v1869
  %v1888 = vunpack.c.l.b16 %v1870
  %v1889 = vunpack.c.l.b16 %v1871
  %v1890 = vunpack.c.l.b16 %v1872
  %v1891 = vunpack.c.l.b16 %v1873
  %v1892 = vunpack.c.l.b16 %v1874
  %v1893 = vunpack.c.l.b16 %v1875
  %v1894 = vpack.c.b16 %v1886, %v1885
  %v1895 = vpack.c.b16 %v1888, %v1887
  %v1896 = vpack.c.b16 %v1890, %v1889
  %v1897 = vpack.c.b16 %v1892, %v1891
  %v1898 = vpack.c.b16 %v1893, %v1893
  %vm1903 = vcmask 588800
  %v1905 = vsel %vm1903, %v1843, 0
  %v1908 = vsel %vm1903, %v1844, 0
  %v1911 = vsel %vm1903, %v1845, 0
  %v1914 = vsel %vm1903, %v1846, 0
  %v1917 = vsel %vm1903, %v1847, 0
  %v1920 = vsel %vm1903, %v1848, 0
  %v1923 = vsel %vm1903, %v1849, 0
  %v1926 = vsel %vm1903, %v1850, 0
  %v1929 = vsel %vm1903, %v1851, 0
  %v1932 = vsel %vm1903, %v1852, 0
  %v1935 = vsel %vm1903, %v1853, 0
  %v1938 = vsel %vm1903, %v1854, 0
  %v1941 = vsel %vm1903, %v1855, 0
  %v1944 = vsel %vm1903, %v1856, 0
  %vm1946 = vcmask 1043456
  %v1948 = vsel %vm1946, %v1898, 0
  %1950 = vmatpush.bf16.msra.mxu0 0
  %1951 = vmatpush.bf16.msra.mxu0 0
  %1952 = vmatpush.bf16.msra.mxu0 0
  %1953 = vmatpush.bf16.msra.mxu0 %v1948
  %1954 = vmatpush.bf16.msra.mxu0 %v1897
  %1955 = vmatpush.bf16.msra.mxu0 %v1896
  %1956 = vmatpush.bf16.msra.mxu0 %v1895
  %1957 = vmatpush.bf16.msra.mxu0 %v1894
  %1958 = vmatmul.bf16.gmra.mxu0 %v1905
  %v1959 = vpop.f32.mrf.mxu0
  %v1960 = vadd.f32 0.0, %v1959
  %v1961 = vpop.f32.mrf.mxu0
  %v1962 = vadd.f32 0.0, %v1961
  %1963 = vmatmul.bf16.gmra.mxu0 %v1908
  %v1964 = vpop.f32.mrf.mxu0
  %v1965 = vadd.f32 0.0, %v1964
  %v1966 = vpop.f32.mrf.mxu0
  %v1967 = vadd.f32 0.0, %v1966
  %1968 = vmatmul.bf16.gmra.mxu0 %v1911
  %v1969 = vpop.f32.mrf.mxu0
  %v1970 = vadd.f32 0.0, %v1969
  %v1971 = vpop.f32.mrf.mxu0
  %v1972 = vadd.f32 0.0, %v1971
  %1973 = vmatmul.bf16.gmra.mxu0 %v1914
  %v1974 = vpop.f32.mrf.mxu0
  %v1975 = vadd.f32 0.0, %v1974
  %v1976 = vpop.f32.mrf.mxu0
  %v1977 = vadd.f32 0.0, %v1976
  %1978 = vmatmul.bf16.gmra.mxu0 %v1917
  %v1979 = vpop.f32.mrf.mxu0
  %v1980 = vadd.f32 0.0, %v1979
  %v1981 = vpop.f32.mrf.mxu0
  %v1982 = vadd.f32 0.0, %v1981
  %1983 = vmatmul.bf16.gmra.mxu0 %v1920
  %v1984 = vpop.f32.mrf.mxu0
  %v1985 = vadd.f32 0.0, %v1984
  %v1986 = vpop.f32.mrf.mxu0
  %v1987 = vadd.f32 0.0, %v1986
  %1988 = vmatmul.bf16.gmra.mxu0 %v1923
  %v1989 = vpop.f32.mrf.mxu0
  %v1990 = vadd.f32 0.0, %v1989
  %v1991 = vpop.f32.mrf.mxu0
  %v1992 = vadd.f32 0.0, %v1991
  %1993 = vmatmul.bf16.gmra.mxu0 %v1926
  %v1994 = vpop.f32.mrf.mxu0
  %v1995 = vadd.f32 0.0, %v1994
  %v1996 = vpop.f32.mrf.mxu0
  %v1997 = vadd.f32 0.0, %v1996
  %1998 = vmatmul.bf16.gmra.mxu0 %v1929
  %v1999 = vpop.f32.mrf.mxu0
  %v2000 = vadd.f32 0.0, %v1999
  %v2001 = vpop.f32.mrf.mxu0
  %v2002 = vadd.f32 0.0, %v2001
  %2003 = vmatmul.bf16.gmra.mxu0 %v1932
  %v2004 = vpop.f32.mrf.mxu0
  %v2005 = vadd.f32 0.0, %v2004
  %v2006 = vpop.f32.mrf.mxu0
  %v2007 = vadd.f32 0.0, %v2006
  %2008 = vmatmul.bf16.gmra.mxu0 %v1935
  %v2009 = vpop.f32.mrf.mxu0
  %v2010 = vadd.f32 0.0, %v2009
  %v2011 = vpop.f32.mrf.mxu0
  %v2012 = vadd.f32 0.0, %v2011
  %2013 = vmatmul.bf16.gmra.mxu0 %v1938
  %v2014 = vpop.f32.mrf.mxu0
  %v2015 = vadd.f32 0.0, %v2014
  %v2016 = vpop.f32.mrf.mxu0
  %v2017 = vadd.f32 0.0, %v2016
  %2018 = vmatmul.bf16.gmra.mxu0 %v1941
  %v2019 = vpop.f32.mrf.mxu0
  %v2020 = vadd.f32 0.0, %v2019
  %v2021 = vpop.f32.mrf.mxu0
  %v2022 = vadd.f32 0.0, %v2021
  %2023 = vmatmul.bf16.gmra.mxu0 %v1944
  %v2024 = vpop.f32.mrf.mxu0
  %v2025 = vadd.f32 0.0, %v2024
  %v2026 = vpop.f32.mrf.mxu0
  %v2027 = vadd.f32 0.0, %v2026
  %2028 = vdwg.mxu0
  %v2029 = vrot.slane %v1960, 2
  %v2030 = vrot.slane %v1962, 2
  %v2031 = vrot.slane %v1965, 2
  %v2032 = vrot.slane %v1967, 2
  %v2033 = vrot.slane %v1970, 2
  %v2034 = vrot.slane %v1972, 2
  %v2035 = vrot.slane %v1975, 2
  %v2036 = vrot.slane %v1977, 2
  %v2037 = vrot.slane %v1980, 2
  %v2038 = vrot.slane %v1982, 2
  %v2039 = vrot.slane %v1985, 2
  %v2040 = vrot.slane %v1987, 2
  %v2041 = vrot.slane %v1990, 2
  %v2042 = vrot.slane %v1992, 2
  %v2043 = vrot.slane %v1995, 2
  %v2044 = vrot.slane %v1997, 2
  %v2045 = vrot.slane %v2000, 2
  %v2046 = vrot.slane %v2002, 2
  %v2047 = vrot.slane %v2005, 2
  %v2048 = vrot.slane %v2007, 2
  %v2049 = vrot.slane %v2010, 2
  %v2050 = vrot.slane %v2012, 2
  %v2051 = vrot.slane %v2015, 2
  %v2052 = vrot.slane %v2017, 2
  %v2053 = vrot.slane %v2020, 2
  %v2054 = vrot.slane %v2022, 2
  %v2055 = vrot.slane %v2025, 2
  %v2056 = vrot.slane %v2027, 2
  %v2057 = vsel %vm154, %v2055, %v2056
  %v2058 = vsel %vm154, %v2054, %v2055
  %v2059 = vsel %vm154, %v2053, %v2054
  %v2060 = vsel %vm154, %v2052, %v2053
  %v2061 = vsel %vm154, %v2051, %v2052
  %v2062 = vsel %vm154, %v2050, %v2051
  %v2063 = vsel %vm154, %v2049, %v2050
  %v2064 = vsel %vm154, %v2048, %v2049
  %v2065 = vsel %vm154, %v2047, %v2048
  %v2066 = vsel %vm154, %v2046, %v2047
  %v2067 = vsel %vm154, %v2045, %v2046
  %v2068 = vsel %vm154, %v2044, %v2045
  %v2069 = vsel %vm154, %v2043, %v2044
  %v2070 = vsel %vm154, %v2042, %v2043
  %v2071 = vsel %vm154, %v2041, %v2042
  %v2072 = vsel %vm154, %v2040, %v2041
  %v2073 = vsel %vm154, %v2039, %v2040
  %v2074 = vsel %vm154, %v2038, %v2039
  %v2075 = vsel %vm154, %v2037, %v2038
  %v2076 = vsel %vm154, %v2036, %v2037
  %v2077 = vsel %vm154, %v2035, %v2036
  %v2078 = vsel %vm154, %v2034, %v2035
  %v2079 = vsel %vm154, %v2033, %v2034
  %v2080 = vsel %vm154, %v2032, %v2033
  %v2081 = vsel %vm154, %v2031, %v2032
  %v2082 = vsel %vm154, %v2030, %v2031
  %v2083 = vsel %vm154, %v2029, %v2030
  %v2084 = vsel %vm154, %v2056, %v2029
  %v2094 = vunpack.c.l.b16 %v1857
  %v2095 = vunpack.c.l.b16 %v1858
  %v2096 = vunpack.c.l.b16 %v1859
  %v2097 = vunpack.c.l.b16 %v1860
  %v2098 = vunpack.c.l.b16 %v1861
  %v2099 = vunpack.c.l.b16 %v1862
  %v2100 = vunpack.c.l.b16 %v1863
  %v2101 = vunpack.c.l.b16 %v1864
  %v2102 = vunpack.c.l.b16 %v1865
  %v2103 = vpack.c.b16 %v2095, %v2094
  %v2104 = vpack.c.b16 %v2097, %v2096
  %v2105 = vpack.c.b16 %v2099, %v2098
  %v2106 = vpack.c.b16 %v2101, %v2100
  %v2107 = vpack.c.b16 %v2102, %v2102
  %v2113 = vsel %vm1946, %v2107, 0
  %2115 = vmatpush.bf16.msra.mxu0 0
  %2116 = vmatpush.bf16.msra.mxu0 0
  %2117 = vmatpush.bf16.msra.mxu0 0
  %2118 = vmatpush.bf16.msra.mxu0 %v2113
  %2119 = vmatpush.bf16.msra.mxu0 %v2106
  %2120 = vmatpush.bf16.msra.mxu0 %v2105
  %2121 = vmatpush.bf16.msra.mxu0 %v2104
  %2122 = vmatpush.bf16.msra.mxu0 %v2103
  %2123 = vmatmul.bf16.gmra.mxu0 %v1905
  %v2124 = vpop.f32.mrf.mxu0
  %v2125 = vadd.f32 %v2083, %v2124
  %v2126 = vpop.f32.mrf.mxu0
  %v2127 = vadd.f32 %v2082, %v2126
  %2128 = vmatmul.bf16.gmra.mxu0 %v1908
  %v2129 = vpop.f32.mrf.mxu0
  %v2130 = vadd.f32 %v2081, %v2129
  %v2131 = vpop.f32.mrf.mxu0
  %v2132 = vadd.f32 %v2080, %v2131
  %2133 = vmatmul.bf16.gmra.mxu0 %v1911
  %v2134 = vpop.f32.mrf.mxu0
  %v2135 = vadd.f32 %v2079, %v2134
  %v2136 = vpop.f32.mrf.mxu0
  %v2137 = vadd.f32 %v2078, %v2136
  %2138 = vmatmul.bf16.gmra.mxu0 %v1914
  %v2139 = vpop.f32.mrf.mxu0
  %v2140 = vadd.f32 %v2077, %v2139
  %v2141 = vpop.f32.mrf.mxu0
  %v2142 = vadd.f32 %v2076, %v2141
  %2143 = vmatmul.bf16.gmra.mxu0 %v1917
  %v2144 = vpop.f32.mrf.mxu0
  %v2145 = vadd.f32 %v2075, %v2144
  %v2146 = vpop.f32.mrf.mxu0
  %v2147 = vadd.f32 %v2074, %v2146
  %2148 = vmatmul.bf16.gmra.mxu0 %v1920
  %v2149 = vpop.f32.mrf.mxu0
  %v2150 = vadd.f32 %v2073, %v2149
  %v2151 = vpop.f32.mrf.mxu0
  %v2152 = vadd.f32 %v2072, %v2151
  %2153 = vmatmul.bf16.gmra.mxu0 %v1923
  %v2154 = vpop.f32.mrf.mxu0
  %v2155 = vadd.f32 %v2071, %v2154
  %v2156 = vpop.f32.mrf.mxu0
  %v2157 = vadd.f32 %v2070, %v2156
  %2158 = vmatmul.bf16.gmra.mxu0 %v1926
  %v2159 = vpop.f32.mrf.mxu0
  %v2160 = vadd.f32 %v2069, %v2159
  %v2161 = vpop.f32.mrf.mxu0
  %v2162 = vadd.f32 %v2068, %v2161
  %2163 = vmatmul.bf16.gmra.mxu0 %v1929
  %v2164 = vpop.f32.mrf.mxu0
  %v2165 = vadd.f32 %v2067, %v2164
  %v2166 = vpop.f32.mrf.mxu0
  %v2167 = vadd.f32 %v2066, %v2166
  %2168 = vmatmul.bf16.gmra.mxu0 %v1932
  %v2169 = vpop.f32.mrf.mxu0
  %v2170 = vadd.f32 %v2065, %v2169
  %v2171 = vpop.f32.mrf.mxu0
  %v2172 = vadd.f32 %v2064, %v2171
  %2173 = vmatmul.bf16.gmra.mxu0 %v1935
  %v2174 = vpop.f32.mrf.mxu0
  %v2175 = vadd.f32 %v2063, %v2174
  %v2176 = vpop.f32.mrf.mxu0
  %v2177 = vadd.f32 %v2062, %v2176
  %2178 = vmatmul.bf16.gmra.mxu0 %v1938
  %v2179 = vpop.f32.mrf.mxu0
  %v2180 = vadd.f32 %v2061, %v2179
  %v2181 = vpop.f32.mrf.mxu0
  %v2182 = vadd.f32 %v2060, %v2181
  %2183 = vmatmul.bf16.gmra.mxu0 %v1941
  %v2184 = vpop.f32.mrf.mxu0
  %v2185 = vadd.f32 %v2059, %v2184
  %v2186 = vpop.f32.mrf.mxu0
  %v2187 = vadd.f32 %v2058, %v2186
  %2188 = vmatmul.bf16.gmra.mxu0 %v1944
  %v2189 = vpop.f32.mrf.mxu0
  %v2190 = vadd.f32 %v2057, %v2189
  %v2191 = vpop.f32.mrf.mxu0
  %v2192 = vadd.f32 %v2084, %v2191
  %2193 = vdwg.mxu0
  %s2194 = scalar_lea.vmem %s3, 72
  %v2195 = vld [vmem:[%s2194] sm:$0xf]
  %v2196 = vld [vmem:[%s2194 + $0x4] sm:$0xf]
  %v2197 = vld [vmem:[%s2194 + $0x8] sm:$0xf]
  %v2198 = vld [vmem:[%s2194 + $0xc] sm:$0xf]
  %v2199 = vld [vmem:[%s2194 + $0x10] sm:$0xf]
  %v2200 = vld [vmem:[%s2194 + $0x14] sm:$0xf]
  %v2201 = vld [vmem:[%s2194 + $0x18] sm:$0xf]
  %v2202 = vld [vmem:[%s2194 + $0x1c] sm:$0xf]
  %v2203 = vld [vmem:[%s2194 + $0x20] sm:$0xf]
  %v2213 = vunpack.c.l.b16 %v2195
  %v2214 = vunpack.c.l.b16 %v2196
  %v2215 = vunpack.c.l.b16 %v2197
  %v2216 = vunpack.c.l.b16 %v2198
  %v2217 = vunpack.c.l.b16 %v2199
  %v2218 = vunpack.c.l.b16 %v2200
  %v2219 = vunpack.c.l.b16 %v2201
  %v2220 = vunpack.c.l.b16 %v2202
  %v2221 = vunpack.c.l.b16 %v2203
  %v2222 = vpack.c.b16 %v2214, %v2213
  %v2223 = vpack.c.b16 %v2216, %v2215
  %v2224 = vpack.c.b16 %v2218, %v2217
  %v2225 = vpack.c.b16 %v2220, %v2219
  %v2226 = vpack.c.b16 %v2221, %v2221
  %v2232 = vsel %vm1946, %v2226, 0
  %2234 = vmatpush.bf16.msra.mxu0 0
  %2235 = vmatpush.bf16.msra.mxu0 0
  %2236 = vmatpush.bf16.msra.mxu0 0
  %2237 = vmatpush.bf16.msra.mxu0 %v2232
  %2238 = vmatpush.bf16.msra.mxu0 %v2225
  %2239 = vmatpush.bf16.msra.mxu0 %v2224
  %2240 = vmatpush.bf16.msra.mxu0 %v2223
  %2241 = vmatpush.bf16.msra.mxu0 %v2222
  %2242 = vmatmul.bf16.gmra.mxu0 %v1905
  %v2243 = vpop.f32.mrf.mxu0
  %v2244 = vadd.f32 0.0, %v2243
  %v2245 = vpop.f32.mrf.mxu0
  %v2246 = vadd.f32 0.0, %v2245
  %2247 = vmatmul.bf16.gmra.mxu0 %v1908
  %v2248 = vpop.f32.mrf.mxu0
  %v2249 = vadd.f32 0.0, %v2248
  %v2250 = vpop.f32.mrf.mxu0
  %v2251 = vadd.f32 0.0, %v2250
  %2252 = vmatmul.bf16.gmra.mxu0 %v1911
  %v2253 = vpop.f32.mrf.mxu0
  %v2254 = vadd.f32 0.0, %v2253
  %v2255 = vpop.f32.mrf.mxu0
  %v2256 = vadd.f32 0.0, %v2255
  %2257 = vmatmul.bf16.gmra.mxu0 %v1914
  %v2258 = vpop.f32.mrf.mxu0
  %v2259 = vadd.f32 0.0, %v2258
  %v2260 = vpop.f32.mrf.mxu0
  %v2261 = vadd.f32 0.0, %v2260
  %2262 = vmatmul.bf16.gmra.mxu0 %v1917
  %v2263 = vpop.f32.mrf.mxu0
  %v2264 = vadd.f32 0.0, %v2263
  %v2265 = vpop.f32.mrf.mxu0
  %v2266 = vadd.f32 0.0, %v2265
  %2267 = vmatmul.bf16.gmra.mxu0 %v1920
  %v2268 = vpop.f32.mrf.mxu0
  %v2269 = vadd.f32 0.0, %v2268
  %v2270 = vpop.f32.mrf.mxu0
  %v2271 = vadd.f32 0.0, %v2270
  %2272 = vmatmul.bf16.gmra.mxu0 %v1923
  %v2273 = vpop.f32.mrf.mxu0
  %v2274 = vadd.f32 0.0, %v2273
  %v2275 = vpop.f32.mrf.mxu0
  %v2276 = vadd.f32 0.0, %v2275
  %2277 = vmatmul.bf16.gmra.mxu0 %v1926
  %v2278 = vpop.f32.mrf.mxu0
  %v2279 = vadd.f32 0.0, %v2278
  %v2280 = vpop.f32.mrf.mxu0
  %v2281 = vadd.f32 0.0, %v2280
  %2282 = vmatmul.bf16.gmra.mxu0 %v1929
  %v2283 = vpop.f32.mrf.mxu0
  %v2284 = vadd.f32 0.0, %v2283
  %v2285 = vpop.f32.mrf.mxu0
  %v2286 = vadd.f32 0.0, %v2285
  %2287 = vmatmul.bf16.gmra.mxu0 %v1932
  %v2288 = vpop.f32.mrf.mxu0
  %v2289 = vadd.f32 0.0, %v2288
  %v2290 = vpop.f32.mrf.mxu0
  %v2291 = vadd.f32 0.0, %v2290
  %2292 = vmatmul.bf16.gmra.mxu0 %v1935
  %v2293 = vpop.f32.mrf.mxu0
  %v2294 = vadd.f32 0.0, %v2293
  %v2295 = vpop.f32.mrf.mxu0
  %v2296 = vadd.f32 0.0, %v2295
  %2297 = vmatmul.bf16.gmra.mxu0 %v1938
  %v2298 = vpop.f32.mrf.mxu0
  %v2299 = vadd.f32 0.0, %v2298
  %v2300 = vpop.f32.mrf.mxu0
  %v2301 = vadd.f32 0.0, %v2300
  %2302 = vmatmul.bf16.gmra.mxu0 %v1941
  %v2303 = vpop.f32.mrf.mxu0
  %v2304 = vadd.f32 0.0, %v2303
  %v2305 = vpop.f32.mrf.mxu0
  %v2306 = vadd.f32 0.0, %v2305
  %2307 = vmatmul.bf16.gmra.mxu0 %v1944
  %v2308 = vpop.f32.mrf.mxu0
  %v2309 = vadd.f32 0.0, %v2308
  %v2310 = vpop.f32.mrf.mxu0
  %v2311 = vadd.f32 0.0, %v2310
  %2312 = vdwg.mxu0
  %v2313 = vrot.slane %v2244, 4
  %v2314 = vrot.slane %v2246, 4
  %v2315 = vrot.slane %v2249, 4
  %v2316 = vrot.slane %v2251, 4
  %v2317 = vrot.slane %v2254, 4
  %v2318 = vrot.slane %v2256, 4
  %v2319 = vrot.slane %v2259, 4
  %v2320 = vrot.slane %v2261, 4
  %v2321 = vrot.slane %v2264, 4
  %v2322 = vrot.slane %v2266, 4
  %v2323 = vrot.slane %v2269, 4
  %v2324 = vrot.slane %v2271, 4
  %v2325 = vrot.slane %v2274, 4
  %v2326 = vrot.slane %v2276, 4
  %v2327 = vrot.slane %v2279, 4
  %v2328 = vrot.slane %v2281, 4
  %v2329 = vrot.slane %v2284, 4
  %v2330 = vrot.slane %v2286, 4
  %v2331 = vrot.slane %v2289, 4
  %v2332 = vrot.slane %v2291, 4
  %v2333 = vrot.slane %v2294, 4
  %v2334 = vrot.slane %v2296, 4
  %v2335 = vrot.slane %v2299, 4
  %v2336 = vrot.slane %v2301, 4
  %v2337 = vrot.slane %v2304, 4
  %v2338 = vrot.slane %v2306, 4
  %v2339 = vrot.slane %v2309, 4
  %v2340 = vrot.slane %v2311, 4
  %v2341 = vsel %vm268, %v2339, %v2340
  %v2342 = vsel %vm268, %v2338, %v2339
  %v2343 = vsel %vm268, %v2337, %v2338
  %v2344 = vsel %vm268, %v2336, %v2337
  %v2345 = vsel %vm268, %v2335, %v2336
  %v2346 = vsel %vm268, %v2334, %v2335
  %v2347 = vsel %vm268, %v2333, %v2334
  %v2348 = vsel %vm268, %v2332, %v2333
  %v2349 = vsel %vm268, %v2331, %v2332
  %v2350 = vsel %vm268, %v2330, %v2331
  %v2351 = vsel %vm268, %v2329, %v2330
  %v2352 = vsel %vm268, %v2328, %v2329
  %v2353 = vsel %vm268, %v2327, %v2328
  %v2354 = vsel %vm268, %v2326, %v2327
  %v2355 = vsel %vm268, %v2325, %v2326
  %v2356 = vsel %vm268, %v2324, %v2325
  %v2357 = vsel %vm268, %v2323, %v2324
  %v2358 = vsel %vm268, %v2322, %v2323
  %v2359 = vsel %vm268, %v2321, %v2322
  %v2360 = vsel %vm268, %v2320, %v2321
  %v2361 = vsel %vm268, %v2319, %v2320
  %v2362 = vsel %vm268, %v2318, %v2319
  %v2363 = vsel %vm268, %v2317, %v2318
  %v2364 = vsel %vm268, %v2316, %v2317
  %v2365 = vsel %vm268, %v2315, %v2316
  %v2366 = vsel %vm268, %v2314, %v2315
  %v2367 = vsel %vm268, %v2313, %v2314
  %v2368 = vsel %vm268, %v2340, %v2313
  %v2369 = vadd.f32 %v2125, %v2367
  %v2370 = vadd.f32 %v2127, %v2366
  %v2371 = vadd.f32 %v2130, %v2365
  %v2372 = vadd.f32 %v2132, %v2364
  %v2373 = vadd.f32 %v2135, %v2363
  %v2374 = vadd.f32 %v2137, %v2362
  %v2375 = vadd.f32 %v2140, %v2361
  %v2376 = vadd.f32 %v2142, %v2360
  %v2377 = vadd.f32 %v2145, %v2359
  %v2378 = vadd.f32 %v2147, %v2358
  %v2379 = vadd.f32 %v2150, %v2357
  %v2380 = vadd.f32 %v2152, %v2356
  %v2381 = vadd.f32 %v2155, %v2355
  %v2382 = vadd.f32 %v2157, %v2354
  %v2383 = vadd.f32 %v2160, %v2353
  %v2384 = vadd.f32 %v2162, %v2352
  %v2385 = vadd.f32 %v2165, %v2351
  %v2386 = vadd.f32 %v2167, %v2350
  %v2387 = vadd.f32 %v2170, %v2349
  %v2388 = vadd.f32 %v2172, %v2348
  %v2389 = vadd.f32 %v2175, %v2347
  %v2390 = vadd.f32 %v2177, %v2346
  %v2391 = vadd.f32 %v2180, %v2345
  %v2392 = vadd.f32 %v2182, %v2344
  %v2393 = vadd.f32 %v2185, %v2343
  %v2394 = vadd.f32 %v2187, %v2342
  %v2395 = vadd.f32 %v2190, %v2341
  %v2396 = vadd.f32 %v2192, %v2368
  %s2397 = scalar_lea.vmem %s3, 108
  %v2398 = vld [vmem:[%s2397] sm:$0xf]
  %v2399 = vld [vmem:[%s2397 + $0x4] sm:$0xf]
  %v2400 = vld [vmem:[%s2397 + $0x8] sm:$0xf]
  %v2401 = vld [vmem:[%s2397 + $0xc] sm:$0xf]
  %v2402 = vld [vmem:[%s2397 + $0x10] sm:$0xf]
  %v2403 = vld [vmem:[%s2397 + $0x14] sm:$0xf]
  %v2404 = vld [vmem:[%s2397 + $0x18] sm:$0xf]
  %v2405 = vld [vmem:[%s2397 + $0x1c] sm:$0xf]
  %v2406 = vld [vmem:[%s2397 + $0x20] sm:$0xf]
  %v2416 = vunpack.c.l.b16 %v2398
  %v2417 = vunpack.c.l.b16 %v2399
  %v2418 = vunpack.c.l.b16 %v2400
  %v2419 = vunpack.c.l.b16 %v2401
  %v2420 = vunpack.c.l.b16 %v2402
  %v2421 = vunpack.c.l.b16 %v2403
  %v2422 = vunpack.c.l.b16 %v2404
  %v2423 = vunpack.c.l.b16 %v2405
  %v2424 = vunpack.c.l.b16 %v2406
  %v2425 = vpack.c.b16 %v2417, %v2416
  %v2426 = vpack.c.b16 %v2419, %v2418
  %v2427 = vpack.c.b16 %v2421, %v2420
  %v2428 = vpack.c.b16 %v2423, %v2422
  %v2429 = vpack.c.b16 %v2424, %v2424
  %v2435 = vsel %vm1946, %v2429, 0
  %2437 = vmatpush.bf16.msra.mxu0 0
  %2438 = vmatpush.bf16.msra.mxu0 0
  %2439 = vmatpush.bf16.msra.mxu0 0
  %2440 = vmatpush.bf16.msra.mxu0 %v2435
  %2441 = vmatpush.bf16.msra.mxu0 %v2428
  %2442 = vmatpush.bf16.msra.mxu0 %v2427
  %2443 = vmatpush.bf16.msra.mxu0 %v2426
  %2444 = vmatpush.bf16.msra.mxu0 %v2425
  %2445 = vmatmul.bf16.gmra.mxu0 %v1905
  %v2446 = vpop.f32.mrf.mxu0
  %v2447 = vadd.f32 0.0, %v2446
  %v2448 = vpop.f32.mrf.mxu0
  %v2449 = vadd.f32 0.0, %v2448
  %2450 = vmatmul.bf16.gmra.mxu0 %v1908
  %v2451 = vpop.f32.mrf.mxu0
  %v2452 = vadd.f32 0.0, %v2451
  %v2453 = vpop.f32.mrf.mxu0
  %v2454 = vadd.f32 0.0, %v2453
  %2455 = vmatmul.bf16.gmra.mxu0 %v1911
  %v2456 = vpop.f32.mrf.mxu0
  %v2457 = vadd.f32 0.0, %v2456
  %v2458 = vpop.f32.mrf.mxu0
  %v2459 = vadd.f32 0.0, %v2458
  %2460 = vmatmul.bf16.gmra.mxu0 %v1914
  %v2461 = vpop.f32.mrf.mxu0
  %v2462 = vadd.f32 0.0, %v2461
  %v2463 = vpop.f32.mrf.mxu0
  %v2464 = vadd.f32 0.0, %v2463
  %2465 = vmatmul.bf16.gmra.mxu0 %v1917
  %v2466 = vpop.f32.mrf.mxu0
  %v2467 = vadd.f32 0.0, %v2466
  %v2468 = vpop.f32.mrf.mxu0
  %v2469 = vadd.f32 0.0, %v2468
  %2470 = vmatmul.bf16.gmra.mxu0 %v1920
  %v2471 = vpop.f32.mrf.mxu0
  %v2472 = vadd.f32 0.0, %v2471
  %v2473 = vpop.f32.mrf.mxu0
  %v2474 = vadd.f32 0.0, %v2473
  %2475 = vmatmul.bf16.gmra.mxu0 %v1923
  %v2476 = vpop.f32.mrf.mxu0
  %v2477 = vadd.f32 0.0, %v2476
  %v2478 = vpop.f32.mrf.mxu0
  %v2479 = vadd.f32 0.0, %v2478
  %2480 = vmatmul.bf16.gmra.mxu0 %v1926
  %v2481 = vpop.f32.mrf.mxu0
  %v2482 = vadd.f32 0.0, %v2481
  %v2483 = vpop.f32.mrf.mxu0
  %v2484 = vadd.f32 0.0, %v2483
  %2485 = vmatmul.bf16.gmra.mxu0 %v1929
  %v2486 = vpop.f32.mrf.mxu0
  %v2487 = vadd.f32 0.0, %v2486
  %v2488 = vpop.f32.mrf.mxu0
  %v2489 = vadd.f32 0.0, %v2488
  %2490 = vmatmul.bf16.gmra.mxu0 %v1932
  %v2491 = vpop.f32.mrf.mxu0
  %v2492 = vadd.f32 0.0, %v2491
  %v2493 = vpop.f32.mrf.mxu0
  %v2494 = vadd.f32 0.0, %v2493
  %2495 = vmatmul.bf16.gmra.mxu0 %v1935
  %v2496 = vpop.f32.mrf.mxu0
  %v2497 = vadd.f32 0.0, %v2496
  %v2498 = vpop.f32.mrf.mxu0
  %v2499 = vadd.f32 0.0, %v2498
  %2500 = vmatmul.bf16.gmra.mxu0 %v1938
  %v2501 = vpop.f32.mrf.mxu0
  %v2502 = vadd.f32 0.0, %v2501
  %v2503 = vpop.f32.mrf.mxu0
  %v2504 = vadd.f32 0.0, %v2503
  %2505 = vmatmul.bf16.gmra.mxu0 %v1941
  %v2506 = vpop.f32.mrf.mxu0
  %v2507 = vadd.f32 0.0, %v2506
  %v2508 = vpop.f32.mrf.mxu0
  %v2509 = vadd.f32 0.0, %v2508
  %2510 = vmatmul.bf16.gmra.mxu0 %v1944
  %v2511 = vpop.f32.mrf.mxu0
  %v2512 = vadd.f32 0.0, %v2511
  %v2513 = vpop.f32.mrf.mxu0
  %v2514 = vadd.f32 0.0, %v2513
  %2515 = vdwg.mxu0
  %v2516 = vrot.slane %v2447, 6
  %v2517 = vrot.slane %v2449, 6
  %v2518 = vrot.slane %v2452, 6
  %v2519 = vrot.slane %v2454, 6
  %v2520 = vrot.slane %v2457, 6
  %v2521 = vrot.slane %v2459, 6
  %v2522 = vrot.slane %v2462, 6
  %v2523 = vrot.slane %v2464, 6
  %v2524 = vrot.slane %v2467, 6
  %v2525 = vrot.slane %v2469, 6
  %v2526 = vrot.slane %v2472, 6
  %v2527 = vrot.slane %v2474, 6
  %v2528 = vrot.slane %v2477, 6
  %v2529 = vrot.slane %v2479, 6
  %v2530 = vrot.slane %v2482, 6
  %v2531 = vrot.slane %v2484, 6
  %v2532 = vrot.slane %v2487, 6
  %v2533 = vrot.slane %v2489, 6
  %v2534 = vrot.slane %v2492, 6
  %v2535 = vrot.slane %v2494, 6
  %v2536 = vrot.slane %v2497, 6
  %v2537 = vrot.slane %v2499, 6
  %v2538 = vrot.slane %v2502, 6
  %v2539 = vrot.slane %v2504, 6
  %v2540 = vrot.slane %v2507, 6
  %v2541 = vrot.slane %v2509, 6
  %v2542 = vrot.slane %v2512, 6
  %v2543 = vrot.slane %v2514, 6
  %vm2544 = vcmp.lt.s32.totalorder %v96, 2
  %v2545 = vsel %vm2544, %v2542, %v2543
  %v2546 = vsel %vm2544, %v2541, %v2542
  %v2547 = vsel %vm2544, %v2540, %v2541
  %v2548 = vsel %vm2544, %v2539, %v2540
  %v2549 = vsel %vm2544, %v2538, %v2539
  %v2550 = vsel %vm2544, %v2537, %v2538
  %v2551 = vsel %vm2544, %v2536, %v2537
  %v2552 = vsel %vm2544, %v2535, %v2536
  %v2553 = vsel %vm2544, %v2534, %v2535
  %v2554 = vsel %vm2544, %v2533, %v2534
  %v2555 = vsel %vm2544, %v2532, %v2533
  %v2556 = vsel %vm2544, %v2531, %v2532
  %v2557 = vsel %vm2544, %v2530, %v2531
  %v2558 = vsel %vm2544, %v2529, %v2530
  %v2559 = vsel %vm2544, %v2528, %v2529
  %v2560 = vsel %vm2544, %v2527, %v2528
  %v2561 = vsel %vm2544, %v2526, %v2527
  %v2562 = vsel %vm2544, %v2525, %v2526
  %v2563 = vsel %vm2544, %v2524, %v2525
  %v2564 = vsel %vm2544, %v2523, %v2524
  %v2565 = vsel %vm2544, %v2522, %v2523
  %v2566 = vsel %vm2544, %v2521, %v2522
  %v2567 = vsel %vm2544, %v2520, %v2521
  %v2568 = vsel %vm2544, %v2519, %v2520
  %v2569 = vsel %vm2544, %v2518, %v2519
  %v2570 = vsel %vm2544, %v2517, %v2518
  %v2571 = vsel %vm2544, %v2516, %v2517
  %v2572 = vsel %vm2544, %v2543, %v2516
  %v2573 = vadd.f32 %v2369, %v2571
  %v2574 = vadd.f32 %v2370, %v2570
  %v2575 = vadd.f32 %v2371, %v2569
  %v2576 = vadd.f32 %v2372, %v2568
  %v2577 = vadd.f32 %v2373, %v2567
  %v2578 = vadd.f32 %v2374, %v2566
  %v2579 = vadd.f32 %v2375, %v2565
  %v2580 = vadd.f32 %v2376, %v2564
  %v2581 = vadd.f32 %v2377, %v2563
  %v2582 = vadd.f32 %v2378, %v2562
  %v2583 = vadd.f32 %v2379, %v2561
  %v2584 = vadd.f32 %v2380, %v2560
  %v2585 = vadd.f32 %v2381, %v2559
  %v2586 = vadd.f32 %v2382, %v2558
  %v2587 = vadd.f32 %v2383, %v2557
  %v2588 = vadd.f32 %v2384, %v2556
  %v2589 = vadd.f32 %v2385, %v2555
  %v2590 = vadd.f32 %v2386, %v2554
  %v2591 = vadd.f32 %v2387, %v2553
  %v2592 = vadd.f32 %v2388, %v2552
  %v2593 = vadd.f32 %v2389, %v2551
  %v2594 = vadd.f32 %v2390, %v2550
  %v2595 = vadd.f32 %v2391, %v2549
  %v2596 = vadd.f32 %v2392, %v2548
  %v2597 = vadd.f32 %v2393, %v2547
  %v2598 = vadd.f32 %v2394, %v2546
  %v2599 = vadd.f32 %v2395, %v2545
  %v2600 = vadd.f32 %v2396, %v2572
  %s2601 = scalar_lea.vmem %s3, 144
  %v2602 = vld [vmem:[%s2601] sm:$0xf]
  %v2603 = vld [vmem:[%s2601 + $0x4] sm:$0xf]
  %v2604 = vld [vmem:[%s2601 + $0x8] sm:$0xf]
  %v2605 = vld [vmem:[%s2601 + $0xc] sm:$0xf]
  %v2606 = vld [vmem:[%s2601 + $0x10] sm:$0xf]
  %v2607 = vld [vmem:[%s2601 + $0x14] sm:$0xf]
  %v2608 = vld [vmem:[%s2601 + $0x18] sm:$0xf]
  %v2609 = vld [vmem:[%s2601 + $0x1c] sm:$0xf]
  %v2610 = vld [vmem:[%s2601 + $0x20] sm:$0xf]
  %v2620 = vunpack.c.l.b16 %v2602
  %v2621 = vunpack.c.l.b16 %v2603
  %v2622 = vunpack.c.l.b16 %v2604
  %v2623 = vunpack.c.l.b16 %v2605
  %v2624 = vunpack.c.l.b16 %v2606
  %v2625 = vunpack.c.l.b16 %v2607
  %v2626 = vunpack.c.l.b16 %v2608
  %v2627 = vunpack.c.l.b16 %v2609
  %v2628 = vunpack.c.l.b16 %v2610
  %v2629 = vpack.c.b16 %v2621, %v2620
  %v2630 = vpack.c.b16 %v2623, %v2622
  %v2631 = vpack.c.b16 %v2625, %v2624
  %v2632 = vpack.c.b16 %v2627, %v2626
  %v2633 = vpack.c.b16 %v2628, %v2628
  %v2639 = vsel %vm1946, %v2633, 0
  %2641 = vmatpush.bf16.msra.mxu0 0
  %2642 = vmatpush.bf16.msra.mxu0 0
  %2643 = vmatpush.bf16.msra.mxu0 0
  %2644 = vmatpush.bf16.msra.mxu0 %v2639
  %2645 = vmatpush.bf16.msra.mxu0 %v2632
  %2646 = vmatpush.bf16.msra.mxu0 %v2631
  %2647 = vmatpush.bf16.msra.mxu0 %v2630
  %2648 = vmatpush.bf16.msra.mxu0 %v2629
  %2649 = vmatmul.bf16.gmra.mxu0 %v1905
  %v2650 = vpop.f32.mrf.mxu0
  %v2651 = vadd.f32 0.0, %v2650
  %v2652 = vpop.f32.mrf.mxu0
  %v2653 = vadd.f32 0.0, %v2652
  %2654 = vmatmul.bf16.gmra.mxu0 %v1908
  %v2655 = vpop.f32.mrf.mxu0
  %v2656 = vadd.f32 0.0, %v2655
  %v2657 = vpop.f32.mrf.mxu0
  %v2658 = vadd.f32 0.0, %v2657
  %2659 = vmatmul.bf16.gmra.mxu0 %v1911
  %v2660 = vpop.f32.mrf.mxu0
  %v2661 = vadd.f32 0.0, %v2660
  %v2662 = vpop.f32.mrf.mxu0
  %v2663 = vadd.f32 0.0, %v2662
  %2664 = vmatmul.bf16.gmra.mxu0 %v1914
  %v2665 = vpop.f32.mrf.mxu0
  %v2666 = vadd.f32 0.0, %v2665
  %v2667 = vpop.f32.mrf.mxu0
  %v2668 = vadd.f32 0.0, %v2667
  %2669 = vmatmul.bf16.gmra.mxu0 %v1917
  %v2670 = vpop.f32.mrf.mxu0
  %v2671 = vadd.f32 0.0, %v2670
  %v2672 = vpop.f32.mrf.mxu0
  %v2673 = vadd.f32 0.0, %v2672
  %2674 = vmatmul.bf16.gmra.mxu0 %v1920
  %v2675 = vpop.f32.mrf.mxu0
  %v2676 = vadd.f32 0.0, %v2675
  %v2677 = vpop.f32.mrf.mxu0
  %v2678 = vadd.f32 0.0, %v2677
  %2679 = vmatmul.bf16.gmra.mxu0 %v1923
  %v2680 = vpop.f32.mrf.mxu0
  %v2681 = vadd.f32 0.0, %v2680
  %v2682 = vpop.f32.mrf.mxu0
  %v2683 = vadd.f32 0.0, %v2682
  %2684 = vmatmul.bf16.gmra.mxu0 %v1926
  %v2685 = vpop.f32.mrf.mxu0
  %v2686 = vadd.f32 0.0, %v2685
  %v2687 = vpop.f32.mrf.mxu0
  %v2688 = vadd.f32 0.0, %v2687
  %2689 = vmatmul.bf16.gmra.mxu0 %v1929
  %v2690 = vpop.f32.mrf.mxu0
  %v2691 = vadd.f32 0.0, %v2690
  %v2692 = vpop.f32.mrf.mxu0
  %v2693 = vadd.f32 0.0, %v2692
  %2694 = vmatmul.bf16.gmra.mxu0 %v1932
  %v2695 = vpop.f32.mrf.mxu0
  %v2696 = vadd.f32 0.0, %v2695
  %v2697 = vpop.f32.mrf.mxu0
  %v2698 = vadd.f32 0.0, %v2697
  %2699 = vmatmul.bf16.gmra.mxu0 %v1935
  %v2700 = vpop.f32.mrf.mxu0
  %v2701 = vadd.f32 0.0, %v2700
  %v2702 = vpop.f32.mrf.mxu0
  %v2703 = vadd.f32 0.0, %v2702
  %2704 = vmatmul.bf16.gmra.mxu0 %v1938
  %v2705 = vpop.f32.mrf.mxu0
  %v2706 = vadd.f32 0.0, %v2705
  %v2707 = vpop.f32.mrf.mxu0
  %v2708 = vadd.f32 0.0, %v2707
  %2709 = vmatmul.bf16.gmra.mxu0 %v1941
  %v2710 = vpop.f32.mrf.mxu0
  %v2711 = vadd.f32 0.0, %v2710
  %v2712 = vpop.f32.mrf.mxu0
  %v2713 = vadd.f32 0.0, %v2712
  %2714 = vmatmul.bf16.gmra.mxu0 %v1944
  %v2715 = vpop.f32.mrf.mxu0
  %v2716 = vadd.f32 0.0, %v2715
  %v2717 = vpop.f32.mrf.mxu0
  %v2718 = vadd.f32 0.0, %v2717
  %2719 = vdwg.mxu0
  %v2720 = vadd.f32 %v2573, %v2653
  %v2721 = vadd.f32 %v2574, %v2656
  %v2722 = vadd.f32 %v2575, %v2658
  %v2723 = vadd.f32 %v2576, %v2661
  %v2724 = vadd.f32 %v2577, %v2663
  %v2725 = vadd.f32 %v2578, %v2666
  %v2726 = vadd.f32 %v2579, %v2668
  %v2727 = vadd.f32 %v2580, %v2671
  %v2728 = vadd.f32 %v2581, %v2673
  %v2729 = vadd.f32 %v2582, %v2676
  %v2730 = vadd.f32 %v2583, %v2678
  %v2731 = vadd.f32 %v2584, %v2681
  %v2732 = vadd.f32 %v2585, %v2683
  %v2733 = vadd.f32 %v2586, %v2686
  %v2734 = vadd.f32 %v2587, %v2688
  %v2735 = vadd.f32 %v2588, %v2691
  %v2736 = vadd.f32 %v2589, %v2693
  %v2737 = vadd.f32 %v2590, %v2696
  %v2738 = vadd.f32 %v2591, %v2698
  %v2739 = vadd.f32 %v2592, %v2701
  %v2740 = vadd.f32 %v2593, %v2703
  %v2741 = vadd.f32 %v2594, %v2706
  %v2742 = vadd.f32 %v2595, %v2708
  %v2743 = vadd.f32 %v2596, %v2711
  %v2744 = vadd.f32 %v2597, %v2713
  %v2745 = vadd.f32 %v2598, %v2716
  %v2746 = vadd.f32 %v2599, %v2718
  %v2747 = vadd.f32 %v2600, %v2651
  %v2748 = vld [vmem:[%s4] sm:$0x1]
  %v2750 = vperm.slane %v2748, 0
  %v2752 = vadd.f32 %v2720, %v2750
  %v2753 = vadd.f32 %v2721, %v2750
  %v2754 = vadd.f32 %v2722, %v2750
  %v2755 = vadd.f32 %v2723, %v2750
  %v2756 = vadd.f32 %v2724, %v2750
  %v2757 = vadd.f32 %v2725, %v2750
  %v2758 = vadd.f32 %v2726, %v2750
  %v2759 = vadd.f32 %v2727, %v2750
  %v2760 = vadd.f32 %v2728, %v2750
  %v2761 = vadd.f32 %v2729, %v2750
  %v2762 = vadd.f32 %v2730, %v2750
  %v2763 = vadd.f32 %v2731, %v2750
  %v2764 = vadd.f32 %v2732, %v2750
  %v2765 = vadd.f32 %v2733, %v2750
  %v2766 = vadd.f32 %v2734, %v2750
  %v2767 = vadd.f32 %v2735, %v2750
  %v2768 = vadd.f32 %v2736, %v2750
  %v2769 = vadd.f32 %v2737, %v2750
  %v2770 = vadd.f32 %v2738, %v2750
  %v2771 = vadd.f32 %v2739, %v2750
  %v2772 = vadd.f32 %v2740, %v2750
  %v2773 = vadd.f32 %v2741, %v2750
  %v2774 = vadd.f32 %v2742, %v2750
  %v2775 = vadd.f32 %v2743, %v2750
  %v2776 = vadd.f32 %v2744, %v2750
  %v2777 = vadd.f32 %v2745, %v2750
  %v2778 = vadd.f32 %v2746, %v2750
  %v2779 = vadd.f32 %v2747, %v2750
  %v2780 = vmax.f32 %v2752, 0.0
  %v2781 = vmax.f32 %v2753, 0.0
  %v2782 = vmax.f32 %v2754, 0.0
  %v2783 = vmax.f32 %v2755, 0.0
  %v2784 = vmax.f32 %v2756, 0.0
  %v2785 = vmax.f32 %v2757, 0.0
  %v2786 = vmax.f32 %v2758, 0.0
  %v2787 = vmax.f32 %v2759, 0.0
  %v2788 = vmax.f32 %v2760, 0.0
  %v2789 = vmax.f32 %v2761, 0.0
  %v2790 = vmax.f32 %v2762, 0.0
  %v2791 = vmax.f32 %v2763, 0.0
  %v2792 = vmax.f32 %v2764, 0.0
  %v2793 = vmax.f32 %v2765, 0.0
  %v2794 = vmax.f32 %v2766, 0.0
  %v2795 = vmax.f32 %v2767, 0.0
  %v2796 = vmax.f32 %v2768, 0.0
  %v2797 = vmax.f32 %v2769, 0.0
  %v2798 = vmax.f32 %v2770, 0.0
  %v2799 = vmax.f32 %v2771, 0.0
  %v2800 = vmax.f32 %v2772, 0.0
  %v2801 = vmax.f32 %v2773, 0.0
  %v2802 = vmax.f32 %v2774, 0.0
  %v2803 = vmax.f32 %v2775, 0.0
  %v2804 = vmax.f32 %v2776, 0.0
  %v2805 = vmax.f32 %v2777, 0.0
  %v2806 = vmax.f32 %v2778, 0.0
  %v2807 = vmax.f32 %v2779, 0.0
  %v2808 = vrot.slane %v2780, 2
  %v2809 = vrot.slane %v2781, 2
  %v2810 = vrot.slane %v2782, 2
  %v2811 = vrot.slane %v2783, 2
  %v2812 = vrot.slane %v2784, 2
  %v2813 = vrot.slane %v2785, 2
  %v2814 = vrot.slane %v2786, 2
  %v2815 = vrot.slane %v2787, 2
  %v2816 = vrot.slane %v2788, 2
  %v2817 = vrot.slane %v2789, 2
  %v2818 = vrot.slane %v2790, 2
  %v2819 = vrot.slane %v2791, 2
  %v2820 = vrot.slane %v2792, 2
  %v2821 = vrot.slane %v2793, 2
  %v2822 = vrot.slane %v2794, 2
  %v2823 = vrot.slane %v2795, 2
  %v2824 = vrot.slane %v2796, 2
  %v2825 = vrot.slane %v2797, 2
  %v2826 = vrot.slane %v2798, 2
  %v2827 = vrot.slane %v2799, 2
  %v2828 = vrot.slane %v2800, 2
  %v2829 = vrot.slane %v2801, 2
  %v2830 = vrot.slane %v2802, 2
  %v2831 = vrot.slane %v2803, 2
  %v2832 = vrot.slane %v2804, 2
  %v2833 = vrot.slane %v2805, 2
  %v2834 = vrot.slane %v2806, 2
  %v2835 = vrot.slane %v2807, 2
  %v2836 = vsel %vm154, %v2834, %v2835
  %v2837 = vsel %vm154, %v2833, %v2834
  %v2838 = vsel %vm154, %v2832, %v2833
  %v2839 = vsel %vm154, %v2831, %v2832
  %v2840 = vsel %vm154, %v2830, %v2831
  %v2841 = vsel %vm154, %v2829, %v2830
  %v2842 = vsel %vm154, %v2828, %v2829
  %v2843 = vsel %vm154, %v2827, %v2828
  %v2844 = vsel %vm154, %v2826, %v2827
  %v2845 = vsel %vm154, %v2825, %v2826
  %v2846 = vsel %vm154, %v2824, %v2825
  %v2847 = vsel %vm154, %v2823, %v2824
  %v2848 = vsel %vm154, %v2822, %v2823
  %v2849 = vsel %vm154, %v2821, %v2822
  %v2850 = vsel %vm154, %v2820, %v2821
  %v2851 = vsel %vm154, %v2819, %v2820
  %v2852 = vsel %vm154, %v2818, %v2819
  %v2853 = vsel %vm154, %v2817, %v2818
  %v2854 = vsel %vm154, %v2816, %v2817
  %v2855 = vsel %vm154, %v2815, %v2816
  %v2856 = vsel %vm154, %v2814, %v2815
  %v2857 = vsel %vm154, %v2813, %v2814
  %v2858 = vsel %vm154, %v2812, %v2813
  %v2859 = vsel %vm154, %v2811, %v2812
  %v2860 = vsel %vm154, %v2810, %v2811
  %v2861 = vsel %vm154, %v2809, %v2810
  %v2862 = vsel %vm154, %v2808, %v2809
  %v2863 = vsel %vm154, %v2835, %v2808
  %v2864 = vmax.f32 %v2780, %v2862
  %v2865 = vmax.f32 %v2781, %v2861
  %v2866 = vmax.f32 %v2782, %v2860
  %v2867 = vmax.f32 %v2783, %v2859
  %v2868 = vmax.f32 %v2784, %v2858
  %v2869 = vmax.f32 %v2785, %v2857
  %v2870 = vmax.f32 %v2786, %v2856
  %v2871 = vmax.f32 %v2787, %v2855
  %v2872 = vmax.f32 %v2788, %v2854
  %v2873 = vmax.f32 %v2789, %v2853
  %v2874 = vmax.f32 %v2790, %v2852
  %v2875 = vmax.f32 %v2791, %v2851
  %v2876 = vmax.f32 %v2792, %v2850
  %v2877 = vmax.f32 %v2793, %v2849
  %v2878 = vmax.f32 %v2794, %v2848
  %v2879 = vmax.f32 %v2795, %v2847
  %v2880 = vmax.f32 %v2796, %v2846
  %v2881 = vmax.f32 %v2797, %v2845
  %v2882 = vmax.f32 %v2798, %v2844
  %v2883 = vmax.f32 %v2799, %v2843
  %v2884 = vmax.f32 %v2800, %v2842
  %v2885 = vmax.f32 %v2801, %v2841
  %v2886 = vmax.f32 %v2802, %v2840
  %v2887 = vmax.f32 %v2803, %v2839
  %v2888 = vmax.f32 %v2804, %v2838
  %v2889 = vmax.f32 %v2805, %v2837
  %v2890 = vmax.f32 %v2806, %v2836
  %v2891 = vmax.f32 %v2807, %v2863
  %2920 = vrot.lane.b32.xlu0 %v2864, 80
  %v2921 = vpop.permute.xlu0 %2920
  %2922 = vrot.lane.b32.xlu0 %v2865, 80
  %v2923 = vpop.permute.xlu0 %2922
  %2924 = vrot.lane.b32.xlu0 %v2866, 80
  %v2925 = vpop.permute.xlu0 %2924
  %2926 = vrot.lane.b32.xlu0 %v2867, 80
  %v2927 = vpop.permute.xlu0 %2926
  %2928 = vrot.lane.b32.xlu0 %v2868, 80
  %v2929 = vpop.permute.xlu0 %2928
  %2930 = vrot.lane.b32.xlu0 %v2869, 80
  %v2931 = vpop.permute.xlu0 %2930
  %2932 = vrot.lane.b32.xlu0 %v2870, 80
  %v2933 = vpop.permute.xlu0 %2932
  %2934 = vrot.lane.b32.xlu0 %v2871, 80
  %v2935 = vpop.permute.xlu0 %2934
  %2936 = vrot.lane.b32.xlu0 %v2872, 80
  %v2937 = vpop.permute.xlu0 %2936
  %2938 = vrot.lane.b32.xlu0 %v2873, 80
  %v2939 = vpop.permute.xlu0 %2938
  %2940 = vrot.lane.b32.xlu0 %v2874, 80
  %v2941 = vpop.permute.xlu0 %2940
  %2942 = vrot.lane.b32.xlu0 %v2875, 80
  %v2943 = vpop.permute.xlu0 %2942
  %2944 = vrot.lane.b32.xlu0 %v2876, 80
  %v2945 = vpop.permute.xlu0 %2944
  %2946 = vrot.lane.b32.xlu0 %v2877, 80
  %v2947 = vpop.permute.xlu0 %2946
  %2948 = vrot.lane.b32.xlu0 %v2878, 80
  %v2949 = vpop.permute.xlu0 %2948
  %2950 = vrot.lane.b32.xlu0 %v2879, 80
  %v2951 = vpop.permute.xlu0 %2950
  %2952 = vrot.lane.b32.xlu0 %v2880, 80
  %v2953 = vpop.permute.xlu0 %2952
  %2954 = vrot.lane.b32.xlu0 %v2881, 80
  %v2955 = vpop.permute.xlu0 %2954
  %2956 = vrot.lane.b32.xlu0 %v2882, 80
  %v2957 = vpop.permute.xlu0 %2956
  %2958 = vrot.lane.b32.xlu0 %v2883, 80
  %v2959 = vpop.permute.xlu0 %2958
  %2960 = vrot.lane.b32.xlu0 %v2884, 80
  %v2961 = vpop.permute.xlu0 %2960
  %2962 = vrot.lane.b32.xlu0 %v2885, 80
  %v2963 = vpop.permute.xlu0 %2962
  %2964 = vrot.lane.b32.xlu0 %v2886, 80
  %v2965 = vpop.permute.xlu0 %2964
  %2966 = vrot.lane.b32.xlu0 %v2887, 80
  %v2967 = vpop.permute.xlu0 %2966
  %2968 = vrot.lane.b32.xlu0 %v2888, 80
  %v2969 = vpop.permute.xlu0 %2968
  %2970 = vrot.lane.b32.xlu0 %v2889, 80
  %v2971 = vpop.permute.xlu0 %2970
  %2972 = vrot.lane.b32.xlu0 %v2890, 80
  %v2973 = vpop.permute.xlu0 %2972
  %2974 = vrot.lane.b32.xlu0 %v2891, 80
  %v2975 = vpop.permute.xlu0 %2974
  %v3004 = vmax.f32 %v2864, %v2921
  %v3005 = vmax.f32 %v2865, %v2923
  %v3006 = vmax.f32 %v2866, %v2925
  %v3007 = vmax.f32 %v2867, %v2927
  %v3008 = vmax.f32 %v2868, %v2929
  %v3009 = vmax.f32 %v2869, %v2931
  %v3010 = vmax.f32 %v2870, %v2933
  %v3011 = vmax.f32 %v2871, %v2935
  %v3012 = vmax.f32 %v2872, %v2937
  %v3013 = vmax.f32 %v2873, %v2939
  %v3014 = vmax.f32 %v2874, %v2941
  %v3015 = vmax.f32 %v2875, %v2943
  %v3016 = vmax.f32 %v2876, %v2945
  %v3017 = vmax.f32 %v2877, %v2947
  %v3018 = vmax.f32 %v2878, %v2949
  %v3019 = vmax.f32 %v2879, %v2951
  %v3020 = vmax.f32 %v2880, %v2953
  %v3021 = vmax.f32 %v2881, %v2955
  %v3022 = vmax.f32 %v2882, %v2957
  %v3023 = vmax.f32 %v2883, %v2959
  %v3024 = vmax.f32 %v2884, %v2961
  %v3025 = vmax.f32 %v2885, %v2963
  %v3026 = vmax.f32 %v2886, %v2965
  %v3027 = vmax.f32 %v2887, %v2967
  %v3028 = vmax.f32 %v2888, %v2969
  %v3029 = vmax.f32 %v2889, %v2971
  %v3030 = vmax.f32 %v2890, %v2973
  %v3031 = vmax.f32 %v2891, %v2975
  %vm3032 = vcmask 392192
  %3033 = vst.msk [vmem:[#allocation2] sm:$0xff] %vm3032, %v3004
  %3034 = vst.msk [vmem:[#allocation2 + $0x8] sm:$0xff] %vm3032, %v3005
  %3035 = vst.msk [vmem:[#allocation2 + $0x10] sm:$0xff] %vm3032, %v3006
  %3036 = vst.msk [vmem:[#allocation2 + $0x18] sm:$0xff] %vm3032, %v3007
  %3037 = vst.msk [vmem:[#allocation2 + $0x20] sm:$0xff] %vm3032, %v3008
  %3038 = vst.msk [vmem:[#allocation2 + $0x28] sm:$0xff] %vm3032, %v3009
  %3039 = vst.msk [vmem:[#allocation2 + $0x30] sm:$0xff] %vm3032, %v3010
  %3040 = vst.msk [vmem:[#allocation2 + $0x38] sm:$0xff] %vm3032, %v3011
  %3041 = vst.msk [vmem:[#allocation2 + $0x40] sm:$0xff] %vm3032, %v3012
  %3042 = vst.msk [vmem:[#allocation2 + $0x48] sm:$0xff] %vm3032, %v3013
  %3043 = vst.msk [vmem:[#allocation2 + $0x50] sm:$0xff] %vm3032, %v3014
  %3044 = vst.msk [vmem:[#allocation2 + $0x58] sm:$0xff] %vm3032, %v3015
  %3045 = vst.msk [vmem:[#allocation2 + $0x60] sm:$0xff] %vm3032, %v3016
  %3046 = vst.msk [vmem:[#allocation2 + $0x68] sm:$0xff] %vm3032, %v3017
  %3047 = vst.msk [vmem:[#allocation2 + $0x70] sm:$0xff] %vm3032, %v3018
  %3048 = vst.msk [vmem:[#allocation2 + $0x78] sm:$0xff] %vm3032, %v3019
  %3049 = vst.msk [vmem:[#allocation2 + $0x80] sm:$0xff] %vm3032, %v3020
  %3050 = vst.msk [vmem:[#allocation2 + $0x88] sm:$0xff] %vm3032, %v3021
  %3051 = vst.msk [vmem:[#allocation2 + $0x90] sm:$0xff] %vm3032, %v3022
  %3052 = vst.msk [vmem:[#allocation2 + $0x98] sm:$0xff] %vm3032, %v3023
  %3053 = vst.msk [vmem:[#allocation2 + $0xa0] sm:$0xff] %vm3032, %v3024
  %3054 = vst.msk [vmem:[#allocation2 + $0xa8] sm:$0xff] %vm3032, %v3025
  %3055 = vst.msk [vmem:[#allocation2 + $0xb0] sm:$0xff] %vm3032, %v3026
  %3056 = vst.msk [vmem:[#allocation2 + $0xb8] sm:$0xff] %vm3032, %v3027
  %3057 = vst.msk [vmem:[#allocation2 + $0xc0] sm:$0xff] %vm3032, %v3028
  %3058 = vst.msk [vmem:[#allocation2 + $0xc8] sm:$0xff] %vm3032, %v3029
  %3059 = vst.msk [vmem:[#allocation2 + $0xd0] sm:$0xff] %vm3032, %v3030
  %3060 = vst.msk [vmem:[#allocation2 + $0xd8] sm:$0xff] %vm3032, %v3031
  %v3061 = vld [vmem:[#allocation2] ss:$28 sm:$0xff]
  %s3062 = scalar_lea.vmem [#allocation2], 4
  %v3063 = vld [vmem:[%s3062] ss:$28 sm:$0xff]
  %s3064 = scalar_lea.vmem [#allocation2], 8
  %v3065 = vld [vmem:[%s3064] ss:$28 sm:$0xff]
  %s3066 = scalar_lea.vmem [#allocation2], 12
  %v3067 = vld [vmem:[%s3066] ss:$28 sm:$0xff]
  %3069 = vrot.lane.b32.xlu0 %v3063, 48
  %v3070 = vpop.permute.xlu0 %3069
  %3073 = vrot.lane.b32.xlu0 %v3065, 96
  %v3074 = vpop.permute.xlu0 %3073
  %3077 = vrot.lane.b32.xlu0 %v3067, 16
  %v3078 = vpop.permute.xlu0 %3077
  %v3080 = vsel %vm3032, %v3061, %v3070
  %vm3081 = vcmask 785408
  %v3082 = vsel %vm3081, %v3080, %v3074
  %vm3083 = vcmask 130048
  %v3084 = vsel %vm3083, %v3074, %v3078
  %v3085 = vpack.c.bf16 %v3082, %v3082
  %v3086 = vpack.c.bf16 %v3084, %v3084
  %v3087 = vld [vmem:[%s5] sm:$0xf]
  %v3088 = vld [vmem:[%s5 + $0x4] sm:$0xf]
  %v3089 = vld [vmem:[%s5 + $0x8] sm:$0xf]
  %v3090 = vld [vmem:[%s5 + $0xc] sm:$0xf]
  %v3091 = vld [vmem:[%s5 + $0x10] sm:$0xf]
  %v3092 = vld [vmem:[%s5 + $0x14] sm:$0xf]
  %v3093 = vld [vmem:[%s5 + $0x18] sm:$0xf]
  %v3094 = vld [vmem:[%s5 + $0x1c] sm:$0xf]
  %v3095 = vld [vmem:[%s5 + $0x20] sm:$0xf]
  %v3096 = vld [vmem:[%s5 + $0x24] sm:$0xf]
  %v3097 = vld [vmem:[%s5 + $0x28] sm:$0xf]
  %v3098 = vld [vmem:[%s5 + $0x2c] sm:$0xf]
  %v3099 = vld [vmem:[%s5 + $0x30] sm:$0xf]
  %v3100 = vld [vmem:[%s5 + $0x34] sm:$0xf]
  %v3101 = vld [vmem:[%s5 + $0x38] sm:$0xf]
  %v3102 = vld [vmem:[%s5 + $0x3c] sm:$0xf]
  %v3103 = vld [vmem:[%s5 + $0x40] sm:$0xf]
  %v3104 = vld [vmem:[%s5 + $0x44] sm:$0xf]
  %v3105 = vld [vmem:[%s5 + $0x48] sm:$0xf]
  %v3106 = vld [vmem:[%s5 + $0x4c] sm:$0xf]
  %v3107 = vld [vmem:[%s5 + $0x50] sm:$0xf]
  %v3108 = vld [vmem:[%s5 + $0x54] sm:$0xf]
  %v3109 = vld [vmem:[%s5 + $0x58] sm:$0xf]
  %v3110 = vld [vmem:[%s5 + $0x5c] sm:$0xf]
  %v3111 = vld [vmem:[%s6] sm:$0x1]
  %v3113 = vperm.slane %v3111, 0
  %v3139 = vunpack.c.l.b16 %v3087
  %v3140 = vunpack.c.l.b16 %v3088
  %v3141 = vunpack.c.l.b16 %v3089
  %v3142 = vunpack.c.l.b16 %v3090
  %v3143 = vunpack.c.l.b16 %v3091
  %v3144 = vunpack.c.l.b16 %v3092
  %v3145 = vunpack.c.l.b16 %v3093
  %v3146 = vunpack.c.l.b16 %v3094
  %v3147 = vunpack.c.l.b16 %v3095
  %v3148 = vunpack.c.l.b16 %v3096
  %v3149 = vunpack.c.l.b16 %v3097
  %v3150 = vunpack.c.l.b16 %v3098
  %v3151 = vunpack.c.l.b16 %v3099
  %v3152 = vunpack.c.l.b16 %v3100
  %v3153 = vunpack.c.l.b16 %v3101
  %v3154 = vunpack.c.l.b16 %v3102
  %v3155 = vunpack.c.l.b16 %v3103
  %v3156 = vunpack.c.l.b16 %v3104
  %v3157 = vunpack.c.l.b16 %v3105
  %v3158 = vunpack.c.l.b16 %v3106
  %v3159 = vunpack.c.l.b16 %v3107
  %v3160 = vunpack.c.l.b16 %v3108
  %v3161 = vunpack.c.l.b16 %v3109
  %v3162 = vunpack.c.l.b16 %v3110
  %v3163 = vpack.c.b16 %v3140, %v3139
  %v3164 = vpack.c.b16 %v3142, %v3141
  %v3165 = vpack.c.b16 %v3144, %v3143
  %v3166 = vpack.c.b16 %v3146, %v3145
  %v3167 = vpack.c.b16 %v3148, %v3147
  %v3168 = vpack.c.b16 %v3150, %v3149
  %v3169 = vpack.c.b16 %v3152, %v3151
  %v3170 = vpack.c.b16 %v3154, %v3153
  %v3171 = vpack.c.b16 %v3156, %v3155
  %v3172 = vpack.c.b16 %v3158, %v3157
  %v3173 = vpack.c.b16 %v3160, %v3159
  %v3174 = vpack.c.b16 %v3162, %v3161
  %vm3187 = vcmask 523264
  %v3189 = vsel %vm3187, %v3086, 0
  %3191 = vmatpush.bf16.msra.mxu0 %v3170
  %3192 = vmatpush.bf16.msra.mxu0 %v3169
  %3193 = vmatpush.bf16.msra.mxu0 %v3168
  %3194 = vmatpush.bf16.msra.mxu0 %v3167
  %3195 = vmatpush.bf16.msra.mxu0 %v3166
  %3196 = vmatpush.bf16.msra.mxu0 %v3165
  %3197 = vmatpush.bf16.msra.mxu0 %v3164
  %3198 = vmatpush.bf16.msra.mxu0 %v3163
  %3199 = vmatmul.bf16.gmra.mxu0 %v3085
  %v3200 = vpop.f32.mrf.mxu0
  %v3201 = vadd.f32 %v3113, %v3200
  %v3202 = vpop.f32.mrf.mxu0
  %3203 = vdwg.mxu0
  %3204 = vmatpush.bf16.msra.mxu0 0
  %3205 = vmatpush.bf16.msra.mxu0 0
  %3206 = vmatpush.bf16.msra.mxu0 0
  %3207 = vmatpush.bf16.msra.mxu0 0
  %3208 = vmatpush.bf16.msra.mxu0 %v3174
  %3209 = vmatpush.bf16.msra.mxu0 %v3173
  %3210 = vmatpush.bf16.msra.mxu0 %v3172
  %3211 = vmatpush.bf16.msra.mxu0 %v3171
  %3212 = vmatmul.bf16.gmra.mxu0 %v3189
  %v3213 = vpop.f32.mrf.mxu0
  %v3214 = vadd.f32 %v3201, %v3213
  %v3215 = vpop.f32.mrf.mxu0
  %3216 = vdwg.mxu0
  %v3217 = vmax.f32 %v3214, 0.0
  %v3218 = vpack.c.bf16 %v3217, %v3217
  %v3219 = vld [vmem:[%s7] sm:$0xf]
  %v3220 = vld [vmem:[%s7 + $0x4] sm:$0xf]
  %v3221 = vld [vmem:[%s7 + $0x8] sm:$0xf]
  %v3222 = vld [vmem:[%s7 + $0xc] sm:$0xf]
  %v3223 = vld [vmem:[%s7 + $0x10] sm:$0xf]
  %v3224 = vld [vmem:[%s7 + $0x14] sm:$0xf]
  %v3225 = vld [vmem:[%s7 + $0x18] sm:$0xf]
  %v3226 = vld [vmem:[%s7 + $0x1c] sm:$0xf]
  %v3227 = vld [vmem:[%s7 + $0x20] sm:$0xf]
  %v3228 = vld [vmem:[%s7 + $0x24] sm:$0xf]
  %v3229 = vld [vmem:[%s7 + $0x28] sm:$0xf]
  %v3230 = vld [vmem:[%s7 + $0x2c] sm:$0xf]
  %v3231 = vld [vmem:[%s7 + $0x30] sm:$0xf]
  %v3232 = vld [vmem:[%s7 + $0x34] sm:$0xf]
  %v3233 = vld [vmem:[%s7 + $0x38] sm:$0xf]
  %v3234 = vld [vmem:[%s8] sm:$0x1]
  %v3236 = vperm.slane %v3234, 0
  %v3253 = vunpack.c.l.b16 %v3219
  %v3254 = vunpack.c.l.b16 %v3220
  %v3255 = vunpack.c.l.b16 %v3221
  %v3256 = vunpack.c.l.b16 %v3222
  %v3257 = vunpack.c.l.b16 %v3223
  %v3258 = vunpack.c.l.b16 %v3224
  %v3259 = vunpack.c.l.b16 %v3225
  %v3260 = vunpack.c.l.b16 %v3226
  %v3261 = vunpack.c.l.b16 %v3227
  %v3262 = vunpack.c.l.b16 %v3228
  %v3263 = vunpack.c.l.b16 %v3229
  %v3264 = vunpack.c.l.b16 %v3230
  %v3265 = vunpack.c.l.b16 %v3231
  %v3266 = vunpack.c.l.b16 %v3232
  %v3267 = vunpack.c.l.b16 %v3233
  %v3268 = vpack.c.b16 %v3254, %v3253
  %v3269 = vpack.c.b16 %v3256, %v3255
  %v3270 = vpack.c.b16 %v3258, %v3257
  %v3271 = vpack.c.b16 %v3260, %v3259
  %v3272 = vpack.c.b16 %v3262, %v3261
  %v3273 = vpack.c.b16 %v3264, %v3263
  %v3274 = vpack.c.b16 %v3266, %v3265
  %v3275 = vpack.c.b16 %v3267, %v3267
  %vm3283 = vcmask 982016
  %v3285 = vsel %vm3283, %v3218, 0
  %v3288 = vsel %vm1946, %v3275, 0
  %3290 = vmatpush.bf16.msra.mxu0 %v3288
  %3291 = vmatpush.bf16.msra.mxu0 %v3274
  %3292 = vmatpush.bf16.msra.mxu0 %v3273
  %3293 = vmatpush.bf16.msra.mxu0 %v3272
  %3294 = vmatpush.bf16.msra.mxu0 %v3271
  %3295 = vmatpush.bf16.msra.mxu0 %v3270
  %3296 = vmatpush.bf16.msra.mxu0 %v3269
  %3297 = vmatpush.bf16.msra.mxu0 %v3268
  %3298 = vmatmul.bf16.gmra.mxu0 %v3285
  %v3299 = vpop.f32.mrf.mxu0
  %v3300 = vadd.f32 %v3236, %v3299
  %v3301 = vpop.f32.mrf.mxu0
  %3302 = vdwg.mxu0
  %v3303 = vmax.f32 %v3300, 0.0
  %v3304 = vpack.c.bf16 %v3303, %v3303
  %v3305 = vld [vmem:[%s9] sm:$0xf]
  %v3306 = vld [vmem:[%s9 + $0x4] sm:$0xf]
  %v3307 = vld [vmem:[%s9 + $0x8] sm:$0xf]
  %v3308 = vld [vmem:[%s9 + $0xc] sm:$0xf]
  %v3309 = vld [vmem:[%s9 + $0x10] sm:$0xf]
  %v3310 = vld [vmem:[%s9 + $0x14] sm:$0xf]
  %v3311 = vld [vmem:[%s9 + $0x18] sm:$0xf]
  %v3312 = vld [vmem:[%s9 + $0x1c] sm:$0x3]
  %v3313 = vld [vmem:[%s10] sm:$0x1]
  %v3315 = vperm.slane %v3313, 0
  %v3325 = vunpack.c.l.b16 %v3305
  %v3326 = vunpack.c.l.b16 %v3306
  %v3327 = vunpack.c.l.b16 %v3307
  %v3328 = vunpack.c.l.b16 %v3308
  %v3329 = vunpack.c.l.b16 %v3309
  %v3330 = vunpack.c.l.b16 %v3310
  %v3331 = vunpack.c.l.b16 %v3311
  %v3332 = vunpack.c.l.b16 %v3312
  %v3333 = vpack.c.b16 %v3326, %v3325
  %v3334 = vpack.c.b16 %v3328, %v3327
  %v3335 = vpack.c.b16 %v3330, %v3329
  %v3336 = vpack.c.b16 %v3332, %v3331
  %vm3340 = vcmask 490496
  %v3342 = vsel %vm3340, %v3304, 0
  %v3345 = vsel %vm1044, %v3336, 0
  %3347 = vmatpush.bf16.msra.mxu0 0
  %3348 = vmatpush.bf16.msra.mxu0 0
  %3349 = vmatpush.bf16.msra.mxu0 0
  %3350 = vmatpush.bf16.msra.mxu0 0
  %3351 = vmatpush.bf16.msra.mxu0 %v3345
  %3352 = vmatpush.bf16.msra.mxu0 %v3335
  %3353 = vmatpush.bf16.msra.mxu0 %v3334
  %3354 = vmatpush.bf16.msra.mxu0 %v3333
  %3355 = vmatmul.bf16.gmra.mxu0 %v3342
  %v3356 = vpop.f32.mrf.mxu0
  %v3357 = vadd.f32 %v3315, %v3356
  %v3358 = vpop.f32.mrf.mxu0
  %3359 = vdwg.mxu0
  %3360 = vst [vmem:[%s11] sm:$0xff] %v3357
  // Predicated region
  $region46: #{network_forward.1} parent=0 // pred_check
    _
  $region47: #{network_forward.1} parent=0 // pred_check_branch
    %3362 = sbr.rel (0) target = $region49
  $region48: #{network_forward.1} parent=0 // pred_region
    _
  $region49: #{network_forward.1} parent=0 // pred_fallthru
    _
  // Predicated region
  $region50: #{network_forward.1} parent=0 // pred_check
    _
  $region51: #{network_forward.1} parent=0 // pred_check_branch
    %3364 = sbr.rel (0) target = $region53
  $region52: #{network_forward.1} parent=0 // pred_region
    _
  $region53: #{network_forward.1} parent=0 // pred_fallthru
    _

</llo_original>
